<compile_context>
chip_gen: v7x
topology: tpu7x:2x2x1
jax: 0.10.0
libtpu: 0.0.40
codegen_flags: <defaults>
</compile_context>

<pallas_src>
import functools
import math

import jax
import jax.numpy as jnp
import numpy as np
from jax.experimental import pallas as pl
from jax.experimental.pallas import tpu as pltpu

NEG_INF = -1e18


# ----------------------------- in-kernel helpers -----------------------------

def _layer_norm(x, gb, eps=1e-6):
    # gb: (2, D) stacked [gamma, beta]; matches nn.LayerNorm(d, eps=1e-6)
    g = gb[0]
    b = gb[1]
    mu = jnp.mean(x, axis=-1, keepdims=True)
    var = jnp.mean((x - mu) ** 2, axis=-1, keepdims=True)
    return (x - mu) * jax.lax.rsqrt(var + eps) * g + b


def _gelu(x):
    # PreSumm gelu (tanh approximation)
    return 0.5 * x * (1.0 + jnp.tanh(
        math.sqrt(2.0 / math.pi) * (x + 0.044715 * x ** 3)))


def _mha(q, k, v, add_mask, heads):
    """Multi-head scaled-dot attention, batched over the Bb batch block.

    q: (Bb, T, D) f32 (1/sqrt(dh) already folded into Wq), k/v: (Bb, S, D) f32,
    add_mask: (Bb, T, S) or (Bb, 1, S) additive mask (0 or -1e18).
    Returns concatenated heads flattened to (Bb*T, D) f32.
    """
    Bb, T, D = q.shape
    S = k.shape[1]
    dh = D // heads
    ctx_parts = []
    for h in range(heads):                       # static unroll over heads
        sl = slice(h * dh, (h + 1) * dh)
        qh = q[:, :, sl].astype(jnp.bfloat16)
        kh = k[:, :, sl].astype(jnp.bfloat16)
        vh = v[:, :, sl].astype(jnp.bfloat16)
        # scores (Bb, T, S) == einsum('btd,bsd->bts')
        s = jax.lax.dot_general(qh, kh, (((2,), (2,)), ((0,), (0,))),
                                preferred_element_type=jnp.float32)
        s = s + add_mask
        s = s - jnp.max(s, axis=-1, keepdims=True)
        p = jnp.exp(s)
        p = p * pl.reciprocal(jnp.sum(p, axis=-1, keepdims=True), approx=True)
        # context (Bb, T, dh) == einsum('bts,bsd->btd')
        c = jax.lax.dot_general(p.astype(jnp.bfloat16), vh,
                                (((2,), (1,)), ((0,), (0,))),
                                preferred_element_type=jnp.float32)
        ctx_parts.append(c.reshape(Bb * T, dh))  # leading-dim merge only
    return jnp.concatenate(ctx_parts, axis=-1)   # (Bb*T, D)


# ------------------------------- Pallas kernel --------------------------------

def decoder_stack_kernel(
        x_ref, mem_ref, tpad_ref, spad_ref,
        ln1, sa_wqkv, sa_bqkv, sa_wo, sa_bo,
        ln2, ca_wq, ca_bq, ca_wkv, ca_bkv, ca_wo, ca_bo,
        ffln, w1, b1, w2, b2, fln,
        out_ref, h_ref, dec_add_ref, src_add_ref, *, heads):
    layer = pl.program_id(1)
    n_layers = pl.num_programs(1)
    Bb, T, D = h_ref.shape
    S = mem_ref.shape[1]
    N = Bb * T

    # First layer for this batch block: load activations and build the additive
    # masks ONCE (they are reused by every subsequent layer iteration).
    @pl.when(layer == 0)
    def _():
        h_ref[...] = x_ref[...]
        rows = jax.lax.broadcasted_iota(jnp.int32, (T, T), 0)
        cols = jax.lax.broadcasted_iota(jnp.int32, (T, T), 1)
        dec_masked = jnp.logical_or((cols > rows)[None], tpad_ref[...] > 0.5)
        dec_add_ref[...] = jnp.where(dec_masked,
                                     jnp.float32(NEG_INF), jnp.float32(0.0))
        src_add_ref[...] = jnp.where(spad_ref[...] > 0.5,
                                     jnp.float32(NEG_INF), jnp.float32(0.0))

    x2 = h_ref[...].reshape(N, D)                 # (Bb*T, D) f32 running act.
    mem2 = mem_ref[...].reshape(Bb * S, D)        # (Bb*S, D) bf16

    # --- masked multi-head self attention (pre-LN) ---
    xn = _layer_norm(x2, ln1[0])
    qkv = jnp.dot(xn.astype(jnp.bfloat16), sa_wqkv[0],
                  preferred_element_type=jnp.float32) + sa_bqkv[0]    # (N, 3D)
    qkv = qkv.reshape(Bb, T, 3 * D)
    sa_ctx = _mha(qkv[:, :, :D], qkv[:, :, D:2 * D], qkv[:, :, 2 * D:],
                  dec_add_ref[...], heads)                            # (N, D)
    self_out = jnp.dot(sa_ctx.astype(jnp.bfloat16), sa_wo[0],
                       preferred_element_type=jnp.float32) + sa_bo[0]
    query = self_out + x2

    # --- context (encoder-decoder) attention ---
    qn = _layer_norm(query, ln2[0])
    cq = jnp.dot(qn.astype(jnp.bfloat16), ca_wq[0],
                 preferred_element_type=jnp.float32) + ca_bq[0]       # (N, D)
    ckv = jnp.dot(mem2, ca_wkv[0],
                  preferred_element_type=jnp.float32) + ca_bkv[0]     # (Bb*S, 2D)
    ckv = ckv.reshape(Bb, S, 2 * D)
    ca_ctx = _mha(cq.reshape(Bb, T, D), ckv[:, :, :D], ckv[:, :, D:],
                  src_add_ref[...], heads)                            # (N, D)
    ctx_out = jnp.dot(ca_ctx.astype(jnp.bfloat16), ca_wo[0],
                      preferred_element_type=jnp.float32) + ca_bo[0]
    ff_in = ctx_out + query

    # --- position-wise feed forward (pre-LN, gelu, residual) ---
    fn = _layer_norm(ff_in, ffln[0])
    inter = _gelu(jnp.dot(fn.astype(jnp.bfloat16), w1[0],
                          preferred_element_type=jnp.float32) + b1[0])
    out = jnp.dot(inter.astype(jnp.bfloat16), w2[0],
                  preferred_element_type=jnp.float32) + b2[0] + ff_in  # (N, D)

    h_ref[...] = out.reshape(Bb, T, D)

    # final LayerNorm folded into the last layer iteration; bf16 writeback
    @pl.when(layer == n_layers - 1)
    def _():
        out_ref[...] = _layer_norm(out, fln[...]).reshape(
            Bb, T, D).astype(out_ref.dtype)


# --------------------------------- wrapper ------------------------------------

_STACK_ORDER = ("ln1", "sa_wqkv", "sa_bqkv", "sa_wo", "sa_bo",
                "ln2", "ca_wq", "ca_bq", "ca_wkv", "ca_bkv", "ca_wo", "ca_bo",
                "ffln", "ff_w1", "ff_b1", "ff_w2", "ff_b2")
_BF16_KEYS = ("sa_wqkv", "sa_wo", "ca_wq", "ca_wkv", "ca_wo", "ff_w1", "ff_w2")


def _query_vmem_capacity():
    try:
        cap = int(getattr(pltpu.get_tpu_info(), "vmem_capacity_bytes", 0))
        return cap if cap > 0 else None
    except Exception:
        return None


def _activation_block_bytes(bb, T, S, D):
    return bb * (2 * T * D * 4          # x block (f32, double-buffered)
                 + 2 * S * D * 2        # memory_bank block (bf16, double-buffered)
                 + 2 * (T + S) * 4      # pad rows (double-buffered)
                 + 2 * T * D * 2        # bf16 output block (double-buffered)
                 + T * D * 4            # activation carry scratch
                 + T * T * 4 + S * 4)   # additive mask scratch


def _choose_batch_block(B, T, S, D, vmem_cap):
    """Largest divisor of B whose per-block batch buffers fit a VMEM budget."""
    budget = max(8 << 20, vmem_cap // 4)
    bb = 1
    for cand in range(1, B + 1):
        if B % cand == 0 and _activation_block_bytes(cand, T, S, D) <= budget:
            bb = cand
    # v7x has 2 TensorCores and only 64 MiB VMEM per core: keep >= 2 blocks on
    # the "parallel" batch axis so the second core is not idle.  v5e/v6e are
    # single-TC, so the full fold (weights streamed exactly once) is preferred.
    if vmem_cap <= (64 << 20) and bb == B and B > 1:
        for cand in range(B // 2, 0, -1):
            if B % cand == 0:
                bb = cand
                break
    return bb


def run_decoder_stack(x, mem, tgt_pad, src_pad, stacked, final_ln, heads,
                      batch_block=None):
    B, T, D = x.shape
    S = mem.shape[1]
    L = stacked["ln1"].shape[0]
    ordered = [stacked[n] for n in _STACK_ORDER]

    vmem_cap = _query_vmem_capacity() or (64 << 20)
    Bb = batch_block or _choose_batch_block(B, T, S, D, vmem_cap)
    assert B % Bb == 0
    num_blocks = B // Bb

    def batch_spec(arr):
        shp = arr.shape
        return pl.BlockSpec((Bb,) + tuple(shp[1:]),
                            lambda b, l: (b,) + (0,) * (len(shp) - 1))

    def layer_spec(arr):
        shp = arr.shape
        return pl.BlockSpec((1,) + tuple(shp[1:]),
                            lambda b, l: (l,) + (0,) * (len(shp) - 1))

    in_specs = [batch_spec(x), batch_spec(mem),
                batch_spec(tgt_pad), batch_spec(src_pad)]
    in_specs += [layer_spec(w) for w in ordered]
    in_specs += [pl.BlockSpec(tuple(final_ln.shape), lambda b, l: (0, 0))]
    out_spec = pl.BlockSpec((Bb, T, D), lambda b, l: (b, 0, 0))

    # VMEM budget: double-buffered streamed blocks + single-buffered scratch,
    # plus headroom for Mosaic internal scratch, clamped to the actual per-core
    # capacity (never request the whole chip on v7x).
    weight_bytes = sum(2 * int(np.prod(a.shape[1:])) * a.dtype.itemsize
                       for a in ordered)
    weight_bytes += 2 * int(final_ln.size) * final_ln.dtype.itemsize
    block_bytes = weight_bytes + _activation_block_bytes(Bb, T, S, D)
    vmem_limit = max(block_bytes + (8 << 20), 32 << 20)
    vmem_limit = min(vmem_limit, (vmem_cap * 7) // 8)

    kernel = functools.partial(decoder_stack_kernel, heads=heads)
    return pl.pallas_call(
        kernel,
        out_shape=jax.ShapeDtypeStruct((B, T, D), jnp.bfloat16),
        grid_spec=pltpu.PrefetchScalarGridSpec(
            num_scalar_prefetch=0,
            grid=(num_blocks, L),
            in_specs=in_specs,
            out_specs=out_spec,
            scratch_shapes=[
                pltpu.VMEM((Bb, T, D), jnp.float32),   # activation carry
                pltpu.VMEM((Bb, T, T), jnp.float32),   # additive decoder mask
                pltpu.VMEM((Bb, 1, S), jnp.float32),   # additive source mask
            ]),
        compiler_params=pltpu.CompilerParams(
            dimension_semantics=("parallel", "arbitrary"),
            vmem_limit_bytes=int(vmem_limit)),
    )(x, mem, tgt_pad, src_pad, *ordered, final_ln)


# ------------------------------ params & glue ---------------------------------

def positional_encoding(seq_len, dim):
    position = jnp.arange(seq_len, dtype=jnp.float32)[:, None]
    div_term = jnp.exp(jnp.arange(0, dim, 2, dtype=jnp.float32)
                       * -(math.log(10000.0) / dim))
    pe = jnp.zeros((seq_len, dim), jnp.float32)
    pe = pe.at[:, 0::2].set(jnp.sin(position * div_term))
    pe = pe.at[:, 1::2].set(jnp.cos(position * div_term))
    return pe


def init_params(key, num_layers, d_model, heads, d_ff, vocab, padding_idx=0):
    dh = d_model // heads
    q_scale = 1.0 / math.sqrt(dh)     # folded into Wq / bq (zero runtime cost)

    def dense(k, shape, scale=0.02):
        return scale * jax.random.normal(k, shape, dtype=jnp.float32)

    ln_init = jnp.stack([jnp.ones((d_model,), jnp.float32),
                         jnp.zeros((d_model,), jnp.float32)])

    layers = []
    for l in range(num_layers):
        ks = jax.random.split(jax.random.fold_in(key, l + 1), 20)
        sa_wq = dense(ks[0], (d_model, d_model)) * q_scale
        sa_bq = dense(ks[1], (d_model,)) * q_scale
        sa_wk = dense(ks[2], (d_model, d_model))
        sa_bk = dense(ks[3], (d_model,))
        sa_wv = dense(ks[4], (d_model, d_model))
        sa_bv = dense(ks[5], (d_model,))
        ca_wq = dense(ks[8], (d_model, d_model)) * q_scale
        ca_bq = dense(ks[9], (d_model,)) * q_scale
        ca_wk = dense(ks[10], (d_model, d_model))
        ca_bk = dense(ks[11], (d_model,))
        ca_wv = dense(ks[12], (d_model, d_model))
        ca_bv = dense(ks[13], (d_model,))
        layers.append({
            "ln1": ln_init,
            "sa_wqkv": jnp.concatenate([sa_wq, sa_wk, sa_wv], axis=1),
            "sa_bqkv": jnp.concatenate([sa_bq, sa_bk, sa_bv]).reshape(1, 3 * d_model),
            "sa_wo": dense(ks[6], (d_model, d_model)),
            "sa_bo": dense(ks[7], (d_model,)).reshape(1, d_model),
            "ln2": ln_init,
            "ca_wq": ca_wq,
            "ca_bq": ca_bq.reshape(1, d_model),
            "ca_wkv": jnp.concatenate([ca_wk, ca_wv], axis=1),
            "ca_bkv": jnp.concatenate([ca_bk, ca_bv]).reshape(1, 2 * d_model),
            "ca_wo": dense(ks[14], (d_model, d_model)),
            "ca_bo": dense(ks[15], (d_model,)).reshape(1, d_model),
            "ffln": ln_init,
            "ff_w1": dense(ks[16], (d_model, d_ff)),
            "ff_b1": dense(ks[17], (d_ff,)).reshape(1, d_ff),
            "ff_w2": dense(ks[18], (d_ff, d_model)),
            "ff_b2": dense(ks[19], (d_model,)).reshape(1, d_model),
        })

    emb = 0.02 * jax.random.normal(jax.random.fold_in(key, 9999),
                                   (vocab, d_model), dtype=jnp.float32)
    emb = emb.at[padding_idx].set(0.0)   # nn.Embedding(padding_idx=...) zero row

    return {"embedding": emb, "layers": layers, "final_ln": ln_init,
            "heads": heads}


def stack_layer_params(layers):
    """Stack per-layer params along a leading layer axis; bf16 matmul weights."""
    stacked = {}
    for name in layers[0]:
        arr = jnp.stack([lp[name] for lp in layers], axis=0)
        if name in _BF16_KEYS:
            arr = arr.astype(jnp.bfloat16)
        stacked[name] = arr
    return stacked


def transformer_decoder_forward(tgt, src, memory_bank, params, padding_idx=0):
    """Equivalent of TransformerDecoder.forward with state.cache=None, step=None."""
    B, T = tgt.shape
    D = params["embedding"].shape[1]

    # embeddings + PositionalEncoding (dropout == identity in eval)
    emb = params["embedding"][tgt]                                  # [B, T, D]
    output = emb * math.sqrt(D) + positional_encoding(T, D)[None]

    # tiny pad-row masks; causal + broadcast happen in-kernel (once per block)
    tgt_pad = (tgt == padding_idx).astype(jnp.float32)[:, None, :]  # [B, 1, T]
    src_pad = (src == padding_idx).astype(jnp.float32)[:, None, :]  # [B, 1, S]

    stacked = stack_layer_params(params["layers"])
    return run_decoder_stack(output.astype(jnp.float32),
                             memory_bank.astype(jnp.bfloat16),
                             tgt_pad, src_pad,
                             stacked, params["final_ln"], params["heads"])


# ----------------------------------- main --------------------------------------

if __name__ == "__main__":
    num_layers, d_model, heads, d_ff = 2, 32, 4, 64
    vocab, padding_idx = 20, 0
    B, T, S = 2, 8, 16

    key = jax.random.PRNGKey(0)
    pkey, dkey = jax.random.split(key)
    params = init_params(pkey, num_layers, d_model, heads, d_ff, vocab,
                         padding_idx)

    k1, k2, k3 = jax.random.split(dkey, 3)
    tgt = jax.random.randint(k1, (B, T), 1, vocab)
    tgt = tgt.at[:, -2:].set(padding_idx)            # some target padding
    src = jax.random.randint(k2, (B, S), 1, vocab)
    src = src.at[1, -3:].set(padding_idx)            # some source padding
    memory_bank = jax.random.normal(k3, (B, S, d_model), dtype=jnp.float32)

    out = transformer_decoder_forward(tgt, src, memory_bank, params,
                                      padding_idx=padding_idx)
    out = jax.block_until_ready(out)
    assert out.shape == (B, T, d_model)
    assert bool(jnp.all(jnp.isfinite(out.astype(jnp.float32))))
    print("KERNEL_OK")
</pallas_src>

<mosaic_0001>
module attributes {stable_mosaic.version = 11 : i64} {
  func.func @decoder_stack_kernel(%arg0: i32, %arg1: i32, %arg2: memref<1x8x32xf32, #tpu.memory_space<vmem>>, %arg3: memref<1x16x32xbf16, #tpu.memory_space<vmem>>, %arg4: memref<1x1x8xf32, #tpu.memory_space<vmem>>, %arg5: memref<1x1x16xf32, #tpu.memory_space<vmem>>, %arg6: memref<1x2x32xf32, #tpu.memory_space<vmem>>, %arg7: memref<1x32x96xbf16, #tpu.memory_space<vmem>>, %arg8: memref<1x1x96xf32, #tpu.memory_space<vmem>>, %arg9: memref<1x32x32xbf16, #tpu.memory_space<vmem>>, %arg10: memref<1x1x32xf32, #tpu.memory_space<vmem>>, %arg11: memref<1x2x32xf32, #tpu.memory_space<vmem>>, %arg12: memref<1x32x32xbf16, #tpu.memory_space<vmem>>, %arg13: memref<1x1x32xf32, #tpu.memory_space<vmem>>, %arg14: memref<1x32x64xbf16, #tpu.memory_space<vmem>>, %arg15: memref<1x1x64xf32, #tpu.memory_space<vmem>>, %arg16: memref<1x32x32xbf16, #tpu.memory_space<vmem>>, %arg17: memref<1x1x32xf32, #tpu.memory_space<vmem>>, %arg18: memref<1x2x32xf32, #tpu.memory_space<vmem>>, %arg19: memref<1x32x64xbf16, #tpu.memory_space<vmem>>, %arg20: memref<1x1x64xf32, #tpu.memory_space<vmem>>, %arg21: memref<1x64x32xbf16, #tpu.memory_space<vmem>>, %arg22: memref<1x1x32xf32, #tpu.memory_space<vmem>>, %arg23: memref<2x32xf32, #tpu.memory_space<vmem>>, %arg24: memref<1x8x32xbf16, #tpu.memory_space<vmem>>, %arg25: memref<1x8x32xf32, #tpu.memory_space<vmem>>, %arg26: memref<1x8x8xf32, #tpu.memory_space<vmem>>, %arg27: memref<1x1x16xf32, #tpu.memory_space<vmem>>) attributes {dimension_semantics = [#tpu.dimension_semantics<parallel>, #tpu.dimension_semantics<arbitrary>], iteration_bounds = array<i64: 2, 2>, scalar_prefetch = 0 : i64, scratch_operands = 3 : i64, tpu.core_type = #tpu.core_type<tc>, window_params = [{transform_indices = @transform_0, window_bounds = array<i64: 1, 8, 32>}, {transform_indices = @transform_1, window_bounds = array<i64: 1, 16, 32>}, {transform_indices = @transform_2, window_bounds = array<i64: 1, 1, 8>}, {transform_indices = @transform_3, window_bounds = array<i64: 1, 1, 16>}, {transform_indices = @transform_4, window_bounds = array<i64: 1, 2, 32>}, {transform_indices = @transform_5, window_bounds = array<i64: 1, 32, 96>}, {transform_indices = @transform_6, window_bounds = array<i64: 1, 1, 96>}, {transform_indices = @transform_7, window_bounds = array<i64: 1, 32, 32>}, {transform_indices = @transform_8, window_bounds = array<i64: 1, 1, 32>}, {transform_indices = @transform_9, window_bounds = array<i64: 1, 2, 32>}, {transform_indices = @transform_10, window_bounds = array<i64: 1, 32, 32>}, {transform_indices = @transform_11, window_bounds = array<i64: 1, 1, 32>}, {transform_indices = @transform_12, window_bounds = array<i64: 1, 32, 64>}, {transform_indices = @transform_13, window_bounds = array<i64: 1, 1, 64>}, {transform_indices = @transform_14, window_bounds = array<i64: 1, 32, 32>}, {transform_indices = @transform_15, window_bounds = array<i64: 1, 1, 32>}, {transform_indices = @transform_16, window_bounds = array<i64: 1, 2, 32>}, {transform_indices = @transform_17, window_bounds = array<i64: 1, 32, 64>}, {transform_indices = @transform_18, window_bounds = array<i64: 1, 1, 64>}, {transform_indices = @transform_19, window_bounds = array<i64: 1, 64, 32>}, {transform_indices = @transform_20, window_bounds = array<i64: 1, 1, 32>}, {pipeline_mode = #tpu.pipeline_mode<synchronous>, transform_indices = @transform_21, window_bounds = array<i64: 2, 32>}, {transform_indices = @transform_22, window_bounds = array<i64: 1, 8, 32>}]} {
    %c0_i32 = arith.constant 0 : i32
    %0 = arith.cmpi eq, %arg1, %c0_i32 : i32
    %1 = arith.extui %0 : i1 to i32
    %c0_i32_0 = arith.constant 0 : i32
    %2 = arith.cmpi ne, %1, %c0_i32_0 : i32
    scf.if %2 {
      %c0_124 = arith.constant 0 : index
      %c0_125 = arith.constant 0 : index
      %c0_126 = arith.constant 0 : index
      %357 = vector.load %arg2[%c0_124, %c0_125, %c0_126] : memref<1x8x32xf32, #tpu.memory_space<vmem>>, vector<1x8x32xf32>
      %c0_127 = arith.constant 0 : index
      %c0_128 = arith.constant 0 : index
      %c0_129 = arith.constant 0 : index
      %358 = vector.load %arg25[%c0_127, %c0_128, %c0_129] : memref<1x8x32xf32, #tpu.memory_space<vmem>>, vector<1x8x32xf32>
      tpu.vector_store %arg25[%c0_127, %c0_128, %c0_129], %357 {strides = array<i32>} : memref<1x8x32xf32, #tpu.memory_space<vmem>>, vector<1x8x32xf32>,
      %359 = tpu.iota {dimensions = array<i32: 0>} : vector<8x8xi32>
      %360 = tpu.iota {dimensions = array<i32: 1>} : vector<8x8xi32>
      %361 = arith.cmpi sgt, %360, %359 : vector<8x8xi32>
      %362 = vector.shape_cast %361 : vector<8x8xi1> to vector<1x8x8xi1>
      %c0_130 = arith.constant 0 : index
      %c0_131 = arith.constant 0 : index
      %c0_132 = arith.constant 0 : index
      %363 = vector.load %arg4[%c0_130, %c0_131, %c0_132] : memref<1x1x8xf32, #tpu.memory_space<vmem>>, vector<1x1x8xf32>
      %cst_133 = arith.constant 5.000000e-01 : f32
      %364 = vector.broadcast %cst_133 : f32 to vector<1x1x8xf32>
      %365 = arith.cmpf ogt, %363, %364 : vector<1x1x8xf32>
      %366 = vector.broadcast %365 : vector<1x1x8xi1> to vector<1x8x8xi1>
      %367 = arith.ori %362, %366 : vector<1x8x8xi1>
      %cst_134 = arith.constant -9.99999984E+17 : f32
      %cst_135 = arith.constant 0.000000e+00 : f32
      %368 = vector.broadcast %cst_134 : f32 to vector<1x8x8xf32>
      %369 = vector.broadcast %cst_135 : f32 to vector<1x8x8xf32>
      %370 = arith.select %367, %368, %369 : vector<1x8x8xi1>, vector<1x8x8xf32>
      %c0_136 = arith.constant 0 : index
      %c0_137 = arith.constant 0 : index
      %c0_138 = arith.constant 0 : index
      %371 = vector.load %arg26[%c0_136, %c0_137, %c0_138] : memref<1x8x8xf32, #tpu.memory_space<vmem>>, vector<1x8x8xf32>
      tpu.vector_store %arg26[%c0_136, %c0_137, %c0_138], %370 {strides = array<i32>} : memref<1x8x8xf32, #tpu.memory_space<vmem>>, vector<1x8x8xf32>,
      %c0_139 = arith.constant 0 : index
      %c0_140 = arith.constant 0 : index
      %c0_141 = arith.constant 0 : index
      %372 = vector.load %arg5[%c0_139, %c0_140, %c0_141] : memref<1x1x16xf32, #tpu.memory_space<vmem>>, vector<1x1x16xf32>
      %cst_142 = arith.constant 5.000000e-01 : f32
      %373 = vector.broadcast %cst_142 : f32 to vector<1x1x16xf32>
      %374 = arith.cmpf ogt, %372, %373 : vector<1x1x16xf32>
      %cst_143 = arith.constant -9.99999984E+17 : f32
      %cst_144 = arith.constant 0.000000e+00 : f32
      %375 = vector.broadcast %cst_143 : f32 to vector<1x1x16xf32>
      %376 = vector.broadcast %cst_144 : f32 to vector<1x1x16xf32>
      %377 = arith.select %374, %375, %376 : vector<1x1x16xi1>, vector<1x1x16xf32>
      %c0_145 = arith.constant 0 : index
      %c0_146 = arith.constant 0 : index
      %c0_147 = arith.constant 0 : index
      %378 = vector.load %arg27[%c0_145, %c0_146, %c0_147] : memref<1x1x16xf32, #tpu.memory_space<vmem>>, vector<1x1x16xf32>
      tpu.vector_store %arg27[%c0_145, %c0_146, %c0_147], %377 {strides = array<i32>} : memref<1x1x16xf32, #tpu.memory_space<vmem>>, vector<1x1x16xf32>,
    } else {
    }
    %c0 = arith.constant 0 : index
    %c0_1 = arith.constant 0 : index
    %c0_2 = arith.constant 0 : index
    %3 = vector.load %arg25[%c0, %c0_1, %c0_2] : memref<1x8x32xf32, #tpu.memory_space<vmem>>, vector<1x8x32xf32>
    %4 = vector.shape_cast %3 : vector<1x8x32xf32> to vector<8x32xf32>
    %c0_3 = arith.constant 0 : index
    %c0_4 = arith.constant 0 : index
    %c0_5 = arith.constant 0 : index
    %5 = vector.load %arg3[%c0_3, %c0_4, %c0_5] : memref<1x16x32xbf16, #tpu.memory_space<vmem>>, vector<1x16x32xbf16>
    %6 = vector.shape_cast %5 : vector<1x16x32xbf16> to vector<16x32xbf16>
    %c0_6 = arith.constant 0 : index
    %c0_7 = arith.constant 0 : index
    %c0_8 = arith.constant 0 : index
    %7 = vector.load %arg6[%c0_6, %c0_7, %c0_8] : memref<1x2x32xf32, #tpu.memory_space<vmem>>, vector<1x2x32xf32>
    %8 = vector.shape_cast %7 : vector<1x2x32xf32> to vector<2x32xf32>
    %9 = vector.extract_strided_slice %8 {offsets = [0, 0], sizes = [1, 32], strides = [1, 1]} : vector<2x32xf32> to vector<1x32xf32>
    %10 = vector.shape_cast %9 : vector<1x32xf32> to vector<32xf32>
    %11 = vector.extract_strided_slice %8 {offsets = [1, 0], sizes = [1, 32], strides = [1, 1]} : vector<2x32xf32> to vector<1x32xf32>
    %12 = vector.shape_cast %11 : vector<1x32xf32> to vector<32xf32>
    %cst = arith.constant dense<0.000000e+00> : vector<8xf32>
    %13 = vector.multi_reduction <add>, %4, %cst [1] : vector<8x32xf32> to vector<8xf32>
    %14 = vector.shape_cast %13 : vector<8xf32> to vector<8x1xf32>
    %cst_9 = arith.constant 3.200000e+01 : f32
    %15 = vector.broadcast %cst_9 : f32 to vector<8x1xf32>
    %16 = arith.divf %14, %15 : vector<8x1xf32>
    %17 = vector.broadcast %16 : vector<8x1xf32> to vector<8x32xf32>
    %18 = arith.subf %4, %17 : vector<8x32xf32>
    %19 = arith.mulf %18, %18 : vector<8x32xf32>
    %cst_10 = arith.constant dense<0.000000e+00> : vector<8xf32>
    %20 = vector.multi_reduction <add>, %19, %cst_10 [1] : vector<8x32xf32> to vector<8xf32>
    %21 = vector.shape_cast %20 : vector<8xf32> to vector<8x1xf32>
    %cst_11 = arith.constant 3.200000e+01 : f32
    %22 = vector.broadcast %cst_11 : f32 to vector<8x1xf32>
    %23 = arith.divf %21, %22 : vector<8x1xf32>
    %24 = vector.broadcast %16 : vector<8x1xf32> to vector<8x32xf32>
    %25 = arith.subf %4, %24 : vector<8x32xf32>
    %cst_12 = arith.constant 9.99999997E-7 : f32
    %26 = vector.broadcast %cst_12 : f32 to vector<8x1xf32>
    %27 = arith.addf %23, %26 : vector<8x1xf32>
    %28 = math.rsqrt %27 : vector<8x1xf32>
    %29 = vector.broadcast %28 : vector<8x1xf32> to vector<8x32xf32>
    %30 = arith.mulf %25, %29 : vector<8x32xf32>
    %31 = vector.shape_cast %10 : vector<32xf32> to vector<1x32xf32>
    %32 = vector.broadcast %31 : vector<1x32xf32> to vector<8x32xf32>
    %33 = arith.mulf %30, %32 : vector<8x32xf32>
    %34 = vector.shape_cast %12 : vector<32xf32> to vector<1x32xf32>
    %35 = vector.broadcast %34 : vector<1x32xf32> to vector<8x32xf32>
    %36 = arith.addf %33, %35 : vector<8x32xf32>
    %37 = arith.truncf %36 : vector<8x32xf32> to vector<8x32xbf16>
    %c0_13 = arith.constant 0 : index
    %c0_14 = arith.constant 0 : index
    %c0_15 = arith.constant 0 : index
    %38 = vector.load %arg7[%c0_13, %c0_14, %c0_15] : memref<1x32x96xbf16, #tpu.memory_space<vmem>>, vector<1x32x96xbf16>
    %39 = vector.shape_cast %38 : vector<1x32x96xbf16> to vector<32x96xbf16>
    %cst_16 = arith.constant dense<0.000000e+00> : vector<8x96xf32>
    %40 = tpu.matmul %37, %39, %cst_16 {dimension_numbers = #tpu.dot_dimension_numbers<[1], [0], [0], [1], [0, 0, 1, 1], [], []>} : vector<8x32xbf16>, vector<32x96xbf16>, vector<8x96xf32> -> vector<8x96xf32>
    %c0_17 = arith.constant 0 : index
    %c0_18 = arith.constant 0 : index
    %c0_19 = arith.constant 0 : index
    %41 = vector.load %arg8[%c0_17, %c0_18, %c0_19] : memref<1x1x96xf32, #tpu.memory_space<vmem>>, vector<1x1x96xf32>
    %42 = vector.shape_cast %41 : vector<1x1x96xf32> to vector<1x96xf32>
    %43 = vector.broadcast %42 : vector<1x96xf32> to vector<8x96xf32>
    %44 = arith.addf %40, %43 : vector<8x96xf32>
    %45 = vector.shape_cast %44 : vector<8x96xf32> to vector<1x8x96xf32>
    %46 = vector.extract_strided_slice %45 {offsets = [0, 0, 0], sizes = [1, 8, 32], strides = [1, 1, 1]} : vector<1x8x96xf32> to vector<1x8x32xf32>
    %47 = vector.extract_strided_slice %45 {offsets = [0, 0, 32], sizes = [1, 8, 32], strides = [1, 1, 1]} : vector<1x8x96xf32> to vector<1x8x32xf32>
    %48 = vector.extract_strided_slice %45 {offsets = [0, 0, 64], sizes = [1, 8, 32], strides = [1, 1, 1]} : vector<1x8x96xf32> to vector<1x8x32xf32>
    %c0_20 = arith.constant 0 : index
    %c0_21 = arith.constant 0 : index
    %c0_22 = arith.constant 0 : index
    %49 = vector.load %arg26[%c0_20, %c0_21, %c0_22] : memref<1x8x8xf32, #tpu.memory_space<vmem>>, vector<1x8x8xf32>
    %50 = vector.extract_strided_slice %46 {offsets = [0, 0, 0], sizes = [1, 8, 8], strides = [1, 1, 1]} : vector<1x8x32xf32> to vector<1x8x8xf32>
    %51 = arith.truncf %50 : vector<1x8x8xf32> to vector<1x8x8xbf16>
    %52 = vector.extract_strided_slice %47 {offsets = [0, 0, 0], sizes = [1, 8, 8], strides = [1, 1, 1]} : vector<1x8x32xf32> to vector<1x8x8xf32>
    %53 = arith.truncf %52 : vector<1x8x8xf32> to vector<1x8x8xbf16>
    %54 = vector.extract_strided_slice %48 {offsets = [0, 0, 0], sizes = [1, 8, 8], strides = [1, 1, 1]} : vector<1x8x32xf32> to vector<1x8x8xf32>
    %55 = arith.truncf %54 : vector<1x8x8xf32> to vector<1x8x8xbf16>
    %cst_23 = arith.constant dense<0.000000e+00> : vector<1x8x8xf32>
    %56 = tpu.matmul %51, %53, %cst_23 {dimension_numbers = #tpu.dot_dimension_numbers<[2], [2], [1], [1], [0, 0, 0, 1, 1, 1], [0], [0]>} : vector<1x8x8xbf16>, vector<1x8x8xbf16>, vector<1x8x8xf32> -> vector<1x8x8xf32>
    %57 = arith.addf %56, %49 : vector<1x8x8xf32>
    %cst_24 = arith.constant dense<0xFF800000> : vector<1x8xf32>
    %58 = vector.multi_reduction <maximumf>, %57, %cst_24 [2] : vector<1x8x8xf32> to vector<1x8xf32>
    %59 = vector.shape_cast %58 : vector<1x8xf32> to vector<1x8x1xf32>
    %60 = vector.broadcast %59 : vector<1x8x1xf32> to vector<1x8x8xf32>
    %61 = arith.subf %57, %60 : vector<1x8x8xf32>
    %62 = math.exp %61 : vector<1x8x8xf32>
    %cst_25 = arith.constant dense<0.000000e+00> : vector<1x8xf32>
    %63 = vector.multi_reduction <add>, %62, %cst_25 [2] : vector<1x8x8xf32> to vector<1x8xf32>
    %64 = vector.shape_cast %63 : vector<1x8xf32> to vector<1x8x1xf32>
    %65 = tpu.reciprocal %64 {approx = true} : vector<1x8x1xf32> -> vector<1x8x1xf32>
    %66 = vector.broadcast %65 : vector<1x8x1xf32> to vector<1x8x8xf32>
    %67 = arith.mulf %62, %66 : vector<1x8x8xf32>
    %68 = arith.truncf %67 : vector<1x8x8xf32> to vector<1x8x8xbf16>
    %cst_26 = arith.constant dense<0.000000e+00> : vector<1x8x8xf32>
    %69 = tpu.matmul %68, %55, %cst_26 {dimension_numbers = #tpu.dot_dimension_numbers<[2], [1], [1], [2], [0, 0, 0, 1, 1, 2], [0], [0]>} : vector<1x8x8xbf16>, vector<1x8x8xbf16>, vector<1x8x8xf32> -> vector<1x8x8xf32>
    %70 = vector.shape_cast %69 : vector<1x8x8xf32> to vector<8x8xf32>
    %71 = vector.extract_strided_slice %46 {offsets = [0, 0, 8], sizes = [1, 8, 8], strides = [1, 1, 1]} : vector<1x8x32xf32> to vector<1x8x8xf32>
    %72 = arith.truncf %71 : vector<1x8x8xf32> to vector<1x8x8xbf16>
    %73 = vector.extract_strided_slice %47 {offsets = [0, 0, 8], sizes = [1, 8, 8], strides = [1, 1, 1]} : vector<1x8x32xf32> to vector<1x8x8xf32>
    %74 = arith.truncf %73 : vector<1x8x8xf32> to vector<1x8x8xbf16>
    %75 = vector.extract_strided_slice %48 {offsets = [0, 0, 8], sizes = [1, 8, 8], strides = [1, 1, 1]} : vector<1x8x32xf32> to vector<1x8x8xf32>
    %76 = arith.truncf %75 : vector<1x8x8xf32> to vector<1x8x8xbf16>
    %cst_27 = arith.constant dense<0.000000e+00> : vector<1x8x8xf32>
    %77 = tpu.matmul %72, %74, %cst_27 {dimension_numbers = #tpu.dot_dimension_numbers<[2], [2], [1], [1], [0, 0, 0, 1, 1, 1], [0], [0]>} : vector<1x8x8xbf16>, vector<1x8x8xbf16>, vector<1x8x8xf32> -> vector<1x8x8xf32>
    %78 = arith.addf %77, %49 : vector<1x8x8xf32>
    %cst_28 = arith.constant dense<0xFF800000> : vector<1x8xf32>
    %79 = vector.multi_reduction <maximumf>, %78, %cst_28 [2] : vector<1x8x8xf32> to vector<1x8xf32>
    %80 = vector.shape_cast %79 : vector<1x8xf32> to vector<1x8x1xf32>
    %81 = vector.broadcast %80 : vector<1x8x1xf32> to vector<1x8x8xf32>
    %82 = arith.subf %78, %81 : vector<1x8x8xf32>
    %83 = math.exp %82 : vector<1x8x8xf32>
    %cst_29 = arith.constant dense<0.000000e+00> : vector<1x8xf32>
    %84 = vector.multi_reduction <add>, %83, %cst_29 [2] : vector<1x8x8xf32> to vector<1x8xf32>
    %85 = vector.shape_cast %84 : vector<1x8xf32> to vector<1x8x1xf32>
    %86 = tpu.reciprocal %85 {approx = true} : vector<1x8x1xf32> -> vector<1x8x1xf32>
    %87 = vector.broadcast %86 : vector<1x8x1xf32> to vector<1x8x8xf32>
    %88 = arith.mulf %83, %87 : vector<1x8x8xf32>
    %89 = arith.truncf %88 : vector<1x8x8xf32> to vector<1x8x8xbf16>
    %cst_30 = arith.constant dense<0.000000e+00> : vector<1x8x8xf32>
    %90 = tpu.matmul %89, %76, %cst_30 {dimension_numbers = #tpu.dot_dimension_numbers<[2], [1], [1], [2], [0, 0, 0, 1, 1, 2], [0], [0]>} : vector<1x8x8xbf16>, vector<1x8x8xbf16>, vector<1x8x8xf32> -> vector<1x8x8xf32>
    %91 = vector.shape_cast %90 : vector<1x8x8xf32> to vector<8x8xf32>
    %92 = vector.extract_strided_slice %46 {offsets = [0, 0, 16], sizes = [1, 8, 8], strides = [1, 1, 1]} : vector<1x8x32xf32> to vector<1x8x8xf32>
    %93 = arith.truncf %92 : vector<1x8x8xf32> to vector<1x8x8xbf16>
    %94 = vector.extract_strided_slice %47 {offsets = [0, 0, 16], sizes = [1, 8, 8], strides = [1, 1, 1]} : vector<1x8x32xf32> to vector<1x8x8xf32>
    %95 = arith.truncf %94 : vector<1x8x8xf32> to vector<1x8x8xbf16>
    %96 = vector.extract_strided_slice %48 {offsets = [0, 0, 16], sizes = [1, 8, 8], strides = [1, 1, 1]} : vector<1x8x32xf32> to vector<1x8x8xf32>
    %97 = arith.truncf %96 : vector<1x8x8xf32> to vector<1x8x8xbf16>
    %cst_31 = arith.constant dense<0.000000e+00> : vector<1x8x8xf32>
    %98 = tpu.matmul %93, %95, %cst_31 {dimension_numbers = #tpu.dot_dimension_numbers<[2], [2], [1], [1], [0, 0, 0, 1, 1, 1], [0], [0]>} : vector<1x8x8xbf16>, vector<1x8x8xbf16>, vector<1x8x8xf32> -> vector<1x8x8xf32>
    %99 = arith.addf %98, %49 : vector<1x8x8xf32>
    %cst_32 = arith.constant dense<0xFF800000> : vector<1x8xf32>
    %100 = vector.multi_reduction <maximumf>, %99, %cst_32 [2] : vector<1x8x8xf32> to vector<1x8xf32>
    %101 = vector.shape_cast %100 : vector<1x8xf32> to vector<1x8x1xf32>
    %102 = vector.broadcast %101 : vector<1x8x1xf32> to vector<1x8x8xf32>
    %103 = arith.subf %99, %102 : vector<1x8x8xf32>
    %104 = math.exp %103 : vector<1x8x8xf32>
    %cst_33 = arith.constant dense<0.000000e+00> : vector<1x8xf32>
    %105 = vector.multi_reduction <add>, %104, %cst_33 [2] : vector<1x8x8xf32> to vector<1x8xf32>
    %106 = vector.shape_cast %105 : vector<1x8xf32> to vector<1x8x1xf32>
    %107 = tpu.reciprocal %106 {approx = true} : vector<1x8x1xf32> -> vector<1x8x1xf32>
    %108 = vector.broadcast %107 : vector<1x8x1xf32> to vector<1x8x8xf32>
    %109 = arith.mulf %104, %108 : vector<1x8x8xf32>
    %110 = arith.truncf %109 : vector<1x8x8xf32> to vector<1x8x8xbf16>
    %cst_34 = arith.constant dense<0.000000e+00> : vector<1x8x8xf32>
    %111 = tpu.matmul %110, %97, %cst_34 {dimension_numbers = #tpu.dot_dimension_numbers<[2], [1], [1], [2], [0, 0, 0, 1, 1, 2], [0], [0]>} : vector<1x8x8xbf16>, vector<1x8x8xbf16>, vector<1x8x8xf32> -> vector<1x8x8xf32>
    %112 = vector.shape_cast %111 : vector<1x8x8xf32> to vector<8x8xf32>
    %113 = vector.extract_strided_slice %46 {offsets = [0, 0, 24], sizes = [1, 8, 8], strides = [1, 1, 1]} : vector<1x8x32xf32> to vector<1x8x8xf32>
    %114 = arith.truncf %113 : vector<1x8x8xf32> to vector<1x8x8xbf16>
    %115 = vector.extract_strided_slice %47 {offsets = [0, 0, 24], sizes = [1, 8, 8], strides = [1, 1, 1]} : vector<1x8x32xf32> to vector<1x8x8xf32>
    %116 = arith.truncf %115 : vector<1x8x8xf32> to vector<1x8x8xbf16>
    %117 = vector.extract_strided_slice %48 {offsets = [0, 0, 24], sizes = [1, 8, 8], strides = [1, 1, 1]} : vector<1x8x32xf32> to vector<1x8x8xf32>
    %118 = arith.truncf %117 : vector<1x8x8xf32> to vector<1x8x8xbf16>
    %cst_35 = arith.constant dense<0.000000e+00> : vector<1x8x8xf32>
    %119 = tpu.matmul %114, %116, %cst_35 {dimension_numbers = #tpu.dot_dimension_numbers<[2], [2], [1], [1], [0, 0, 0, 1, 1, 1], [0], [0]>} : vector<1x8x8xbf16>, vector<1x8x8xbf16>, vector<1x8x8xf32> -> vector<1x8x8xf32>
    %120 = arith.addf %119, %49 : vector<1x8x8xf32>
    %cst_36 = arith.constant dense<0xFF800000> : vector<1x8xf32>
    %121 = vector.multi_reduction <maximumf>, %120, %cst_36 [2] : vector<1x8x8xf32> to vector<1x8xf32>
    %122 = vector.shape_cast %121 : vector<1x8xf32> to vector<1x8x1xf32>
    %123 = vector.broadcast %122 : vector<1x8x1xf32> to vector<1x8x8xf32>
    %124 = arith.subf %120, %123 : vector<1x8x8xf32>
    %125 = math.exp %124 : vector<1x8x8xf32>
    %cst_37 = arith.constant dense<0.000000e+00> : vector<1x8xf32>
    %126 = vector.multi_reduction <add>, %125, %cst_37 [2] : vector<1x8x8xf32> to vector<1x8xf32>
    %127 = vector.shape_cast %126 : vector<1x8xf32> to vector<1x8x1xf32>
    %128 = tpu.reciprocal %127 {approx = true} : vector<1x8x1xf32> -> vector<1x8x1xf32>
    %129 = vector.broadcast %128 : vector<1x8x1xf32> to vector<1x8x8xf32>
    %130 = arith.mulf %125, %129 : vector<1x8x8xf32>
    %131 = arith.truncf %130 : vector<1x8x8xf32> to vector<1x8x8xbf16>
    %cst_38 = arith.constant dense<0.000000e+00> : vector<1x8x8xf32>
    %132 = tpu.matmul %131, %118, %cst_38 {dimension_numbers = #tpu.dot_dimension_numbers<[2], [1], [1], [2], [0, 0, 0, 1, 1, 2], [0], [0]>} : vector<1x8x8xbf16>, vector<1x8x8xbf16>, vector<1x8x8xf32> -> vector<1x8x8xf32>
    %133 = vector.shape_cast %132 : vector<1x8x8xf32> to vector<8x8xf32>
    %134 = tpu.concatenate %70, %91, %112, %133 in 1 : vector<8x8xf32>, vector<8x8xf32>, vector<8x8xf32>, vector<8x8xf32> -> vector<8x32xf32>
    %135 = arith.truncf %134 : vector<8x32xf32> to vector<8x32xbf16>
    %c0_39 = arith.constant 0 : index
    %c0_40 = arith.constant 0 : index
    %c0_41 = arith.constant 0 : index
    %136 = vector.load %arg9[%c0_39, %c0_40, %c0_41] : memref<1x32x32xbf16, #tpu.memory_space<vmem>>, vector<1x32x32xbf16>
    %137 = vector.shape_cast %136 : vector<1x32x32xbf16> to vector<32x32xbf16>
    %cst_42 = arith.constant dense<0.000000e+00> : vector<8x32xf32>
    %138 = tpu.matmul %135, %137, %cst_42 {dimension_numbers = #tpu.dot_dimension_numbers<[1], [0], [0], [1], [0, 0, 1, 1], [], []>} : vector<8x32xbf16>, vector<32x32xbf16>, vector<8x32xf32> -> vector<8x32xf32>
    %c0_43 = arith.constant 0 : index
    %c0_44 = arith.constant 0 : index
    %c0_45 = arith.constant 0 : index
    %139 = vector.load %arg10[%c0_43, %c0_44, %c0_45] : memref<1x1x32xf32, #tpu.memory_space<vmem>>, vector<1x1x32xf32>
    %140 = vector.shape_cast %139 : vector<1x1x32xf32> to vector<1x32xf32>
    %141 = vector.broadcast %140 : vector<1x32xf32> to vector<8x32xf32>
    %142 = arith.addf %138, %141 : vector<8x32xf32>
    %143 = arith.addf %142, %4 : vector<8x32xf32>
    %c0_46 = arith.constant 0 : index
    %c0_47 = arith.constant 0 : index
    %c0_48 = arith.constant 0 : index
    %144 = vector.load %arg11[%c0_46, %c0_47, %c0_48] : memref<1x2x32xf32, #tpu.memory_space<vmem>>, vector<1x2x32xf32>
    %145 = vector.shape_cast %144 : vector<1x2x32xf32> to vector<2x32xf32>
    %146 = vector.extract_strided_slice %145 {offsets = [0, 0], sizes = [1, 32], strides = [1, 1]} : vector<2x32xf32> to vector<1x32xf32>
    %147 = vector.shape_cast %146 : vector<1x32xf32> to vector<32xf32>
    %148 = vector.extract_strided_slice %145 {offsets = [1, 0], sizes = [1, 32], strides = [1, 1]} : vector<2x32xf32> to vector<1x32xf32>
    %149 = vector.shape_cast %148 : vector<1x32xf32> to vector<32xf32>
    %cst_49 = arith.constant dense<0.000000e+00> : vector<8xf32>
    %150 = vector.multi_reduction <add>, %143, %cst_49 [1] : vector<8x32xf32> to vector<8xf32>
    %151 = vector.shape_cast %150 : vector<8xf32> to vector<8x1xf32>
    %cst_50 = arith.constant 3.200000e+01 : f32
    %152 = vector.broadcast %cst_50 : f32 to vector<8x1xf32>
    %153 = arith.divf %151, %152 : vector<8x1xf32>
    %154 = vector.broadcast %153 : vector<8x1xf32> to vector<8x32xf32>
    %155 = arith.subf %143, %154 : vector<8x32xf32>
    %156 = arith.mulf %155, %155 : vector<8x32xf32>
    %cst_51 = arith.constant dense<0.000000e+00> : vector<8xf32>
    %157 = vector.multi_reduction <add>, %156, %cst_51 [1] : vector<8x32xf32> to vector<8xf32>
    %158 = vector.shape_cast %157 : vector<8xf32> to vector<8x1xf32>
    %cst_52 = arith.constant 3.200000e+01 : f32
    %159 = vector.broadcast %cst_52 : f32 to vector<8x1xf32>
    %160 = arith.divf %158, %159 : vector<8x1xf32>
    %161 = vector.broadcast %153 : vector<8x1xf32> to vector<8x32xf32>
    %162 = arith.subf %143, %161 : vector<8x32xf32>
    %cst_53 = arith.constant 9.99999997E-7 : f32
    %163 = vector.broadcast %cst_53 : f32 to vector<8x1xf32>
    %164 = arith.addf %160, %163 : vector<8x1xf32>
    %165 = math.rsqrt %164 : vector<8x1xf32>
    %166 = vector.broadcast %165 : vector<8x1xf32> to vector<8x32xf32>
    %167 = arith.mulf %162, %166 : vector<8x32xf32>
    %168 = vector.shape_cast %147 : vector<32xf32> to vector<1x32xf32>
    %169 = vector.broadcast %168 : vector<1x32xf32> to vector<8x32xf32>
    %170 = arith.mulf %167, %169 : vector<8x32xf32>
    %171 = vector.shape_cast %149 : vector<32xf32> to vector<1x32xf32>
    %172 = vector.broadcast %171 : vector<1x32xf32> to vector<8x32xf32>
    %173 = arith.addf %170, %172 : vector<8x32xf32>
    %174 = arith.truncf %173 : vector<8x32xf32> to vector<8x32xbf16>
    %c0_54 = arith.constant 0 : index
    %c0_55 = arith.constant 0 : index
    %c0_56 = arith.constant 0 : index
    %175 = vector.load %arg12[%c0_54, %c0_55, %c0_56] : memref<1x32x32xbf16, #tpu.memory_space<vmem>>, vector<1x32x32xbf16>
    %176 = vector.shape_cast %175 : vector<1x32x32xbf16> to vector<32x32xbf16>
    %cst_57 = arith.constant dense<0.000000e+00> : vector<8x32xf32>
    %177 = tpu.matmul %174, %176, %cst_57 {dimension_numbers = #tpu.dot_dimension_numbers<[1], [0], [0], [1], [0, 0, 1, 1], [], []>} : vector<8x32xbf16>, vector<32x32xbf16>, vector<8x32xf32> -> vector<8x32xf32>
    %c0_58 = arith.constant 0 : index
    %c0_59 = arith.constant 0 : index
    %c0_60 = arith.constant 0 : index
    %178 = vector.load %arg13[%c0_58, %c0_59, %c0_60] : memref<1x1x32xf32, #tpu.memory_space<vmem>>, vector<1x1x32xf32>
    %179 = vector.shape_cast %178 : vector<1x1x32xf32> to vector<1x32xf32>
    %180 = vector.broadcast %179 : vector<1x32xf32> to vector<8x32xf32>
    %181 = arith.addf %177, %180 : vector<8x32xf32>
    %c0_61 = arith.constant 0 : index
    %c0_62 = arith.constant 0 : index
    %c0_63 = arith.constant 0 : index
    %182 = vector.load %arg14[%c0_61, %c0_62, %c0_63] : memref<1x32x64xbf16, #tpu.memory_space<vmem>>, vector<1x32x64xbf16>
    %183 = vector.shape_cast %182 : vector<1x32x64xbf16> to vector<32x64xbf16>
    %cst_64 = arith.constant dense<0.000000e+00> : vector<16x64xf32>
    %184 = tpu.matmul %6, %183, %cst_64 {dimension_numbers = #tpu.dot_dimension_numbers<[1], [0], [0], [1], [0, 0, 1, 1], [], []>} : vector<16x32xbf16>, vector<32x64xbf16>, vector<16x64xf32> -> vector<16x64xf32>
    %c0_65 = arith.constant 0 : index
    %c0_66 = arith.constant 0 : index
    %c0_67 = arith.constant 0 : index
    %185 = vector.load %arg15[%c0_65, %c0_66, %c0_67] : memref<1x1x64xf32, #tpu.memory_space<vmem>>, vector<1x1x64xf32>
    %186 = vector.shape_cast %185 : vector<1x1x64xf32> to vector<1x64xf32>
    %187 = vector.broadcast %186 : vector<1x64xf32> to vector<16x64xf32>
    %188 = arith.addf %184, %187 : vector<16x64xf32>
    %189 = vector.shape_cast %188 : vector<16x64xf32> to vector<1x16x64xf32>
    %190 = vector.shape_cast %181 : vector<8x32xf32> to vector<1x8x32xf32>
    %191 = vector.extract_strided_slice %189 {offsets = [0, 0, 0], sizes = [1, 16, 32], strides = [1, 1, 1]} : vector<1x16x64xf32> to vector<1x16x32xf32>
    %192 = vector.extract_strided_slice %189 {offsets = [0, 0, 32], sizes = [1, 16, 32], strides = [1, 1, 1]} : vector<1x16x64xf32> to vector<1x16x32xf32>
    %c0_68 = arith.constant 0 : index
    %c0_69 = arith.constant 0 : index
    %c0_70 = arith.constant 0 : index
    %193 = vector.load %arg27[%c0_68, %c0_69, %c0_70] : memref<1x1x16xf32, #tpu.memory_space<vmem>>, vector<1x1x16xf32>
    %194 = vector.extract_strided_slice %190 {offsets = [0, 0, 0], sizes = [1, 8, 8], strides = [1, 1, 1]} : vector<1x8x32xf32> to vector<1x8x8xf32>
    %195 = arith.truncf %194 : vector<1x8x8xf32> to vector<1x8x8xbf16>
    %196 = vector.extract_strided_slice %191 {offsets = [0, 0, 0], sizes = [1, 16, 8], strides = [1, 1, 1]} : vector<1x16x32xf32> to vector<1x16x8xf32>
    %197 = arith.truncf %196 : vector<1x16x8xf32> to vector<1x16x8xbf16>
    %198 = vector.extract_strided_slice %192 {offsets = [0, 0, 0], sizes = [1, 16, 8], strides = [1, 1, 1]} : vector<1x16x32xf32> to vector<1x16x8xf32>
    %199 = arith.truncf %198 : vector<1x16x8xf32> to vector<1x16x8xbf16>
    %cst_71 = arith.constant dense<0.000000e+00> : vector<1x8x16xf32>
    %200 = tpu.matmul %195, %197, %cst_71 {dimension_numbers = #tpu.dot_dimension_numbers<[2], [2], [1], [1], [0, 0, 0, 1, 1, 1], [0], [0]>} : vector<1x8x8xbf16>, vector<1x16x8xbf16>, vector<1x8x16xf32> -> vector<1x8x16xf32>
    %201 = vector.broadcast %193 : vector<1x1x16xf32> to vector<1x8x16xf32>
    %202 = arith.addf %200, %201 : vector<1x8x16xf32>
    %cst_72 = arith.constant dense<0xFF800000> : vector<1x8xf32>
    %203 = vector.multi_reduction <maximumf>, %202, %cst_72 [2] : vector<1x8x16xf32> to vector<1x8xf32>
    %204 = vector.shape_cast %203 : vector<1x8xf32> to vector<1x8x1xf32>
    %205 = vector.broadcast %204 : vector<1x8x1xf32> to vector<1x8x16xf32>
    %206 = arith.subf %202, %205 : vector<1x8x16xf32>
    %207 = math.exp %206 : vector<1x8x16xf32>
    %cst_73 = arith.constant dense<0.000000e+00> : vector<1x8xf32>
    %208 = vector.multi_reduction <add>, %207, %cst_73 [2] : vector<1x8x16xf32> to vector<1x8xf32>
    %209 = vector.shape_cast %208 : vector<1x8xf32> to vector<1x8x1xf32>
    %210 = tpu.reciprocal %209 {approx = true} : vector<1x8x1xf32> -> vector<1x8x1xf32>
    %211 = vector.broadcast %210 : vector<1x8x1xf32> to vector<1x8x16xf32>
    %212 = arith.mulf %207, %211 : vector<1x8x16xf32>
    %213 = arith.truncf %212 : vector<1x8x16xf32> to vector<1x8x16xbf16>
    %cst_74 = arith.constant dense<0.000000e+00> : vector<1x8x8xf32>
    %214 = tpu.matmul %213, %199, %cst_74 {dimension_numbers = #tpu.dot_dimension_numbers<[2], [1], [1], [2], [0, 0, 0, 1, 1, 2], [0], [0]>} : vector<1x8x16xbf16>, vector<1x16x8xbf16>, vector<1x8x8xf32> -> vector<1x8x8xf32>
    %215 = vector.shape_cast %214 : vector<1x8x8xf32> to vector<8x8xf32>
    %216 = vector.extract_strided_slice %190 {offsets = [0, 0, 8], sizes = [1, 8, 8], strides = [1, 1, 1]} : vector<1x8x32xf32> to vector<1x8x8xf32>
    %217 = arith.truncf %216 : vector<1x8x8xf32> to vector<1x8x8xbf16>
    %218 = vector.extract_strided_slice %191 {offsets = [0, 0, 8], sizes = [1, 16, 8], strides = [1, 1, 1]} : vector<1x16x32xf32> to vector<1x16x8xf32>
    %219 = arith.truncf %218 : vector<1x16x8xf32> to vector<1x16x8xbf16>
    %220 = vector.extract_strided_slice %192 {offsets = [0, 0, 8], sizes = [1, 16, 8], strides = [1, 1, 1]} : vector<1x16x32xf32> to vector<1x16x8xf32>
    %221 = arith.truncf %220 : vector<1x16x8xf32> to vector<1x16x8xbf16>
    %cst_75 = arith.constant dense<0.000000e+00> : vector<1x8x16xf32>
    %222 = tpu.matmul %217, %219, %cst_75 {dimension_numbers = #tpu.dot_dimension_numbers<[2], [2], [1], [1], [0, 0, 0, 1, 1, 1], [0], [0]>} : vector<1x8x8xbf16>, vector<1x16x8xbf16>, vector<1x8x16xf32> -> vector<1x8x16xf32>
    %223 = vector.broadcast %193 : vector<1x1x16xf32> to vector<1x8x16xf32>
    %224 = arith.addf %222, %223 : vector<1x8x16xf32>
    %cst_76 = arith.constant dense<0xFF800000> : vector<1x8xf32>
    %225 = vector.multi_reduction <maximumf>, %224, %cst_76 [2] : vector<1x8x16xf32> to vector<1x8xf32>
    %226 = vector.shape_cast %225 : vector<1x8xf32> to vector<1x8x1xf32>
    %227 = vector.broadcast %226 : vector<1x8x1xf32> to vector<1x8x16xf32>
    %228 = arith.subf %224, %227 : vector<1x8x16xf32>
    %229 = math.exp %228 : vector<1x8x16xf32>
    %cst_77 = arith.constant dense<0.000000e+00> : vector<1x8xf32>
    %230 = vector.multi_reduction <add>, %229, %cst_77 [2] : vector<1x8x16xf32> to vector<1x8xf32>
    %231 = vector.shape_cast %230 : vector<1x8xf32> to vector<1x8x1xf32>
    %232 = tpu.reciprocal %231 {approx = true} : vector<1x8x1xf32> -> vector<1x8x1xf32>
    %233 = vector.broadcast %232 : vector<1x8x1xf32> to vector<1x8x16xf32>
    %234 = arith.mulf %229, %233 : vector<1x8x16xf32>
    %235 = arith.truncf %234 : vector<1x8x16xf32> to vector<1x8x16xbf16>
    %cst_78 = arith.constant dense<0.000000e+00> : vector<1x8x8xf32>
    %236 = tpu.matmul %235, %221, %cst_78 {dimension_numbers = #tpu.dot_dimension_numbers<[2], [1], [1], [2], [0, 0, 0, 1, 1, 2], [0], [0]>} : vector<1x8x16xbf16>, vector<1x16x8xbf16>, vector<1x8x8xf32> -> vector<1x8x8xf32>
    %237 = vector.shape_cast %236 : vector<1x8x8xf32> to vector<8x8xf32>
    %238 = vector.extract_strided_slice %190 {offsets = [0, 0, 16], sizes = [1, 8, 8], strides = [1, 1, 1]} : vector<1x8x32xf32> to vector<1x8x8xf32>
    %239 = arith.truncf %238 : vector<1x8x8xf32> to vector<1x8x8xbf16>
    %240 = vector.extract_strided_slice %191 {offsets = [0, 0, 16], sizes = [1, 16, 8], strides = [1, 1, 1]} : vector<1x16x32xf32> to vector<1x16x8xf32>
    %241 = arith.truncf %240 : vector<1x16x8xf32> to vector<1x16x8xbf16>
    %242 = vector.extract_strided_slice %192 {offsets = [0, 0, 16], sizes = [1, 16, 8], strides = [1, 1, 1]} : vector<1x16x32xf32> to vector<1x16x8xf32>
    %243 = arith.truncf %242 : vector<1x16x8xf32> to vector<1x16x8xbf16>
    %cst_79 = arith.constant dense<0.000000e+00> : vector<1x8x16xf32>
    %244 = tpu.matmul %239, %241, %cst_79 {dimension_numbers = #tpu.dot_dimension_numbers<[2], [2], [1], [1], [0, 0, 0, 1, 1, 1], [0], [0]>} : vector<1x8x8xbf16>, vector<1x16x8xbf16>, vector<1x8x16xf32> -> vector<1x8x16xf32>
    %245 = vector.broadcast %193 : vector<1x1x16xf32> to vector<1x8x16xf32>
    %246 = arith.addf %244, %245 : vector<1x8x16xf32>
    %cst_80 = arith.constant dense<0xFF800000> : vector<1x8xf32>
    %247 = vector.multi_reduction <maximumf>, %246, %cst_80 [2] : vector<1x8x16xf32> to vector<1x8xf32>
    %248 = vector.shape_cast %247 : vector<1x8xf32> to vector<1x8x1xf32>
    %249 = vector.broadcast %248 : vector<1x8x1xf32> to vector<1x8x16xf32>
    %250 = arith.subf %246, %249 : vector<1x8x16xf32>
    %251 = math.exp %250 : vector<1x8x16xf32>
    %cst_81 = arith.constant dense<0.000000e+00> : vector<1x8xf32>
    %252 = vector.multi_reduction <add>, %251, %cst_81 [2] : vector<1x8x16xf32> to vector<1x8xf32>
    %253 = vector.shape_cast %252 : vector<1x8xf32> to vector<1x8x1xf32>
    %254 = tpu.reciprocal %253 {approx = true} : vector<1x8x1xf32> -> vector<1x8x1xf32>
    %255 = vector.broadcast %254 : vector<1x8x1xf32> to vector<1x8x16xf32>
    %256 = arith.mulf %251, %255 : vector<1x8x16xf32>
    %257 = arith.truncf %256 : vector<1x8x16xf32> to vector<1x8x16xbf16>
    %cst_82 = arith.constant dense<0.000000e+00> : vector<1x8x8xf32>
    %258 = tpu.matmul %257, %243, %cst_82 {dimension_numbers = #tpu.dot_dimension_numbers<[2], [1], [1], [2], [0, 0, 0, 1, 1, 2], [0], [0]>} : vector<1x8x16xbf16>, vector<1x16x8xbf16>, vector<1x8x8xf32> -> vector<1x8x8xf32>
    %259 = vector.shape_cast %258 : vector<1x8x8xf32> to vector<8x8xf32>
    %260 = vector.extract_strided_slice %190 {offsets = [0, 0, 24], sizes = [1, 8, 8], strides = [1, 1, 1]} : vector<1x8x32xf32> to vector<1x8x8xf32>
    %261 = arith.truncf %260 : vector<1x8x8xf32> to vector<1x8x8xbf16>
    %262 = vector.extract_strided_slice %191 {offsets = [0, 0, 24], sizes = [1, 16, 8], strides = [1, 1, 1]} : vector<1x16x32xf32> to vector<1x16x8xf32>
    %263 = arith.truncf %262 : vector<1x16x8xf32> to vector<1x16x8xbf16>
    %264 = vector.extract_strided_slice %192 {offsets = [0, 0, 24], sizes = [1, 16, 8], strides = [1, 1, 1]} : vector<1x16x32xf32> to vector<1x16x8xf32>
    %265 = arith.truncf %264 : vector<1x16x8xf32> to vector<1x16x8xbf16>
    %cst_83 = arith.constant dense<0.000000e+00> : vector<1x8x16xf32>
    %266 = tpu.matmul %261, %263, %cst_83 {dimension_numbers = #tpu.dot_dimension_numbers<[2], [2], [1], [1], [0, 0, 0, 1, 1, 1], [0], [0]>} : vector<1x8x8xbf16>, vector<1x16x8xbf16>, vector<1x8x16xf32> -> vector<1x8x16xf32>
    %267 = vector.broadcast %193 : vector<1x1x16xf32> to vector<1x8x16xf32>
    %268 = arith.addf %266, %267 : vector<1x8x16xf32>
    %cst_84 = arith.constant dense<0xFF800000> : vector<1x8xf32>
    %269 = vector.multi_reduction <maximumf>, %268, %cst_84 [2] : vector<1x8x16xf32> to vector<1x8xf32>
    %270 = vector.shape_cast %269 : vector<1x8xf32> to vector<1x8x1xf32>
    %271 = vector.broadcast %270 : vector<1x8x1xf32> to vector<1x8x16xf32>
    %272 = arith.subf %268, %271 : vector<1x8x16xf32>
    %273 = math.exp %272 : vector<1x8x16xf32>
    %cst_85 = arith.constant dense<0.000000e+00> : vector<1x8xf32>
    %274 = vector.multi_reduction <add>, %273, %cst_85 [2] : vector<1x8x16xf32> to vector<1x8xf32>
    %275 = vector.shape_cast %274 : vector<1x8xf32> to vector<1x8x1xf32>
    %276 = tpu.reciprocal %275 {approx = true} : vector<1x8x1xf32> -> vector<1x8x1xf32>
    %277 = vector.broadcast %276 : vector<1x8x1xf32> to vector<1x8x16xf32>
    %278 = arith.mulf %273, %277 : vector<1x8x16xf32>
    %279 = arith.truncf %278 : vector<1x8x16xf32> to vector<1x8x16xbf16>
    %cst_86 = arith.constant dense<0.000000e+00> : vector<1x8x8xf32>
    %280 = tpu.matmul %279, %265, %cst_86 {dimension_numbers = #tpu.dot_dimension_numbers<[2], [1], [1], [2], [0, 0, 0, 1, 1, 2], [0], [0]>} : vector<1x8x16xbf16>, vector<1x16x8xbf16>, vector<1x8x8xf32> -> vector<1x8x8xf32>
    %281 = vector.shape_cast %280 : vector<1x8x8xf32> to vector<8x8xf32>
    %282 = tpu.concatenate %215, %237, %259, %281 in 1 : vector<8x8xf32>, vector<8x8xf32>, vector<8x8xf32>, vector<8x8xf32> -> vector<8x32xf32>
    %283 = arith.truncf %282 : vector<8x32xf32> to vector<8x32xbf16>
    %c0_87 = arith.constant 0 : index
    %c0_88 = arith.constant 0 : index
    %c0_89 = arith.constant 0 : index
    %284 = vector.load %arg16[%c0_87, %c0_88, %c0_89] : memref<1x32x32xbf16, #tpu.memory_space<vmem>>, vector<1x32x32xbf16>
    %285 = vector.shape_cast %284 : vector<1x32x32xbf16> to vector<32x32xbf16>
    %cst_90 = arith.constant dense<0.000000e+00> : vector<8x32xf32>
    %286 = tpu.matmul %283, %285, %cst_90 {dimension_numbers = #tpu.dot_dimension_numbers<[1], [0], [0], [1], [0, 0, 1, 1], [], []>} : vector<8x32xbf16>, vector<32x32xbf16>, vector<8x32xf32> -> vector<8x32xf32>
    %c0_91 = arith.constant 0 : index
    %c0_92 = arith.constant 0 : index
    %c0_93 = arith.constant 0 : index
    %287 = vector.load %arg17[%c0_91, %c0_92, %c0_93] : memref<1x1x32xf32, #tpu.memory_space<vmem>>, vector<1x1x32xf32>
    %288 = vector.shape_cast %287 : vector<1x1x32xf32> to vector<1x32xf32>
    %289 = vector.broadcast %288 : vector<1x32xf32> to vector<8x32xf32>
    %290 = arith.addf %286, %289 : vector<8x32xf32>
    %291 = arith.addf %290, %143 : vector<8x32xf32>
    %c0_94 = arith.constant 0 : index
    %c0_95 = arith.constant 0 : index
    %c0_96 = arith.constant 0 : index
    %292 = vector.load %arg18[%c0_94, %c0_95, %c0_96] : memref<1x2x32xf32, #tpu.memory_space<vmem>>, vector<1x2x32xf32>
    %293 = vector.shape_cast %292 : vector<1x2x32xf32> to vector<2x32xf32>
    %294 = vector.extract_strided_slice %293 {offsets = [0, 0], sizes = [1, 32], strides = [1, 1]} : vector<2x32xf32> to vector<1x32xf32>
    %295 = vector.shape_cast %294 : vector<1x32xf32> to vector<32xf32>
    %296 = vector.extract_strided_slice %293 {offsets = [1, 0], sizes = [1, 32], strides = [1, 1]} : vector<2x32xf32> to vector<1x32xf32>
    %297 = vector.shape_cast %296 : vector<1x32xf32> to vector<32xf32>
    %cst_97 = arith.constant dense<0.000000e+00> : vector<8xf32>
    %298 = vector.multi_reduction <add>, %291, %cst_97 [1] : vector<8x32xf32> to vector<8xf32>
    %299 = vector.shape_cast %298 : vector<8xf32> to vector<8x1xf32>
    %cst_98 = arith.constant 3.200000e+01 : f32
    %300 = vector.broadcast %cst_98 : f32 to vector<8x1xf32>
    %301 = arith.divf %299, %300 : vector<8x1xf32>
    %302 = vector.broadcast %301 : vector<8x1xf32> to vector<8x32xf32>
    %303 = arith.subf %291, %302 : vector<8x32xf32>
    %304 = arith.mulf %303, %303 : vector<8x32xf32>
    %cst_99 = arith.constant dense<0.000000e+00> : vector<8xf32>
    %305 = vector.multi_reduction <add>, %304, %cst_99 [1] : vector<8x32xf32> to vector<8xf32>
    %306 = vector.shape_cast %305 : vector<8xf32> to vector<8x1xf32>
    %cst_100 = arith.constant 3.200000e+01 : f32
    %307 = vector.broadcast %cst_100 : f32 to vector<8x1xf32>
    %308 = arith.divf %306, %307 : vector<8x1xf32>
    %309 = vector.broadcast %301 : vector<8x1xf32> to vector<8x32xf32>
    %310 = arith.subf %291, %309 : vector<8x32xf32>
    %cst_101 = arith.constant 9.99999997E-7 : f32
    %311 = vector.broadcast %cst_101 : f32 to vector<8x1xf32>
    %312 = arith.addf %308, %311 : vector<8x1xf32>
    %313 = math.rsqrt %312 : vector<8x1xf32>
    %314 = vector.broadcast %313 : vector<8x1xf32> to vector<8x32xf32>
    %315 = arith.mulf %310, %314 : vector<8x32xf32>
    %316 = vector.shape_cast %295 : vector<32xf32> to vector<1x32xf32>
    %317 = vector.broadcast %316 : vector<1x32xf32> to vector<8x32xf32>
    %318 = arith.mulf %315, %317 : vector<8x32xf32>
    %319 = vector.shape_cast %297 : vector<32xf32> to vector<1x32xf32>
    %320 = vector.broadcast %319 : vector<1x32xf32> to vector<8x32xf32>
    %321 = arith.addf %318, %320 : vector<8x32xf32>
    %322 = arith.truncf %321 : vector<8x32xf32> to vector<8x32xbf16>
    %c0_102 = arith.constant 0 : index
    %c0_103 = arith.constant 0 : index
    %c0_104 = arith.constant 0 : index
    %323 = vector.load %arg19[%c0_102, %c0_103, %c0_104] : memref<1x32x64xbf16, #tpu.memory_space<vmem>>, vector<1x32x64xbf16>
    %324 = vector.shape_cast %323 : vector<1x32x64xbf16> to vector<32x64xbf16>
    %cst_105 = arith.constant dense<0.000000e+00> : vector<8x64xf32>
    %325 = tpu.matmul %322, %324, %cst_105 {dimension_numbers = #tpu.dot_dimension_numbers<[1], [0], [0], [1], [0, 0, 1, 1], [], []>} : vector<8x32xbf16>, vector<32x64xbf16>, vector<8x64xf32> -> vector<8x64xf32>
    %c0_106 = arith.constant 0 : index
    %c0_107 = arith.constant 0 : index
    %c0_108 = arith.constant 0 : index
    %326 = vector.load %arg20[%c0_106, %c0_107, %c0_108] : memref<1x1x64xf32, #tpu.memory_space<vmem>>, vector<1x1x64xf32>
    %327 = vector.shape_cast %326 : vector<1x1x64xf32> to vector<1x64xf32>
    %328 = vector.broadcast %327 : vector<1x64xf32> to vector<8x64xf32>
    %329 = arith.addf %325, %328 : vector<8x64xf32>
    %cst_109 = arith.constant 5.000000e-01 : f32
    %330 = vector.broadcast %cst_109 : f32 to vector<8x64xf32>
    %331 = arith.mulf %330, %329 : vector<8x64xf32>
    %332 = arith.mulf %329, %329 : vector<8x64xf32>
    %333 = arith.mulf %329, %332 : vector<8x64xf32>
    %cst_110 = arith.constant 4.471500e-02 : f32
    %334 = vector.broadcast %cst_110 : f32 to vector<8x64xf32>
    %335 = arith.mulf %334, %333 : vector<8x64xf32>
    %336 = arith.addf %329, %335 : vector<8x64xf32>
    %cst_111 = arith.constant 0.797884583 : f32
    %337 = vector.broadcast %cst_111 : f32 to vector<8x64xf32>
    %338 = arith.mulf %337, %336 : vector<8x64xf32>
    %339 = math.tanh %338 : vector<8x64xf32>
    %cst_112 = arith.constant 1.000000e+00 : f32
    %340 = vector.broadcast %cst_112 : f32 to vector<8x64xf32>
    %341 = arith.addf %340, %339 : vector<8x64xf32>
    %342 = arith.mulf %331, %341 : vector<8x64xf32>
    %343 = arith.truncf %342 : vector<8x64xf32> to vector<8x64xbf16>
    %c0_113 = arith.constant 0 : index
    %c0_114 = arith.constant 0 : index
    %c0_115 = arith.constant 0 : index
    %344 = vector.load %arg21[%c0_113, %c0_114, %c0_115] : memref<1x64x32xbf16, #tpu.memory_space<vmem>>, vector<1x64x32xbf16>
    %345 = vector.shape_cast %344 : vector<1x64x32xbf16> to vector<64x32xbf16>
    %cst_116 = arith.constant dense<0.000000e+00> : vector<8x32xf32>
    %346 = tpu.matmul %343, %345, %cst_116 {dimension_numbers = #tpu.dot_dimension_numbers<[1], [0], [0], [1], [0, 0, 1, 1], [], []>} : vector<8x64xbf16>, vector<64x32xbf16>, vector<8x32xf32> -> vector<8x32xf32>
    %c0_117 = arith.constant 0 : index
    %c0_118 = arith.constant 0 : index
    %c0_119 = arith.constant 0 : index
    %347 = vector.load %arg22[%c0_117, %c0_118, %c0_119] : memref<1x1x32xf32, #tpu.memory_space<vmem>>, vector<1x1x32xf32>
    %348 = vector.shape_cast %347 : vector<1x1x32xf32> to vector<1x32xf32>
    %349 = vector.broadcast %348 : vector<1x32xf32> to vector<8x32xf32>
    %350 = arith.addf %346, %349 : vector<8x32xf32>
    %351 = arith.addf %350, %291 : vector<8x32xf32>
    %352 = vector.shape_cast %351 : vector<8x32xf32> to vector<1x8x32xf32>
    %c0_120 = arith.constant 0 : index
    %c0_121 = arith.constant 0 : index
    %c0_122 = arith.constant 0 : index
    %353 = vector.load %arg25[%c0_120, %c0_121, %c0_122] : memref<1x8x32xf32, #tpu.memory_space<vmem>>, vector<1x8x32xf32>
    tpu.vector_store %arg25[%c0_120, %c0_121, %c0_122], %352 {strides = array<i32>} : memref<1x8x32xf32, #tpu.memory_space<vmem>>, vector<1x8x32xf32>,
    %c1_i32 = arith.constant 1 : i32
    %354 = arith.cmpi eq, %arg1, %c1_i32 : i32
    %355 = arith.extui %354 : i1 to i32
    %c0_i32_123 = arith.constant 0 : i32
    %356 = arith.cmpi ne, %355, %c0_i32_123 : i32
    scf.if %356 {
      %c0_124 = arith.constant 0 : index
      %c0_125 = arith.constant 0 : index
      %357 = vector.load %arg23[%c0_124, %c0_125] : memref<2x32xf32, #tpu.memory_space<vmem>>, vector<2x32xf32>
      %358 = vector.extract_strided_slice %357 {offsets = [0, 0], sizes = [1, 32], strides = [1, 1]} : vector<2x32xf32> to vector<1x32xf32>
      %359 = vector.shape_cast %358 : vector<1x32xf32> to vector<32xf32>
      %360 = vector.extract_strided_slice %357 {offsets = [1, 0], sizes = [1, 32], strides = [1, 1]} : vector<2x32xf32> to vector<1x32xf32>
      %361 = vector.shape_cast %360 : vector<1x32xf32> to vector<32xf32>
      %cst_126 = arith.constant dense<0.000000e+00> : vector<8xf32>
      %362 = vector.multi_reduction <add>, %351, %cst_126 [1] : vector<8x32xf32> to vector<8xf32>
      %363 = vector.shape_cast %362 : vector<8xf32> to vector<8x1xf32>
      %cst_127 = arith.constant 3.200000e+01 : f32
      %364 = vector.broadcast %cst_127 : f32 to vector<8x1xf32>
      %365 = arith.divf %363, %364 : vector<8x1xf32>
      %366 = vector.broadcast %365 : vector<8x1xf32> to vector<8x32xf32>
      %367 = arith.subf %351, %366 : vector<8x32xf32>
      %368 = arith.mulf %367, %367 : vector<8x32xf32>
      %cst_128 = arith.constant dense<0.000000e+00> : vector<8xf32>
      %369 = vector.multi_reduction <add>, %368, %cst_128 [1] : vector<8x32xf32> to vector<8xf32>
      %370 = vector.shape_cast %369 : vector<8xf32> to vector<8x1xf32>
      %cst_129 = arith.constant 3.200000e+01 : f32
      %371 = vector.broadcast %cst_129 : f32 to vector<8x1xf32>
      %372 = arith.divf %370, %371 : vector<8x1xf32>
      %373 = vector.broadcast %365 : vector<8x1xf32> to vector<8x32xf32>
      %374 = arith.subf %351, %373 : vector<8x32xf32>
      %cst_130 = arith.constant 9.99999997E-7 : f32
      %375 = vector.broadcast %cst_130 : f32 to vector<8x1xf32>
      %376 = arith.addf %372, %375 : vector<8x1xf32>
      %377 = math.rsqrt %376 : vector<8x1xf32>
      %378 = vector.broadcast %377 : vector<8x1xf32> to vector<8x32xf32>
      %379 = arith.mulf %374, %378 : vector<8x32xf32>
      %380 = vector.shape_cast %359 : vector<32xf32> to vector<1x32xf32>
      %381 = vector.broadcast %380 : vector<1x32xf32> to vector<8x32xf32>
      %382 = arith.mulf %379, %381 : vector<8x32xf32>
      %383 = vector.shape_cast %361 : vector<32xf32> to vector<1x32xf32>
      %384 = vector.broadcast %383 : vector<1x32xf32> to vector<8x32xf32>
      %385 = arith.addf %382, %384 : vector<8x32xf32>
      %386 = vector.shape_cast %385 : vector<8x32xf32> to vector<1x8x32xf32>
      %387 = arith.truncf %386 : vector<1x8x32xf32> to vector<1x8x32xbf16>
      %c0_131 = arith.constant 0 : index
      %c0_132 = arith.constant 0 : index
      %c0_133 = arith.constant 0 : index
      %388 = vector.load %arg24[%c0_131, %c0_132, %c0_133] : memref<1x8x32xbf16, #tpu.memory_space<vmem>>, vector<1x8x32xbf16>
      tpu.vector_store %arg24[%c0_131, %c0_132, %c0_133], %387 {strides = array<i32>} : memref<1x8x32xbf16, #tpu.memory_space<vmem>>, vector<1x8x32xbf16>,
    } else {
    }
    return
  }
  func.func @transform_0(%arg0: i32, %arg1: i32) -> (i32, i32, i32) {
    %c0_i32 = arith.constant 0 : i32
    %c0_i32_0 = arith.constant 0 : i32
    %c0_i32_1 = arith.constant 0 : i32
    return %arg0, %c0_i32, %c0_i32_0 : i32, i32, i32
  }
  func.func @transform_1(%arg0: i32, %arg1: i32) -> (i32, i32, i32) {
    %c0_i32 = arith.constant 0 : i32
    %c0_i32_0 = arith.constant 0 : i32
    %c0_i32_1 = arith.constant 0 : i32
    return %arg0, %c0_i32, %c0_i32_0 : i32, i32, i32
  }
  func.func @transform_2(%arg0: i32, %arg1: i32) -> (i32, i32, i32) {
    %c0_i32 = arith.constant 0 : i32
    %c0_i32_0 = arith.constant 0 : i32
    %c0_i32_1 = arith.constant 0 : i32
    return %arg0, %c0_i32, %c0_i32_0 : i32, i32, i32
  }
  func.func @transform_3(%arg0: i32, %arg1: i32) -> (i32, i32, i32) {
    %c0_i32 = arith.constant 0 : i32
    %c0_i32_0 = arith.constant 0 : i32
    %c0_i32_1 = arith.constant 0 : i32
    return %arg0, %c0_i32, %c0_i32_0 : i32, i32, i32
  }
  func.func @transform_4(%arg0: i32, %arg1: i32) -> (i32, i32, i32) {
    %c0_i32 = arith.constant 0 : i32
    %c0_i32_0 = arith.constant 0 : i32
    %c0_i32_1 = arith.constant 0 : i32
    return %arg1, %c0_i32, %c0_i32_0 : i32, i32, i32
  }
  func.func @transform_5(%arg0: i32, %arg1: i32) -> (i32, i32, i32) {
    %c0_i32 = arith.constant 0 : i32
    %c0_i32_0 = arith.constant 0 : i32
    %c0_i32_1 = arith.constant 0 : i32
    return %arg1, %c0_i32, %c0_i32_0 : i32, i32, i32
  }
  func.func @transform_6(%arg0: i32, %arg1: i32) -> (i32, i32, i32) {
    %c0_i32 = arith.constant 0 : i32
    %c0_i32_0 = arith.constant 0 : i32
    %c0_i32_1 = arith.constant 0 : i32
    return %arg1, %c0_i32, %c0_i32_0 : i32, i32, i32
  }
  func.func @transform_7(%arg0: i32, %arg1: i32) -> (i32, i32, i32) {
    %c0_i32 = arith.constant 0 : i32
    %c0_i32_0 = arith.constant 0 : i32
    %c0_i32_1 = arith.constant 0 : i32
    return %arg1, %c0_i32, %c0_i32_0 : i32, i32, i32
  }
  func.func @transform_8(%arg0: i32, %arg1: i32) -> (i32, i32, i32) {
    %c0_i32 = arith.constant 0 : i32
    %c0_i32_0 = arith.constant 0 : i32
    %c0_i32_1 = arith.constant 0 : i32
    return %arg1, %c0_i32, %c0_i32_0 : i32, i32, i32
  }
  func.func @transform_9(%arg0: i32, %arg1: i32) -> (i32, i32, i32) {
    %c0_i32 = arith.constant 0 : i32
    %c0_i32_0 = arith.constant 0 : i32
    %c0_i32_1 = arith.constant 0 : i32
    return %arg1, %c0_i32, %c0_i32_0 : i32, i32, i32
  }
  func.func @transform_10(%arg0: i32, %arg1: i32) -> (i32, i32, i32) {
    %c0_i32 = arith.constant 0 : i32
    %c0_i32_0 = arith.constant 0 : i32
    %c0_i32_1 = arith.constant 0 : i32
    return %arg1, %c0_i32, %c0_i32_0 : i32, i32, i32
  }
  func.func @transform_11(%arg0: i32, %arg1: i32) -> (i32, i32, i32) {
    %c0_i32 = arith.constant 0 : i32
    %c0_i32_0 = arith.constant 0 : i32
    %c0_i32_1 = arith.constant 0 : i32
    return %arg1, %c0_i32, %c0_i32_0 : i32, i32, i32
  }
  func.func @transform_12(%arg0: i32, %arg1: i32) -> (i32, i32, i32) {
    %c0_i32 = arith.constant 0 : i32
    %c0_i32_0 = arith.constant 0 : i32
    %c0_i32_1 = arith.constant 0 : i32
    return %arg1, %c0_i32, %c0_i32_0 : i32, i32, i32
  }
  func.func @transform_13(%arg0: i32, %arg1: i32) -> (i32, i32, i32) {
    %c0_i32 = arith.constant 0 : i32
    %c0_i32_0 = arith.constant 0 : i32
    %c0_i32_1 = arith.constant 0 : i32
    return %arg1, %c0_i32, %c0_i32_0 : i32, i32, i32
  }
  func.func @transform_14(%arg0: i32, %arg1: i32) -> (i32, i32, i32) {
    %c0_i32 = arith.constant 0 : i32
    %c0_i32_0 = arith.constant 0 : i32
    %c0_i32_1 = arith.constant 0 : i32
    return %arg1, %c0_i32, %c0_i32_0 : i32, i32, i32
  }
  func.func @transform_15(%arg0: i32, %arg1: i32) -> (i32, i32, i32) {
    %c0_i32 = arith.constant 0 : i32
    %c0_i32_0 = arith.constant 0 : i32
    %c0_i32_1 = arith.constant 0 : i32
    return %arg1, %c0_i32, %c0_i32_0 : i32, i32, i32
  }
  func.func @transform_16(%arg0: i32, %arg1: i32) -> (i32, i32, i32) {
    %c0_i32 = arith.constant 0 : i32
    %c0_i32_0 = arith.constant 0 : i32
    %c0_i32_1 = arith.constant 0 : i32
    return %arg1, %c0_i32, %c0_i32_0 : i32, i32, i32
  }
  func.func @transform_17(%arg0: i32, %arg1: i32) -> (i32, i32, i32) {
    %c0_i32 = arith.constant 0 : i32
    %c0_i32_0 = arith.constant 0 : i32
    %c0_i32_1 = arith.constant 0 : i32
    return %arg1, %c0_i32, %c0_i32_0 : i32, i32, i32
  }
  func.func @transform_18(%arg0: i32, %arg1: i32) -> (i32, i32, i32) {
    %c0_i32 = arith.constant 0 : i32
    %c0_i32_0 = arith.constant 0 : i32
    %c0_i32_1 = arith.constant 0 : i32
    return %arg1, %c0_i32, %c0_i32_0 : i32, i32, i32
  }
  func.func @transform_19(%arg0: i32, %arg1: i32) -> (i32, i32, i32) {
    %c0_i32 = arith.constant 0 : i32
    %c0_i32_0 = arith.constant 0 : i32
    %c0_i32_1 = arith.constant 0 : i32
    return %arg1, %c0_i32, %c0_i32_0 : i32, i32, i32
  }
  func.func @transform_20(%arg0: i32, %arg1: i32) -> (i32, i32, i32) {
    %c0_i32 = arith.constant 0 : i32
    %c0_i32_0 = arith.constant 0 : i32
    %c0_i32_1 = arith.constant 0 : i32
    return %arg1, %c0_i32, %c0_i32_0 : i32, i32, i32
  }
  func.func @transform_21(%arg0: i32, %arg1: i32) -> (i32, i32) {
    %c0_i32 = arith.constant 0 : i32
    %c0_i32_0 = arith.constant 0 : i32
    %c0_i32_1 = arith.constant 0 : i32
    return %c0_i32, %c0_i32_0 : i32, i32
  }
  func.func @transform_22(%arg0: i32, %arg1: i32) -> (i32, i32, i32) {
    %c0_i32 = arith.constant 0 : i32
    %c0_i32_0 = arith.constant 0 : i32
    %c0_i32_1 = arith.constant 0 : i32
    return %arg0, %c0_i32, %c0_i32_0 : i32, i32, i32
  }
}

</mosaic_0001>

<llo_original>
// kernel: tpu_custom_call.1
$region0: #{tpu_custom_call.1}
  #allocation0 [shape = 'u32[]', space=smem, size = 0x4, offset = 0x4, fixed_abs, tag = 'smem constant byte address 0x4 - core index']
  #allocation1 [shape = 'u32[144,128]{1,0:T(1,128)}', space=vmem, size = 0x12000, scoped, tag = 'internal scratch']
  #allocation2 [shape = 'f32[1,8,32]{2,1,0:T(8,128)}', space=vmem, size = 0x1000, scoped, tag = 'scratch operand']
  #allocation3 [shape = 'f32[1,8,8]{2,1,0:T(8,128)}', space=vmem, size = 0x1000, scoped, tag = 'scratch operand']
  #allocation4 [shape = 'f32[1,1,16]{2,1,0:T(1,128)}', space=vmem, size = 0x200, scoped, tag = 'scratch operand']
  %s0 = inlined_call_operand.hbm [shape: f32[2,8,32], index: 0, kind: input, shape index: {}]
  %s1 = inlined_call_operand.hbm [shape: bf16[2,16,32], index: 1, kind: input, shape index: {}]
  %s2 = inlined_call_operand.hbm [shape: f32[2,1,8], index: 2, kind: input, shape index: {}]
  %s3 = inlined_call_operand.hbm [shape: f32[2,1,16], index: 3, kind: input, shape index: {}]
  %s4 = inlined_call_operand.hbm [shape: f32[2,2,32], index: 4, kind: input, shape index: {}]
  %s5 = inlined_call_operand.vmem [shape: bf16[2,32,96], index: 5, kind: input, shape index: {}]
  %s6 = inlined_call_operand.hbm [shape: f32[2,1,96], index: 6, kind: input, shape index: {}]
  %s7 = inlined_call_operand.vmem [shape: bf16[2,32,32], index: 7, kind: input, shape index: {}]
  %s8 = inlined_call_operand.hbm [shape: f32[2,1,32], index: 8, kind: input, shape index: {}]
  %s9 = inlined_call_operand.hbm [shape: f32[2,2,32], index: 9, kind: input, shape index: {}]
  %s10 = inlined_call_operand.vmem [shape: bf16[2,32,32], index: 10, kind: input, shape index: {}]
  %s11 = inlined_call_operand.hbm [shape: f32[2,1,32], index: 11, kind: input, shape index: {}]
  %s12 = inlined_call_operand.vmem [shape: bf16[2,32,64], index: 12, kind: input, shape index: {}]
  %s13 = inlined_call_operand.hbm [shape: f32[2,1,64], index: 13, kind: input, shape index: {}]
  %s14 = inlined_call_operand.hbm [shape: bf16[2,32,32], index: 14, kind: input, shape index: {}]
  %s15 = inlined_call_operand.hbm [shape: f32[2,1,32], index: 15, kind: input, shape index: {}]
  %s16 = inlined_call_operand.hbm [shape: f32[2,2,32], index: 16, kind: input, shape index: {}]
  %s17 = inlined_call_operand.hbm [shape: bf16[2,32,64], index: 17, kind: input, shape index: {}]
  %s18 = inlined_call_operand.vmem [shape: f32[2,1,64], index: 18, kind: input, shape index: {}]
  %s19 = inlined_call_operand.vmem [shape: bf16[2,64,32], index: 19, kind: input, shape index: {}]
  %s20 = inlined_call_operand.vmem [shape: f32[2,1,32], index: 20, kind: input, shape index: {}]
  %s21 = inlined_call_operand.vmem [shape: f32[2,32], index: 21, kind: input, shape index: {}]
  %s22 = inlined_call_operand.hbm [shape: bf16[2,8,32], index: 22, kind: output, shape index: {}]
  %s23 = sld [smem:[#allocation0]]
  $region185: #{tpu_custom_call.1} parent=0
    _
  %s25 = ssub.s32 1, %s23
  %s26 = scalar_select 0, %s25, %s23
  $region1: #{tpu_custom_call.1} parent=0
    #allocation5 [shape = 'u8[8192]{0}', space=vmem, size = 0x2000, scoped, tag = 'input window, operand 0']
    #allocation6 [shape = 's32[2]{0}', space=sflag, size = 0x8, scoped, tag = 'scoped memory for tpu_custom_call.1']
    #allocation7 [shape = 's32[2]{0}', space=sflag, size = 0x8, scoped, tag = 'scoped memory for tpu_custom_call.1']
    #allocation8 [shape = 'u8[8192]{0}', space=vmem, size = 0x2000, scoped, tag = 'input window, operand 1']
    #allocation9 [shape = 's32[2]{0}', space=sflag, size = 0x8, scoped, tag = 'scoped memory for tpu_custom_call.1']
    #allocation10 [shape = 'u8[1024]{0}', space=vmem, size = 0x400, scoped, tag = 'input window, operand 2']
    #allocation11 [shape = 'u8[1024]{0}', space=vmem, size = 0x400, scoped, tag = 'input window, operand 3']
    #allocation12 [shape = 's32[2]{0}', space=sflag, size = 0x8, scoped, tag = 'scoped memory for tpu_custom_call.1']
    #allocation13 [shape = 'u8[2048]{0}', space=vmem, size = 0x800, scoped, tag = 'input window, operand 4']
    #allocation14 [shape = 'u8[1024]{0}', space=vmem, size = 0x400, scoped, tag = 'input window, operand 6']
    #allocation15 [shape = 's32[2]{0}', space=sflag, size = 0x8, scoped, tag = 'scoped memory for tpu_custom_call.1']
    #allocation16 [shape = 'u8[1024]{0}', space=vmem, size = 0x400, scoped, tag = 'input window, operand 8']
    #allocation17 [shape = 'u8[2048]{0}', space=vmem, size = 0x800, scoped, tag = 'input window, operand 9']
    #allocation18 [shape = 's32[2]{0}', space=sflag, size = 0x8, scoped, tag = 'scoped memory for tpu_custom_call.1']
    #allocation19 [shape = 'u8[1024]{0}', space=vmem, size = 0x400, scoped, tag = 'input window, operand 11']
    #allocation20 [shape = 'u8[1024]{0}', space=vmem, size = 0x400, scoped, tag = 'input window, operand 13']
    #allocation21 [shape = 's32[2]{0}', space=sflag, size = 0x8, scoped, tag = 'scoped memory for tpu_custom_call.1']
    #allocation22 [shape = 'u8[16384]{0}', space=vmem, size = 0x4000, scoped, tag = 'input window, operand 14']
    #allocation23 [shape = 'u8[1024]{0}', space=vmem, size = 0x400, scoped, tag = 'input window, operand 15']
    #allocation24 [shape = 's32[2]{0}', space=sflag, size = 0x8, scoped, tag = 'scoped memory for tpu_custom_call.1']
    #allocation25 [shape = 'u8[2048]{0}', space=vmem, size = 0x800, scoped, tag = 'input window, operand 16']
    #allocation26 [shape = 'u8[16384]{0}', space=vmem, size = 0x4000, scoped, tag = 'input window, operand 17']
    #allocation27 [shape = 's32[2]{0}', space=sflag, size = 0x8, scoped, tag = 'scoped memory for tpu_custom_call.1']
    #allocation28 [shape = 'u8[4096]{0}', space=vmem, size = 0x1000, scoped, tag = 'output window, operand 0']
    %27 = vsyncpa [#allocation6], 0
    %s28 = scalar_lea.sflag [#allocation6], 1
    %29 = vsyncpa %s28, 0
    %30 = vsyncpa [#allocation9], 0
    %s31 = scalar_lea.sflag [#allocation9], 1
    %32 = vsyncpa %s31, 0
    %33 = vsyncpa [#allocation12], 0
    %s34 = scalar_lea.sflag [#allocation12], 1
    %35 = vsyncpa %s34, 0
    %36 = vsyncpa [#allocation15], 0
    %s37 = scalar_lea.sflag [#allocation15], 1
    %38 = vsyncpa %s37, 0
    %39 = vsyncpa [#allocation18], 0
    %s40 = scalar_lea.sflag [#allocation18], 1
    %41 = vsyncpa %s40, 0
    %42 = vsyncpa [#allocation21], 0
    %s43 = scalar_lea.sflag [#allocation21], 1
    %44 = vsyncpa %s43, 0
    %45 = vsyncpa [#allocation24], 0
    %s46 = scalar_lea.sflag [#allocation24], 1
    %47 = vsyncpa %s46, 0
    %48 = vsyncpa [#allocation27], 0
    %s49 = scalar_lea.sflag [#allocation27], 1
    %50 = vsyncpa %s49, 0
    %51 = vsyncpa [#allocation7], 0
    %s52 = scalar_lea.sflag [#allocation7], 1
    %53 = vsyncpa %s52, 0
    loop: start=0, step=1, limit=6
    $region2: #{tpu_custom_call.1} parent=1 // loop_pre_header
      _
    $region3: #{tpu_custom_call.1} parent=1 // loop_header
      %s55 = sphi 0, %s59
      %p56 = scmp.ge.s32.totalorder %s55, 6
      %s62 = sphi 0, %s74
      %s63 = sphi 0, %s70
      %s64 = sphi 0, %s62
      %s65 = sphi 0, %s63
      %s66 = sphi 0, %s64
      %s67 = sphi 0, %s65
      %s77 = sphi 0, %s79
      %s80 = sphi 0, %s77
      %s81 = sphi 0, %s80
      %s97 = sphi 0, %s81
      %s103 = sphi 0, %s105
      %s106 = sphi 0, %s103
      %s107 = sphi 0, %s106
      %s123 = sphi 0, %s107
      %s129 = sphi 0, %s131
      %s132 = sphi 0, %s129
      %s133 = sphi 0, %s132
      %s149 = sphi 0, %s133
      %s155 = sphi 0, %s157
      %s158 = sphi 0, %s155
      %s159 = sphi 0, %s158
      %s175 = sphi 0, %s159
      %s181 = sphi 0, %s183
      %s184 = sphi 0, %s181
      %s185 = sphi 0, %s184
      %s201 = sphi 0, %s185
      %s207 = sphi 0, %s209
      %s210 = sphi 0, %s207
      %s211 = sphi 0, %s210
      %s227 = sphi 0, %s211
      %s233 = sphi 0, %s235
      %s236 = sphi 0, %s233
      %s237 = sphi 0, %s236
      %s253 = sphi 0, %s237
      %s259 = sphi 0, %s261
      %s262 = sphi 0, %s259
      %s263 = sphi 0, %s262
      %s279 = sphi 0, %s263
      %s285 = sphi 0, %s287
      %s288 = sphi 0, %s285
      %s289 = sphi 0, %s288
      %s305 = sphi 0, %s289
      %s311 = sphi 0, %s313
      %s314 = sphi 0, %s311
      %s315 = sphi 0, %s314
      %s331 = sphi 0, %s315
      %s337 = sphi 0, %s339
      %s340 = sphi 0, %s337
      %s341 = sphi 0, %s340
      %s357 = sphi 0, %s341
      %s363 = sphi 0, %s365
      %s366 = sphi 0, %s363
      %s367 = sphi 0, %s366
      %s383 = sphi 0, %s367
      %s389 = sphi 0, %s391
      %s392 = sphi 0, %s389
      %s393 = sphi 0, %s392
      %s409 = sphi 0, %s393
      %s415 = sphi 0, %s417
      %s418 = sphi 0, %s415
      %s419 = sphi 0, %s418
      %s435 = sphi 0, %s419
      %s441 = sphi 0, %s443
      %s444 = sphi 0, %s441
      %s445 = sphi 0, %s444
      %s461 = sphi 0, %s445
      %s467 = sphi 0, %s469
      %s470 = sphi 0, %s467
      %s471 = sphi 0, %s470
      %s487 = sphi 0, %s471
      %s493 = sphi 0, %s495
      %s496 = sphi 0, %s493
      %s497 = sphi 0, %s496
      %s513 = sphi 0, %s497
      %s519 = sphi 0, %s521
      %s522 = sphi 0, %s519
      %s523 = sphi 0, %s522
      %s539 = sphi 0, %s523
      %s545 = sphi 0, %s547
      %s548 = sphi 0, %s545
      %s549 = sphi 0, %s548
      %s565 = sphi 0, %s549
      %s571 = sphi 0, %s573
      %s574 = sphi 0, %s571
      %s575 = sphi 0, %s574
      %s591 = sphi 0, %s575
      %s597 = sphi 0, %s599
      %s600 = sphi 0, %s597
      %s601 = sphi 0, %s600
      %s617 = sphi 0, %s601
      %s621 = sphi 0, %s621
      %s623 = sphi 0, %s621
      %s624 = sphi 0, %s623
      %s638 = sphi 0, %s624
      %s644 = sphi 0, %s646
      %s647 = sphi 0, %s644
      %s648 = sphi 0, %s647
      %s664 = sphi 0, %s648
    $region4: #{tpu_custom_call.1} parent=1 // loop_header_branch
      %58 = sbr.rel (%p56) target = $region8
    $region5: #{tpu_custom_call.1} parent=1 // loop_body
      %s60 = ssub.s32 %s55, 1
      %s61 = ssub.s32 %s55, 2
      %s68 = sadd.s32 1, %s63
      %p69 = scmp.ge.s32.totalorder %s68, 2
      %s70 = scalar_select %p69, 0, %s68
      %s71 = sadd.s32 1, %s62
      %s72 = scalar_select %p69, %s71, %s62
      %p73 = scmp.ge.s32.totalorder %s72, 2
      %s74 = scalar_select %p73, 0, %s72
      %s75 = ssub.s32 %s62, %s74
      %p76 = scmp.eq.s32.totalorder %s75, 0
      %s78 = sadd.s32 %s77, 1
      %s79 = scalar_select %p76, %s77, %s78
      %p82 = pneg %p76
      %p83 = scmp.eq.s32.totalorder %s55, 3
      %p84 = por %p82, %p83
      %p85 = scmp.ne.s32.totalorder %s77, %s80
      %p86 = scmp.eq.s32.totalorder %s55, 0
      %p87 = por %p85, %p86
      %p88 = scmp.ne.s32.totalorder %s77, %s80
      %p89 = scmp.eq.s32.totalorder %s60, 3
      %p90 = por %p88, %p89
      %p91 = scmp.ne.s32.totalorder %s80, %s81
      %p92 = scmp.eq.s32.totalorder %s60, 0
      %p93 = por %p91, %p92
      %p94 = scmp.ne.s32.totalorder %s80, %s81
      %p95 = scmp.eq.s32.totalorder %s61, 3
      %p96 = por %p94, %p95
      %p98 = scmp.ne.s32.totalorder %s81, %s97
      %p99 = scmp.eq.s32.totalorder %s61, 0
      %p100 = por %p98, %p99
      %s101 = ssub.s32 %s62, %s74
      %p102 = scmp.eq.s32.totalorder %s101, 0
      %s104 = sadd.s32 %s103, 1
      %s105 = scalar_select %p102, %s103, %s104
      %p108 = pneg %p102
      %p109 = scmp.eq.s32.totalorder %s55, 3
      %p110 = por %p108, %p109
      %p111 = scmp.ne.s32.totalorder %s103, %s106
      %p112 = scmp.eq.s32.totalorder %s55, 0
      %p113 = por %p111, %p112
      %p114 = scmp.ne.s32.totalorder %s103, %s106
      %p115 = scmp.eq.s32.totalorder %s60, 3
      %p116 = por %p114, %p115
      %p117 = scmp.ne.s32.totalorder %s106, %s107
      %p118 = scmp.eq.s32.totalorder %s60, 0
      %p119 = por %p117, %p118
      %p120 = scmp.ne.s32.totalorder %s106, %s107
      %p121 = scmp.eq.s32.totalorder %s61, 3
      %p122 = por %p120, %p121
      %p124 = scmp.ne.s32.totalorder %s107, %s123
      %p125 = scmp.eq.s32.totalorder %s61, 0
      %p126 = por %p124, %p125
      %s127 = ssub.s32 %s62, %s74
      %p128 = scmp.eq.s32.totalorder %s127, 0
      %s130 = sadd.s32 %s129, 1
      %s131 = scalar_select %p128, %s129, %s130
      %p134 = pneg %p128
      %p135 = scmp.eq.s32.totalorder %s55, 3
      %p136 = por %p134, %p135
      %p137 = scmp.ne.s32.totalorder %s129, %s132
      %p138 = scmp.eq.s32.totalorder %s55, 0
      %p139 = por %p137, %p138
      %p140 = scmp.ne.s32.totalorder %s129, %s132
      %p141 = scmp.eq.s32.totalorder %s60, 3
      %p142 = por %p140, %p141
      %p143 = scmp.ne.s32.totalorder %s132, %s133
      %p144 = scmp.eq.s32.totalorder %s60, 0
      %p145 = por %p143, %p144
      %p146 = scmp.ne.s32.totalorder %s132, %s133
      %p147 = scmp.eq.s32.totalorder %s61, 3
      %p148 = por %p146, %p147
      %p150 = scmp.ne.s32.totalorder %s133, %s149
      %p151 = scmp.eq.s32.totalorder %s61, 0
      %p152 = por %p150, %p151
      %s153 = ssub.s32 %s62, %s74
      %p154 = scmp.eq.s32.totalorder %s153, 0
      %s156 = sadd.s32 %s155, 1
      %s157 = scalar_select %p154, %s155, %s156
      %p160 = pneg %p154
      %p161 = scmp.eq.s32.totalorder %s55, 3
      %p162 = por %p160, %p161
      %p163 = scmp.ne.s32.totalorder %s155, %s158
      %p164 = scmp.eq.s32.totalorder %s55, 0
      %p165 = por %p163, %p164
      %p166 = scmp.ne.s32.totalorder %s155, %s158
      %p167 = scmp.eq.s32.totalorder %s60, 3
      %p168 = por %p166, %p167
      %p169 = scmp.ne.s32.totalorder %s158, %s159
      %p170 = scmp.eq.s32.totalorder %s60, 0
      %p171 = por %p169, %p170
      %p172 = scmp.ne.s32.totalorder %s158, %s159
      %p173 = scmp.eq.s32.totalorder %s61, 3
      %p174 = por %p172, %p173
      %p176 = scmp.ne.s32.totalorder %s159, %s175
      %p177 = scmp.eq.s32.totalorder %s61, 0
      %p178 = por %p176, %p177
      %s179 = ssub.s32 %s63, %s70
      %p180 = scmp.eq.s32.totalorder %s179, 0
      %s182 = sadd.s32 %s181, 1
      %s183 = scalar_select %p180, %s181, %s182
      %p186 = pneg %p180
      %p187 = scmp.eq.s32.totalorder %s55, 3
      %p188 = por %p186, %p187
      %p189 = scmp.ne.s32.totalorder %s181, %s184
      %p190 = scmp.eq.s32.totalorder %s55, 0
      %p191 = por %p189, %p190
      %p192 = scmp.ne.s32.totalorder %s181, %s184
      %p193 = scmp.eq.s32.totalorder %s60, 3
      %p194 = por %p192, %p193
      %p195 = scmp.ne.s32.totalorder %s184, %s185
      %p196 = scmp.eq.s32.totalorder %s60, 0
      %p197 = por %p195, %p196
      %p198 = scmp.ne.s32.totalorder %s184, %s185
      %p199 = scmp.eq.s32.totalorder %s61, 3
      %p200 = por %p198, %p199
      %p202 = scmp.ne.s32.totalorder %s185, %s201
      %p203 = scmp.eq.s32.totalorder %s61, 0
      %p204 = por %p202, %p203
      %s205 = ssub.s32 %s63, %s70
      %p206 = scmp.eq.s32.totalorder %s205, 0
      %s208 = sadd.s32 %s207, 1
      %s209 = scalar_select %p206, %s207, %s208
      %p212 = pneg %p206
      %p213 = scmp.eq.s32.totalorder %s55, 3
      %p214 = por %p212, %p213
      %p215 = scmp.ne.s32.totalorder %s207, %s210
      %p216 = scmp.eq.s32.totalorder %s55, 0
      %p217 = por %p215, %p216
      %p218 = scmp.ne.s32.totalorder %s207, %s210
      %p219 = scmp.eq.s32.totalorder %s60, 3
      %p220 = por %p218, %p219
      %p221 = scmp.ne.s32.totalorder %s210, %s211
      %p222 = scmp.eq.s32.totalorder %s60, 0
      %p223 = por %p221, %p222
      %p224 = scmp.ne.s32.totalorder %s210, %s211
      %p225 = scmp.eq.s32.totalorder %s61, 3
      %p226 = por %p224, %p225
      %p228 = scmp.ne.s32.totalorder %s211, %s227
      %p229 = scmp.eq.s32.totalorder %s61, 0
      %p230 = por %p228, %p229
      %s231 = ssub.s32 %s63, %s70
      %p232 = scmp.eq.s32.totalorder %s231, 0
      %s234 = sadd.s32 %s233, 1
      %s235 = scalar_select %p232, %s233, %s234
      %p238 = pneg %p232
      %p239 = scmp.eq.s32.totalorder %s55, 3
      %p240 = por %p238, %p239
      %p241 = scmp.ne.s32.totalorder %s233, %s236
      %p242 = scmp.eq.s32.totalorder %s55, 0
      %p243 = por %p241, %p242
      %p244 = scmp.ne.s32.totalorder %s233, %s236
      %p245 = scmp.eq.s32.totalorder %s60, 3
      %p246 = por %p244, %p245
      %p247 = scmp.ne.s32.totalorder %s236, %s237
      %p248 = scmp.eq.s32.totalorder %s60, 0
      %p249 = por %p247, %p248
      %p250 = scmp.ne.s32.totalorder %s236, %s237
      %p251 = scmp.eq.s32.totalorder %s61, 3
      %p252 = por %p250, %p251
      %p254 = scmp.ne.s32.totalorder %s237, %s253
      %p255 = scmp.eq.s32.totalorder %s61, 0
      %p256 = por %p254, %p255
      %s257 = ssub.s32 %s63, %s70
      %p258 = scmp.eq.s32.totalorder %s257, 0
      %s260 = sadd.s32 %s259, 1
      %s261 = scalar_select %p258, %s259, %s260
      %p264 = pneg %p258
      %p265 = scmp.eq.s32.totalorder %s55, 3
      %p266 = por %p264, %p265
      %p267 = scmp.ne.s32.totalorder %s259, %s262
      %p268 = scmp.eq.s32.totalorder %s55, 0
      %p269 = por %p267, %p268
      %p270 = scmp.ne.s32.totalorder %s259, %s262
      %p271 = scmp.eq.s32.totalorder %s60, 3
      %p272 = por %p270, %p271
      %p273 = scmp.ne.s32.totalorder %s262, %s263
      %p274 = scmp.eq.s32.totalorder %s60, 0
      %p275 = por %p273, %p274
      %p276 = scmp.ne.s32.totalorder %s262, %s263
      %p277 = scmp.eq.s32.totalorder %s61, 3
      %p278 = por %p276, %p277
      %p280 = scmp.ne.s32.totalorder %s263, %s279
      %p281 = scmp.eq.s32.totalorder %s61, 0
      %p282 = por %p280, %p281
      %s283 = ssub.s32 %s63, %s70
      %p284 = scmp.eq.s32.totalorder %s283, 0
      %s286 = sadd.s32 %s285, 1
      %s287 = scalar_select %p284, %s285, %s286
      %p290 = pneg %p284
      %p291 = scmp.eq.s32.totalorder %s55, 3
      %p292 = por %p290, %p291
      %p293 = scmp.ne.s32.totalorder %s285, %s288
      %p294 = scmp.eq.s32.totalorder %s55, 0
      %p295 = por %p293, %p294
      %p296 = scmp.ne.s32.totalorder %s285, %s288
      %p297 = scmp.eq.s32.totalorder %s60, 3
      %p298 = por %p296, %p297
      %p299 = scmp.ne.s32.totalorder %s288, %s289
      %p300 = scmp.eq.s32.totalorder %s60, 0
      %p301 = por %p299, %p300
      %p302 = scmp.ne.s32.totalorder %s288, %s289
      %p303 = scmp.eq.s32.totalorder %s61, 3
      %p304 = por %p302, %p303
      %p306 = scmp.ne.s32.totalorder %s289, %s305
      %p307 = scmp.eq.s32.totalorder %s61, 0
      %p308 = por %p306, %p307
      %s309 = ssub.s32 %s63, %s70
      %p310 = scmp.eq.s32.totalorder %s309, 0
      %s312 = sadd.s32 %s311, 1
      %s313 = scalar_select %p310, %s311, %s312
      %p316 = pneg %p310
      %p317 = scmp.eq.s32.totalorder %s55, 3
      %p318 = por %p316, %p317
      %p319 = scmp.ne.s32.totalorder %s311, %s314
      %p320 = scmp.eq.s32.totalorder %s55, 0
      %p321 = por %p319, %p320
      %p322 = scmp.ne.s32.totalorder %s311, %s314
      %p323 = scmp.eq.s32.totalorder %s60, 3
      %p324 = por %p322, %p323
      %p325 = scmp.ne.s32.totalorder %s314, %s315
      %p326 = scmp.eq.s32.totalorder %s60, 0
      %p327 = por %p325, %p326
      %p328 = scmp.ne.s32.totalorder %s314, %s315
      %p329 = scmp.eq.s32.totalorder %s61, 3
      %p330 = por %p328, %p329
      %p332 = scmp.ne.s32.totalorder %s315, %s331
      %p333 = scmp.eq.s32.totalorder %s61, 0
      %p334 = por %p332, %p333
      %s335 = ssub.s32 %s63, %s70
      %p336 = scmp.eq.s32.totalorder %s335, 0
      %s338 = sadd.s32 %s337, 1
      %s339 = scalar_select %p336, %s337, %s338
      %p342 = pneg %p336
      %p343 = scmp.eq.s32.totalorder %s55, 3
      %p344 = por %p342, %p343
      %p345 = scmp.ne.s32.totalorder %s337, %s340
      %p346 = scmp.eq.s32.totalorder %s55, 0
      %p347 = por %p345, %p346
      %p348 = scmp.ne.s32.totalorder %s337, %s340
      %p349 = scmp.eq.s32.totalorder %s60, 3
      %p350 = por %p348, %p349
      %p351 = scmp.ne.s32.totalorder %s340, %s341
      %p352 = scmp.eq.s32.totalorder %s60, 0
      %p353 = por %p351, %p352
      %p354 = scmp.ne.s32.totalorder %s340, %s341
      %p355 = scmp.eq.s32.totalorder %s61, 3
      %p356 = por %p354, %p355
      %p358 = scmp.ne.s32.totalorder %s341, %s357
      %p359 = scmp.eq.s32.totalorder %s61, 0
      %p360 = por %p358, %p359
      %s361 = ssub.s32 %s63, %s70
      %p362 = scmp.eq.s32.totalorder %s361, 0
      %s364 = sadd.s32 %s363, 1
      %s365 = scalar_select %p362, %s363, %s364
      %p368 = pneg %p362
      %p369 = scmp.eq.s32.totalorder %s55, 3
      %p370 = por %p368, %p369
      %p371 = scmp.ne.s32.totalorder %s363, %s366
      %p372 = scmp.eq.s32.totalorder %s55, 0
      %p373 = por %p371, %p372
      %p374 = scmp.ne.s32.totalorder %s363, %s366
      %p375 = scmp.eq.s32.totalorder %s60, 3
      %p376 = por %p374, %p375
      %p377 = scmp.ne.s32.totalorder %s366, %s367
      %p378 = scmp.eq.s32.totalorder %s60, 0
      %p379 = por %p377, %p378
      %p380 = scmp.ne.s32.totalorder %s366, %s367
      %p381 = scmp.eq.s32.totalorder %s61, 3
      %p382 = por %p380, %p381
      %p384 = scmp.ne.s32.totalorder %s367, %s383
      %p385 = scmp.eq.s32.totalorder %s61, 0
      %p386 = por %p384, %p385
      %s387 = ssub.s32 %s63, %s70
      %p388 = scmp.eq.s32.totalorder %s387, 0
      %s390 = sadd.s32 %s389, 1
      %s391 = scalar_select %p388, %s389, %s390
      %p394 = pneg %p388
      %p395 = scmp.eq.s32.totalorder %s55, 3
      %p396 = por %p394, %p395
      %p397 = scmp.ne.s32.totalorder %s389, %s392
      %p398 = scmp.eq.s32.totalorder %s55, 0
      %p399 = por %p397, %p398
      %p400 = scmp.ne.s32.totalorder %s389, %s392
      %p401 = scmp.eq.s32.totalorder %s60, 3
      %p402 = por %p400, %p401
      %p403 = scmp.ne.s32.totalorder %s392, %s393
      %p404 = scmp.eq.s32.totalorder %s60, 0
      %p405 = por %p403, %p404
      %p406 = scmp.ne.s32.totalorder %s392, %s393
      %p407 = scmp.eq.s32.totalorder %s61, 3
      %p408 = por %p406, %p407
      %p410 = scmp.ne.s32.totalorder %s393, %s409
      %p411 = scmp.eq.s32.totalorder %s61, 0
      %p412 = por %p410, %p411
      %s413 = ssub.s32 %s63, %s70
      %p414 = scmp.eq.s32.totalorder %s413, 0
      %s416 = sadd.s32 %s415, 1
      %s417 = scalar_select %p414, %s415, %s416
      %p420 = pneg %p414
      %p421 = scmp.eq.s32.totalorder %s55, 3
      %p422 = por %p420, %p421
      %p423 = scmp.ne.s32.totalorder %s415, %s418
      %p424 = scmp.eq.s32.totalorder %s55, 0
      %p425 = por %p423, %p424
      %p426 = scmp.ne.s32.totalorder %s415, %s418
      %p427 = scmp.eq.s32.totalorder %s60, 3
      %p428 = por %p426, %p427
      %p429 = scmp.ne.s32.totalorder %s418, %s419
      %p430 = scmp.eq.s32.totalorder %s60, 0
      %p431 = por %p429, %p430
      %p432 = scmp.ne.s32.totalorder %s418, %s419
      %p433 = scmp.eq.s32.totalorder %s61, 3
      %p434 = por %p432, %p433
      %p436 = scmp.ne.s32.totalorder %s419, %s435
      %p437 = scmp.eq.s32.totalorder %s61, 0
      %p438 = por %p436, %p437
      %s439 = ssub.s32 %s63, %s70
      %p440 = scmp.eq.s32.totalorder %s439, 0
      %s442 = sadd.s32 %s441, 1
      %s443 = scalar_select %p440, %s441, %s442
      %p446 = pneg %p440
      %p447 = scmp.eq.s32.totalorder %s55, 3
      %p448 = por %p446, %p447
      %p449 = scmp.ne.s32.totalorder %s441, %s444
      %p450 = scmp.eq.s32.totalorder %s55, 0
      %p451 = por %p449, %p450
      %p452 = scmp.ne.s32.totalorder %s441, %s444
      %p453 = scmp.eq.s32.totalorder %s60, 3
      %p454 = por %p452, %p453
      %p455 = scmp.ne.s32.totalorder %s444, %s445
      %p456 = scmp.eq.s32.totalorder %s60, 0
      %p457 = por %p455, %p456
      %p458 = scmp.ne.s32.totalorder %s444, %s445
      %p459 = scmp.eq.s32.totalorder %s61, 3
      %p460 = por %p458, %p459
      %p462 = scmp.ne.s32.totalorder %s445, %s461
      %p463 = scmp.eq.s32.totalorder %s61, 0
      %p464 = por %p462, %p463
      %s465 = ssub.s32 %s63, %s70
      %p466 = scmp.eq.s32.totalorder %s465, 0
      %s468 = sadd.s32 %s467, 1
      %s469 = scalar_select %p466, %s467, %s468
      %p472 = pneg %p466
      %p473 = scmp.eq.s32.totalorder %s55, 3
      %p474 = por %p472, %p473
      %p475 = scmp.ne.s32.totalorder %s467, %s470
      %p476 = scmp.eq.s32.totalorder %s55, 0
      %p477 = por %p475, %p476
      %p478 = scmp.ne.s32.totalorder %s467, %s470
      %p479 = scmp.eq.s32.totalorder %s60, 3
      %p480 = por %p478, %p479
      %p481 = scmp.ne.s32.totalorder %s470, %s471
      %p482 = scmp.eq.s32.totalorder %s60, 0
      %p483 = por %p481, %p482
      %p484 = scmp.ne.s32.totalorder %s470, %s471
      %p485 = scmp.eq.s32.totalorder %s61, 3
      %p486 = por %p484, %p485
      %p488 = scmp.ne.s32.totalorder %s471, %s487
      %p489 = scmp.eq.s32.totalorder %s61, 0
      %p490 = por %p488, %p489
      %s491 = ssub.s32 %s63, %s70
      %p492 = scmp.eq.s32.totalorder %s491, 0
      %s494 = sadd.s32 %s493, 1
      %s495 = scalar_select %p492, %s493, %s494
      %p498 = pneg %p492
      %p499 = scmp.eq.s32.totalorder %s55, 3
      %p500 = por %p498, %p499
      %p501 = scmp.ne.s32.totalorder %s493, %s496
      %p502 = scmp.eq.s32.totalorder %s55, 0
      %p503 = por %p501, %p502
      %p504 = scmp.ne.s32.totalorder %s493, %s496
      %p505 = scmp.eq.s32.totalorder %s60, 3
      %p506 = por %p504, %p505
      %p507 = scmp.ne.s32.totalorder %s496, %s497
      %p508 = scmp.eq.s32.totalorder %s60, 0
      %p509 = por %p507, %p508
      %p510 = scmp.ne.s32.totalorder %s496, %s497
      %p511 = scmp.eq.s32.totalorder %s61, 3
      %p512 = por %p510, %p511
      %p514 = scmp.ne.s32.totalorder %s497, %s513
      %p515 = scmp.eq.s32.totalorder %s61, 0
      %p516 = por %p514, %p515
      %s517 = ssub.s32 %s63, %s70
      %p518 = scmp.eq.s32.totalorder %s517, 0
      %s520 = sadd.s32 %s519, 1
      %s521 = scalar_select %p518, %s519, %s520
      %p524 = pneg %p518
      %p525 = scmp.eq.s32.totalorder %s55, 3
      %p526 = por %p524, %p525
      %p527 = scmp.ne.s32.totalorder %s519, %s522
      %p528 = scmp.eq.s32.totalorder %s55, 0
      %p529 = por %p527, %p528
      %p530 = scmp.ne.s32.totalorder %s519, %s522
      %p531 = scmp.eq.s32.totalorder %s60, 3
      %p532 = por %p530, %p531
      %p533 = scmp.ne.s32.totalorder %s522, %s523
      %p534 = scmp.eq.s32.totalorder %s60, 0
      %p535 = por %p533, %p534
      %p536 = scmp.ne.s32.totalorder %s522, %s523
      %p537 = scmp.eq.s32.totalorder %s61, 3
      %p538 = por %p536, %p537
      %p540 = scmp.ne.s32.totalorder %s523, %s539
      %p541 = scmp.eq.s32.totalorder %s61, 0
      %p542 = por %p540, %p541
      %s543 = ssub.s32 %s63, %s70
      %p544 = scmp.eq.s32.totalorder %s543, 0
      %s546 = sadd.s32 %s545, 1
      %s547 = scalar_select %p544, %s545, %s546
      %p550 = pneg %p544
      %p551 = scmp.eq.s32.totalorder %s55, 3
      %p552 = por %p550, %p551
      %p553 = scmp.ne.s32.totalorder %s545, %s548
      %p554 = scmp.eq.s32.totalorder %s55, 0
      %p555 = por %p553, %p554
      %p556 = scmp.ne.s32.totalorder %s545, %s548
      %p557 = scmp.eq.s32.totalorder %s60, 3
      %p558 = por %p556, %p557
      %p559 = scmp.ne.s32.totalorder %s548, %s549
      %p560 = scmp.eq.s32.totalorder %s60, 0
      %p561 = por %p559, %p560
      %p562 = scmp.ne.s32.totalorder %s548, %s549
      %p563 = scmp.eq.s32.totalorder %s61, 3
      %p564 = por %p562, %p563
      %p566 = scmp.ne.s32.totalorder %s549, %s565
      %p567 = scmp.eq.s32.totalorder %s61, 0
      %p568 = por %p566, %p567
      %s569 = ssub.s32 %s63, %s70
      %p570 = scmp.eq.s32.totalorder %s569, 0
      %s572 = sadd.s32 %s571, 1
      %s573 = scalar_select %p570, %s571, %s572
      %p576 = pneg %p570
      %p577 = scmp.eq.s32.totalorder %s55, 3
      %p578 = por %p576, %p577
      %p579 = scmp.ne.s32.totalorder %s571, %s574
      %p580 = scmp.eq.s32.totalorder %s55, 0
      %p581 = por %p579, %p580
      %p582 = scmp.ne.s32.totalorder %s571, %s574
      %p583 = scmp.eq.s32.totalorder %s60, 3
      %p584 = por %p582, %p583
      %p585 = scmp.ne.s32.totalorder %s574, %s575
      %p586 = scmp.eq.s32.totalorder %s60, 0
      %p587 = por %p585, %p586
      %p588 = scmp.ne.s32.totalorder %s574, %s575
      %p589 = scmp.eq.s32.totalorder %s61, 3
      %p590 = por %p588, %p589
      %p592 = scmp.ne.s32.totalorder %s575, %s591
      %p593 = scmp.eq.s32.totalorder %s61, 0
      %p594 = por %p592, %p593
      %s595 = ssub.s32 %s63, %s70
      %p596 = scmp.eq.s32.totalorder %s595, 0
      %s598 = sadd.s32 %s597, 1
      %s599 = scalar_select %p596, %s597, %s598
      %p602 = pneg %p596
      %p603 = scmp.eq.s32.totalorder %s55, 3
      %p604 = por %p602, %p603
      %p605 = scmp.ne.s32.totalorder %s597, %s600
      %p606 = scmp.eq.s32.totalorder %s55, 0
      %p607 = por %p605, %p606
      %p608 = scmp.ne.s32.totalorder %s597, %s600
      %p609 = scmp.eq.s32.totalorder %s60, 3
      %p610 = por %p608, %p609
      %p611 = scmp.ne.s32.totalorder %s600, %s601
      %p612 = scmp.eq.s32.totalorder %s60, 0
      %p613 = por %p611, %p612
      %p614 = scmp.ne.s32.totalorder %s600, %s601
      %p615 = scmp.eq.s32.totalorder %s61, 3
      %p616 = por %p614, %p615
      %p618 = scmp.ne.s32.totalorder %s601, %s617
      %p619 = scmp.eq.s32.totalorder %s61, 0
      %p620 = por %p618, %p619
      %s622 = sadd.s32 %s621, 1
      %p625 = scmp.eq.s32.totalorder %s55, 3
      %p626 = scmp.ne.s32.totalorder %s621, %s623
      %p627 = scmp.eq.s32.totalorder %s55, 0
      %p628 = por %p626, %p627
      %p629 = scmp.ne.s32.totalorder %s621, %s623
      %p630 = scmp.eq.s32.totalorder %s60, 3
      %p631 = por %p629, %p630
      %p632 = scmp.ne.s32.totalorder %s623, %s624
      %p633 = scmp.eq.s32.totalorder %s60, 0
      %p634 = por %p632, %p633
      %p635 = scmp.ne.s32.totalorder %s623, %s624
      %p636 = scmp.eq.s32.totalorder %s61, 3
      %p637 = por %p635, %p636
      %p639 = scmp.ne.s32.totalorder %s624, %s638
      %p640 = scmp.eq.s32.totalorder %s61, 0
      %p641 = por %p639, %p640
      %s642 = ssub.s32 %s62, %s74
      %p643 = scmp.eq.s32.totalorder %s642, 0
      %s645 = sadd.s32 %s644, 1
      %s646 = scalar_select %p643, %s644, %s645
      %p649 = pneg %p643
      %p650 = scmp.eq.s32.totalorder %s55, 3
      %p651 = por %p649, %p650
      %p652 = scmp.ne.s32.totalorder %s644, %s647
      %p653 = scmp.eq.s32.totalorder %s55, 0
      %p654 = por %p652, %p653
      %p655 = scmp.ne.s32.totalorder %s644, %s647
      %p656 = scmp.eq.s32.totalorder %s60, 3
      %p657 = por %p655, %p656
      %p658 = scmp.ne.s32.totalorder %s647, %s648
      %p659 = scmp.eq.s32.totalorder %s60, 0
      %p660 = por %p658, %p659
      %p661 = scmp.ne.s32.totalorder %s647, %s648
      %p662 = scmp.eq.s32.totalorder %s61, 3
      %p663 = por %p661, %p662
      %p665 = scmp.ne.s32.totalorder %s648, %s664
      %p666 = scmp.eq.s32.totalorder %s61, 0
      %p667 = por %p665, %p666
      %p668 = scmp.le.s32.totalorder 1, %s55
      %p669 = scmp.lt.s32.totalorder %s55, 5
      %p670 = pnand %p668, %p669
      %p671 = pneg %p670
      // Predicated region
      $region9: #{tpu_custom_call.1} parent=5 // pred_check
        _
      $region10: #{tpu_custom_call.1} parent=5 // pred_check_branch
        %673 = sbr.rel (%p670) target = $region12
      $region11: #{tpu_custom_call.1} parent=5 // pred_region
        %s674 = ssub.s32 %s55, 1
        // Predicated region
        $region13: #{tpu_custom_call.1} parent=11 // pred_check
          %p675 = pneg %p634
        $region14: #{tpu_custom_call.1} parent=11 // pred_check_branch
          %677 = sbr.rel (%p675) target = $region16
        $region15: #{tpu_custom_call.1} parent=11 // pred_region
          _
        $region16: #{tpu_custom_call.1} parent=11 // pred_fallthru
          _
      $region12: #{tpu_custom_call.1} parent=5 // pred_fallthru
        _
      %p678 = scmp.lt.s32.totalorder %s55, 4
      // Predicated region
      $region17: #{tpu_custom_call.1} parent=5 // pred_check
        %p679 = pneg %p678
      $region18: #{tpu_custom_call.1} parent=5 // pred_check_branch
        %681 = sbr.rel (%p679) target = $region20
      $region19: #{tpu_custom_call.1} parent=5 // pred_region
        // Predicated region
        $region21: #{tpu_custom_call.1} parent=19 // pred_check
          %p682 = pneg %p87
        $region22: #{tpu_custom_call.1} parent=19 // pred_check_branch
          %684 = sbr.rel (%p682) target = $region24
        $region23: #{tpu_custom_call.1} parent=19 // pred_region
          %s685 = sand.u32 %s77, 1
          %s686 = scalar_lea.sflag [#allocation6], %s685
          %s687 = sand.u32 %s77, 1
          %s688 = smul.addr %s687, 8
          %s689 = scalar_lea.vmem [#allocation5], %s688
          %s691 = ssub.s32 128, 128
          %692 = vsyncadd %s686, %s691
          %s693 = smul.addr %s62, 128
          %s694 = scalar_lea.hbm %s0, %s693
          %s696 = sshll.u32 %s689, 4
          %s697 = int_to_ptr.vmem [resolvable:$true] %s696
          %699 = dma.hbm_to_vmem [thread:$0]  %s694, 128, %s697, %s686
        $region24: #{tpu_custom_call.1} parent=19 // pred_fallthru
          _
        // Predicated region
        $region25: #{tpu_custom_call.1} parent=19 // pred_check
          %p700 = pneg %p113
        $region26: #{tpu_custom_call.1} parent=19 // pred_check_branch
          %702 = sbr.rel (%p700) target = $region28
        $region27: #{tpu_custom_call.1} parent=19 // pred_region
          %s703 = sand.u32 %s55, 1
          %s704 = scalar_lea.sflag [#allocation9], %s703
          %s705 = sand.u32 %s103, 1
          %s706 = smul.addr %s705, 8
          %s707 = scalar_lea.vmem [#allocation8], %s706
          %s709 = ssub.s32 128, 128
          %710 = vsyncadd %s704, %s709
          %s711 = smul.addr %s62, 2
          %s712 = smul.addr %s711, 64
          %s713 = scalar_lea.hbm %s1, %s712
          %s714 = sshll.u32 %s707, 4
          %s715 = int_to_ptr.vmem [resolvable:$true] %s714
          %720 = dma.hbm_to_vmem [thread:$0]  %s713, 128, %s715, %s704, 64, 64, 4
        $region28: #{tpu_custom_call.1} parent=19 // pred_fallthru
          _
        // Predicated region
        $region29: #{tpu_custom_call.1} parent=19 // pred_check
          %p721 = pneg %p139
        $region30: #{tpu_custom_call.1} parent=19 // pred_check_branch
          %723 = sbr.rel (%p721) target = $region32
        $region31: #{tpu_custom_call.1} parent=19 // pred_region
          %s724 = sand.u32 %s55, 1
          %s725 = scalar_lea.sflag [#allocation9], %s724
          %s726 = sand.u32 %s129, 1
          %s727 = scalar_lea.vmem [#allocation10], %s726
          %s729 = ssub.s32 16, 16
          %730 = vsyncadd %s725, %s729
          %s731 = smul.addr %s62, 16
          %s732 = scalar_lea.hbm %s2, %s731
          %s734 = sshll.u32 %s727, 4
          %s735 = int_to_ptr.vmem [resolvable:$true] %s734
          %737 = dma.hbm_to_vmem [thread:$0]  %s732, 16, %s735, %s725
        $region32: #{tpu_custom_call.1} parent=19 // pred_fallthru
          _
        // Predicated region
        $region33: #{tpu_custom_call.1} parent=19 // pred_check
          %p738 = pneg %p165
        $region34: #{tpu_custom_call.1} parent=19 // pred_check_branch
          %740 = sbr.rel (%p738) target = $region36
        $region35: #{tpu_custom_call.1} parent=19 // pred_region
          %s741 = sand.u32 %s55, 1
          %s742 = scalar_lea.sflag [#allocation12], %s741
          %s743 = sand.u32 %s155, 1
          %s744 = scalar_lea.vmem [#allocation11], %s743
          %s746 = ssub.s32 16, 16
          %747 = vsyncadd %s742, %s746
          %s748 = smul.addr %s62, 16
          %s749 = scalar_lea.hbm %s3, %s748
          %s751 = sshll.u32 %s744, 4
          %s752 = int_to_ptr.vmem [resolvable:$true] %s751
          %754 = dma.hbm_to_vmem [thread:$0]  %s749, 16, %s752, %s742
        $region36: #{tpu_custom_call.1} parent=19 // pred_fallthru
          _
        // Predicated region
        $region37: #{tpu_custom_call.1} parent=19 // pred_check
          %p755 = pneg %p191
        $region38: #{tpu_custom_call.1} parent=19 // pred_check_branch
          %757 = sbr.rel (%p755) target = $region40
        $region39: #{tpu_custom_call.1} parent=19 // pred_region
          %s758 = sand.u32 %s55, 1
          %s759 = scalar_lea.sflag [#allocation12], %s758
          %s760 = sand.u32 %s181, 1
          %s761 = smul.addr %s760, 2
          %s762 = scalar_lea.vmem [#allocation13], %s761
          %s764 = ssub.s32 32, 32
          %765 = vsyncadd %s759, %s764
          %s766 = smul.addr %s63, 32
          %s767 = scalar_lea.hbm %s4, %s766
          %s769 = sshll.u32 %s762, 4
          %s770 = int_to_ptr.vmem [resolvable:$true] %s769
          %772 = dma.hbm_to_vmem [thread:$0]  %s767, 32, %s770, %s759
        $region40: #{tpu_custom_call.1} parent=19 // pred_fallthru
          _
        // Predicated region
        $region41: #{tpu_custom_call.1} parent=19 // pred_check
          %p773 = pneg %p217
        $region42: #{tpu_custom_call.1} parent=19 // pred_check_branch
          %775 = sbr.rel (%p773) target = $region44
        $region43: #{tpu_custom_call.1} parent=19 // pred_region
          %p776 = scmp.lt.s32.totalorder %s63, 1
          %s777 = scalar_select %p776, %s63, 1
          %s778 = smul.addr %s777, 4
          %s779 = smul.addr %s778, 4
          %s780 = scalar_lea.vmem %s5, %s779
        $region44: #{tpu_custom_call.1} parent=19 // pred_fallthru
          _
        // Predicated region
        $region45: #{tpu_custom_call.1} parent=19 // pred_check
          %p781 = pneg %p243
        $region46: #{tpu_custom_call.1} parent=19 // pred_check_branch
          %783 = sbr.rel (%p781) target = $region48
        $region47: #{tpu_custom_call.1} parent=19 // pred_region
          %s784 = sand.u32 %s55, 1
          %s785 = scalar_lea.sflag [#allocation15], %s784
          %s786 = sand.u32 %s233, 1
          %s787 = scalar_lea.vmem [#allocation14], %s786
          %s789 = ssub.s32 16, 16
          %790 = vsyncadd %s785, %s789
          %s791 = smul.addr %s63, 16
          %s792 = scalar_lea.hbm %s6, %s791
          %s794 = sshll.u32 %s787, 4
          %s795 = int_to_ptr.vmem [resolvable:$true] %s794
          %797 = dma.hbm_to_vmem [thread:$0]  %s792, 16, %s795, %s785
        $region48: #{tpu_custom_call.1} parent=19 // pred_fallthru
          _
        // Predicated region
        $region49: #{tpu_custom_call.1} parent=19 // pred_check
          %p798 = pneg %p269
        $region50: #{tpu_custom_call.1} parent=19 // pred_check_branch
          %800 = sbr.rel (%p798) target = $region52
        $region51: #{tpu_custom_call.1} parent=19 // pred_region
          %p801 = scmp.lt.s32.totalorder %s63, 1
          %s802 = scalar_select %p801, %s63, 1
          %s803 = smul.addr %s802, 4
          %s804 = smul.addr %s803, 4
          %s805 = scalar_lea.vmem %s7, %s804
        $region52: #{tpu_custom_call.1} parent=19 // pred_fallthru
          _
        // Predicated region
        $region53: #{tpu_custom_call.1} parent=19 // pred_check
          %p806 = pneg %p295
        $region54: #{tpu_custom_call.1} parent=19 // pred_check_branch
          %808 = sbr.rel (%p806) target = $region56
        $region55: #{tpu_custom_call.1} parent=19 // pred_region
          %s809 = sand.u32 %s55, 1
          %s810 = scalar_lea.sflag [#allocation15], %s809
          %s811 = sand.u32 %s285, 1
          %s812 = scalar_lea.vmem [#allocation16], %s811
          %s814 = ssub.s32 16, 16
          %815 = vsyncadd %s810, %s814
          %s816 = smul.addr %s63, 16
          %s817 = scalar_lea.hbm %s8, %s816
          %s819 = sshll.u32 %s812, 4
          %s820 = int_to_ptr.vmem [resolvable:$true] %s819
          %822 = dma.hbm_to_vmem [thread:$0]  %s817, 16, %s820, %s810
        $region56: #{tpu_custom_call.1} parent=19 // pred_fallthru
          _
        // Predicated region
        $region57: #{tpu_custom_call.1} parent=19 // pred_check
          %p823 = pneg %p321
        $region58: #{tpu_custom_call.1} parent=19 // pred_check_branch
          %825 = sbr.rel (%p823) target = $region60
        $region59: #{tpu_custom_call.1} parent=19 // pred_region
          %s826 = sand.u32 %s55, 1
          %s827 = scalar_lea.sflag [#allocation18], %s826
          %s828 = sand.u32 %s311, 1
          %s829 = smul.addr %s828, 2
          %s830 = scalar_lea.vmem [#allocation17], %s829
          %s832 = ssub.s32 32, 32
          %833 = vsyncadd %s827, %s832
          %s834 = smul.addr %s63, 32
          %s835 = scalar_lea.hbm %s9, %s834
          %s837 = sshll.u32 %s830, 4
          %s838 = int_to_ptr.vmem [resolvable:$true] %s837
          %840 = dma.hbm_to_vmem [thread:$0]  %s835, 32, %s838, %s827
        $region60: #{tpu_custom_call.1} parent=19 // pred_fallthru
          _
        // Predicated region
        $region61: #{tpu_custom_call.1} parent=19 // pred_check
          %p841 = pneg %p347
        $region62: #{tpu_custom_call.1} parent=19 // pred_check_branch
          %843 = sbr.rel (%p841) target = $region64
        $region63: #{tpu_custom_call.1} parent=19 // pred_region
          %p844 = scmp.lt.s32.totalorder %s63, 1
          %s845 = scalar_select %p844, %s63, 1
          %s846 = smul.addr %s845, 4
          %s847 = smul.addr %s846, 4
          %s848 = scalar_lea.vmem %s10, %s847
        $region64: #{tpu_custom_call.1} parent=19 // pred_fallthru
          _
        // Predicated region
        $region65: #{tpu_custom_call.1} parent=19 // pred_check
          %p849 = pneg %p373
        $region66: #{tpu_custom_call.1} parent=19 // pred_check_branch
          %851 = sbr.rel (%p849) target = $region68
        $region67: #{tpu_custom_call.1} parent=19 // pred_region
          %s852 = sand.u32 %s55, 1
          %s853 = scalar_lea.sflag [#allocation18], %s852
          %s854 = sand.u32 %s363, 1
          %s855 = scalar_lea.vmem [#allocation19], %s854
          %s857 = ssub.s32 16, 16
          %858 = vsyncadd %s853, %s857
          %s859 = smul.addr %s63, 16
          %s860 = scalar_lea.hbm %s11, %s859
          %s862 = sshll.u32 %s855, 4
          %s863 = int_to_ptr.vmem [resolvable:$true] %s862
          %865 = dma.hbm_to_vmem [thread:$0]  %s860, 16, %s863, %s853
        $region68: #{tpu_custom_call.1} parent=19 // pred_fallthru
          _
        // Predicated region
        $region69: #{tpu_custom_call.1} parent=19 // pred_check
          %p866 = pneg %p399
        $region70: #{tpu_custom_call.1} parent=19 // pred_check_branch
          %868 = sbr.rel (%p866) target = $region72
        $region71: #{tpu_custom_call.1} parent=19 // pred_region
          %p869 = scmp.lt.s32.totalorder %s63, 1
          %s870 = scalar_select %p869, %s63, 1
          %s871 = smul.addr %s870, 4
          %s872 = smul.addr %s871, 4
          %s873 = scalar_lea.vmem %s12, %s872
        $region72: #{tpu_custom_call.1} parent=19 // pred_fallthru
          _
        // Predicated region
        $region73: #{tpu_custom_call.1} parent=19 // pred_check
          %p874 = pneg %p425
        $region74: #{tpu_custom_call.1} parent=19 // pred_check_branch
          %876 = sbr.rel (%p874) target = $region76
        $region75: #{tpu_custom_call.1} parent=19 // pred_region
          %s877 = sand.u32 %s55, 1
          %s878 = scalar_lea.sflag [#allocation21], %s877
          %s879 = sand.u32 %s415, 1
          %s880 = scalar_lea.vmem [#allocation20], %s879
          %s882 = ssub.s32 16, 16
          %883 = vsyncadd %s878, %s882
          %s884 = smul.addr %s63, 16
          %s885 = scalar_lea.hbm %s13, %s884
          %s887 = sshll.u32 %s880, 4
          %s888 = int_to_ptr.vmem [resolvable:$true] %s887
          %890 = dma.hbm_to_vmem [thread:$0]  %s885, 16, %s888, %s878
        $region76: #{tpu_custom_call.1} parent=19 // pred_fallthru
          _
        // Predicated region
        $region77: #{tpu_custom_call.1} parent=19 // pred_check
          %p891 = pneg %p451
        $region78: #{tpu_custom_call.1} parent=19 // pred_check_branch
          %893 = sbr.rel (%p891) target = $region80
        $region79: #{tpu_custom_call.1} parent=19 // pred_region
          %s894 = sand.u32 %s55, 1
          %s895 = scalar_lea.sflag [#allocation21], %s894
          %s896 = sand.u32 %s441, 1
          %s897 = smul.addr %s896, 16
          %s898 = scalar_lea.vmem [#allocation22], %s897
          %s900 = ssub.s32 256, 256
          %901 = vsyncadd %s895, %s900
          %s902 = smul.addr %s63, 4
          %s903 = smul.addr %s902, 64
          %s904 = scalar_lea.hbm %s14, %s903
          %s905 = sshll.u32 %s898, 4
          %s906 = int_to_ptr.vmem [resolvable:$true] %s905
          %911 = dma.hbm_to_vmem [thread:$0]  %s904, 256, %s906, %s895, 64, 64, 4
        $region80: #{tpu_custom_call.1} parent=19 // pred_fallthru
          _
        // Predicated region
        $region81: #{tpu_custom_call.1} parent=19 // pred_check
          %p912 = pneg %p477
        $region82: #{tpu_custom_call.1} parent=19 // pred_check_branch
          %914 = sbr.rel (%p912) target = $region84
        $region83: #{tpu_custom_call.1} parent=19 // pred_region
          %s915 = sand.u32 %s55, 1
          %s916 = scalar_lea.sflag [#allocation24], %s915
          %s917 = sand.u32 %s467, 1
          %s918 = scalar_lea.vmem [#allocation23], %s917
          %s920 = ssub.s32 16, 16
          %921 = vsyncadd %s916, %s920
          %s922 = smul.addr %s63, 16
          %s923 = scalar_lea.hbm %s15, %s922
          %s925 = sshll.u32 %s918, 4
          %s926 = int_to_ptr.vmem [resolvable:$true] %s925
          %928 = dma.hbm_to_vmem [thread:$0]  %s923, 16, %s926, %s916
        $region84: #{tpu_custom_call.1} parent=19 // pred_fallthru
          _
        // Predicated region
        $region85: #{tpu_custom_call.1} parent=19 // pred_check
          %p929 = pneg %p503
        $region86: #{tpu_custom_call.1} parent=19 // pred_check_branch
          %931 = sbr.rel (%p929) target = $region88
        $region87: #{tpu_custom_call.1} parent=19 // pred_region
          %s932 = sand.u32 %s55, 1
          %s933 = scalar_lea.sflag [#allocation24], %s932
          %s934 = sand.u32 %s493, 1
          %s935 = smul.addr %s934, 2
          %s936 = scalar_lea.vmem [#allocation25], %s935
          %s938 = ssub.s32 32, 32
          %939 = vsyncadd %s933, %s938
          %s940 = smul.addr %s63, 32
          %s941 = scalar_lea.hbm %s16, %s940
          %s943 = sshll.u32 %s936, 4
          %s944 = int_to_ptr.vmem [resolvable:$true] %s943
          %946 = dma.hbm_to_vmem [thread:$0]  %s941, 32, %s944, %s933
        $region88: #{tpu_custom_call.1} parent=19 // pred_fallthru
          _
        // Predicated region
        $region89: #{tpu_custom_call.1} parent=19 // pred_check
          %p947 = pneg %p529
        $region90: #{tpu_custom_call.1} parent=19 // pred_check_branch
          %949 = sbr.rel (%p947) target = $region92
        $region91: #{tpu_custom_call.1} parent=19 // pred_region
          %s950 = sand.u32 %s519, 1
          %s951 = scalar_lea.sflag [#allocation27], %s950
          %s952 = sand.u32 %s519, 1
          %s953 = smul.addr %s952, 16
          %s954 = scalar_lea.vmem [#allocation26], %s953
          %s956 = ssub.s32 256, 256
          %957 = vsyncadd %s951, %s956
          %s958 = smul.addr %s63, 4
          %s959 = smul.addr %s958, 64
          %s960 = scalar_lea.hbm %s17, %s959
          %s961 = sshll.u32 %s954, 4
          %s962 = int_to_ptr.vmem [resolvable:$true] %s961
          %967 = dma.hbm_to_vmem [thread:$0]  %s960, 256, %s962, %s951, 64, 64, 4
        $region92: #{tpu_custom_call.1} parent=19 // pred_fallthru
          _
        // Predicated region
        $region93: #{tpu_custom_call.1} parent=19 // pred_check
          %p968 = pneg %p555
        $region94: #{tpu_custom_call.1} parent=19 // pred_check_branch
          %970 = sbr.rel (%p968) target = $region96
        $region95: #{tpu_custom_call.1} parent=19 // pred_region
          %p971 = scmp.lt.s32.totalorder %s63, 1
          %s972 = scalar_select %p971, %s63, 1
          %s973 = scalar_lea.vmem %s18, %s972
        $region96: #{tpu_custom_call.1} parent=19 // pred_fallthru
          _
        // Predicated region
        $region97: #{tpu_custom_call.1} parent=19 // pred_check
          %p974 = pneg %p581
        $region98: #{tpu_custom_call.1} parent=19 // pred_check_branch
          %976 = sbr.rel (%p974) target = $region100
        $region99: #{tpu_custom_call.1} parent=19 // pred_region
          %p977 = scmp.lt.s32.totalorder %s63, 1
          %s978 = scalar_select %p977, %s63, 1
          %s979 = smul.addr %s978, 8
          %s980 = smul.addr %s979, 4
          %s981 = scalar_lea.vmem %s19, %s980
        $region100: #{tpu_custom_call.1} parent=19 // pred_fallthru
          _
        // Predicated region
        $region101: #{tpu_custom_call.1} parent=19 // pred_check
          %p982 = pneg %p607
        $region102: #{tpu_custom_call.1} parent=19 // pred_check_branch
          %984 = sbr.rel (%p982) target = $region104
        $region103: #{tpu_custom_call.1} parent=19 // pred_region
          %p985 = scmp.lt.s32.totalorder %s63, 1
          %s986 = scalar_select %p985, %s63, 1
          %s987 = scalar_lea.vmem %s20, %s986
        $region104: #{tpu_custom_call.1} parent=19 // pred_fallthru
          _
      $region20: #{tpu_custom_call.1} parent=5 // pred_fallthru
        _
      %p988 = scmp.le.s32.totalorder 1, %s55
      %p989 = scmp.lt.s32.totalorder %s55, 5
      %p990 = pnand %p988, %p989
      %p991 = pneg %p990
      // Predicated region
      $region105: #{tpu_custom_call.1} parent=5 // pred_check
        _
      $region106: #{tpu_custom_call.1} parent=5 // pred_check_branch
        %993 = sbr.rel (%p990) target = $region108
      $region107: #{tpu_custom_call.1} parent=5 // pred_region
        %s994 = ssub.s32 %s55, 1
        %s995 = sand.u32 %s80, 1
        %s996 = scalar_lea.sflag [#allocation6], %s995
        %s997 = sand.u32 %s80, 1
        %s998 = smul.addr %s997, 8
        %s999 = scalar_lea.vmem [#allocation5], %s998
        // Predicated region
        $region109: #{tpu_custom_call.1} parent=107 // pred_check
          %p1000 = pneg %p93
        $region110: #{tpu_custom_call.1} parent=107 // pred_check_branch
          %1002 = sbr.rel (%p1000) target = $region112
        $region111: #{tpu_custom_call.1} parent=107 // pred_region
          %1003 = dma.done %s996, 128
        $region112: #{tpu_custom_call.1} parent=107 // pred_fallthru
          _
        %s1004 = sand.u32 %s60, 1
        %s1005 = scalar_lea.sflag [#allocation9], %s1004
        %s1006 = sand.u32 %s106, 1
        %s1007 = smul.addr %s1006, 8
        %s1008 = scalar_lea.vmem [#allocation8], %s1007
        // Predicated region
        $region113: #{tpu_custom_call.1} parent=107 // pred_check
          %p1009 = pneg %p119
        $region114: #{tpu_custom_call.1} parent=107 // pred_check_branch
          %1011 = sbr.rel (%p1009) target = $region116
        $region115: #{tpu_custom_call.1} parent=107 // pred_region
          %1012 = dma.done %s1005, 128
        $region116: #{tpu_custom_call.1} parent=107 // pred_fallthru
          _
        %s1013 = sand.u32 %s60, 1
        %s1014 = scalar_lea.sflag [#allocation9], %s1013
        %s1015 = sand.u32 %s132, 1
        %s1016 = scalar_lea.vmem [#allocation10], %s1015
        // Predicated region
        $region117: #{tpu_custom_call.1} parent=107 // pred_check
          %p1017 = pneg %p145
        $region118: #{tpu_custom_call.1} parent=107 // pred_check_branch
          %1019 = sbr.rel (%p1017) target = $region120
        $region119: #{tpu_custom_call.1} parent=107 // pred_region
          %1020 = dma.done %s1014, 16
        $region120: #{tpu_custom_call.1} parent=107 // pred_fallthru
          _
        %s1021 = sand.u32 %s60, 1
        %s1022 = scalar_lea.sflag [#allocation12], %s1021
        %s1023 = sand.u32 %s158, 1
        %s1024 = scalar_lea.vmem [#allocation11], %s1023
        // Predicated region
        $region121: #{tpu_custom_call.1} parent=107 // pred_check
          %p1025 = pneg %p171
        $region122: #{tpu_custom_call.1} parent=107 // pred_check_branch
          %1027 = sbr.rel (%p1025) target = $region124
        $region123: #{tpu_custom_call.1} parent=107 // pred_region
          %1028 = dma.done %s1022, 16
        $region124: #{tpu_custom_call.1} parent=107 // pred_fallthru
          _
        %s1029 = sand.u32 %s60, 1
        %s1030 = scalar_lea.sflag [#allocation12], %s1029
        %s1031 = sand.u32 %s184, 1
        %s1032 = smul.addr %s1031, 2
        %s1033 = scalar_lea.vmem [#allocation13], %s1032
        // Predicated region
        $region125: #{tpu_custom_call.1} parent=107 // pred_check
          %p1034 = pneg %p197
        $region126: #{tpu_custom_call.1} parent=107 // pred_check_branch
          %1036 = sbr.rel (%p1034) target = $region128
        $region127: #{tpu_custom_call.1} parent=107 // pred_region
          %1037 = dma.done %s1030, 32
        $region128: #{tpu_custom_call.1} parent=107 // pred_fallthru
          _
        %s1038 = sand.u32 %s60, 1
        %s1039 = scalar_lea.sflag [#allocation15], %s1038
        %s1040 = sand.u32 %s236, 1
        %s1041 = scalar_lea.vmem [#allocation14], %s1040
        // Predicated region
        $region129: #{tpu_custom_call.1} parent=107 // pred_check
          %p1042 = pneg %p249
        $region130: #{tpu_custom_call.1} parent=107 // pred_check_branch
          %1044 = sbr.rel (%p1042) target = $region132
        $region131: #{tpu_custom_call.1} parent=107 // pred_region
          %1045 = dma.done %s1039, 16
        $region132: #{tpu_custom_call.1} parent=107 // pred_fallthru
          _
        %s1046 = sand.u32 %s60, 1
        %s1047 = scalar_lea.sflag [#allocation15], %s1046
        %s1048 = sand.u32 %s288, 1
        %s1049 = scalar_lea.vmem [#allocation16], %s1048
        // Predicated region
        $region133: #{tpu_custom_call.1} parent=107 // pred_check
          %p1050 = pneg %p301
        $region134: #{tpu_custom_call.1} parent=107 // pred_check_branch
          %1052 = sbr.rel (%p1050) target = $region136
        $region135: #{tpu_custom_call.1} parent=107 // pred_region
          %1053 = dma.done %s1047, 16
        $region136: #{tpu_custom_call.1} parent=107 // pred_fallthru
          _
        %s1054 = sand.u32 %s60, 1
        %s1055 = scalar_lea.sflag [#allocation18], %s1054
        %s1056 = sand.u32 %s314, 1
        %s1057 = smul.addr %s1056, 2
        %s1058 = scalar_lea.vmem [#allocation17], %s1057
        // Predicated region
        $region137: #{tpu_custom_call.1} parent=107 // pred_check
          %p1059 = pneg %p327
        $region138: #{tpu_custom_call.1} parent=107 // pred_check_branch
          %1061 = sbr.rel (%p1059) target = $region140
        $region139: #{tpu_custom_call.1} parent=107 // pred_region
          %1062 = dma.done %s1055, 32
        $region140: #{tpu_custom_call.1} parent=107 // pred_fallthru
          _
        %s1063 = sand.u32 %s60, 1
        %s1064 = scalar_lea.sflag [#allocation18], %s1063
        %s1065 = sand.u32 %s366, 1
        %s1066 = scalar_lea.vmem [#allocation19], %s1065
        // Predicated region
        $region141: #{tpu_custom_call.1} parent=107 // pred_check
          %p1067 = pneg %p379
        $region142: #{tpu_custom_call.1} parent=107 // pred_check_branch
          %1069 = sbr.rel (%p1067) target = $region144
        $region143: #{tpu_custom_call.1} parent=107 // pred_region
          %1070 = dma.done %s1064, 16
        $region144: #{tpu_custom_call.1} parent=107 // pred_fallthru
          _
        %s1071 = sand.u32 %s60, 1
        %s1072 = scalar_lea.sflag [#allocation21], %s1071
        %s1073 = sand.u32 %s418, 1
        %s1074 = scalar_lea.vmem [#allocation20], %s1073
        // Predicated region
        $region145: #{tpu_custom_call.1} parent=107 // pred_check
          %p1075 = pneg %p431
        $region146: #{tpu_custom_call.1} parent=107 // pred_check_branch
          %1077 = sbr.rel (%p1075) target = $region148
        $region147: #{tpu_custom_call.1} parent=107 // pred_region
          %1078 = dma.done %s1072, 16
        $region148: #{tpu_custom_call.1} parent=107 // pred_fallthru
          _
        %s1079 = sand.u32 %s60, 1
        %s1080 = scalar_lea.sflag [#allocation21], %s1079
        %s1081 = sand.u32 %s444, 1
        %s1082 = smul.addr %s1081, 16
        %s1083 = scalar_lea.vmem [#allocation22], %s1082
        // Predicated region
        $region149: #{tpu_custom_call.1} parent=107 // pred_check
          %p1084 = pneg %p457
        $region150: #{tpu_custom_call.1} parent=107 // pred_check_branch
          %1086 = sbr.rel (%p1084) target = $region152
        $region151: #{tpu_custom_call.1} parent=107 // pred_region
          %1087 = dma.done %s1080, 256
        $region152: #{tpu_custom_call.1} parent=107 // pred_fallthru
          _
        %s1088 = sand.u32 %s60, 1
        %s1089 = scalar_lea.sflag [#allocation24], %s1088
        %s1090 = sand.u32 %s470, 1
        %s1091 = scalar_lea.vmem [#allocation23], %s1090
        // Predicated region
        $region153: #{tpu_custom_call.1} parent=107 // pred_check
          %p1092 = pneg %p483
        $region154: #{tpu_custom_call.1} parent=107 // pred_check_branch
          %1094 = sbr.rel (%p1092) target = $region156
        $region155: #{tpu_custom_call.1} parent=107 // pred_region
          %1095 = dma.done %s1089, 16
        $region156: #{tpu_custom_call.1} parent=107 // pred_fallthru
          _
        %s1096 = sand.u32 %s60, 1
        %s1097 = scalar_lea.sflag [#allocation24], %s1096
        %s1098 = sand.u32 %s496, 1
        %s1099 = smul.addr %s1098, 2
        %s1100 = scalar_lea.vmem [#allocation25], %s1099
        // Predicated region
        $region157: #{tpu_custom_call.1} parent=107 // pred_check
          %p1101 = pneg %p509
        $region158: #{tpu_custom_call.1} parent=107 // pred_check_branch
          %1103 = sbr.rel (%p1101) target = $region160
        $region159: #{tpu_custom_call.1} parent=107 // pred_region
          %1104 = dma.done %s1097, 32
        $region160: #{tpu_custom_call.1} parent=107 // pred_fallthru
          _
        %s1105 = sand.u32 %s522, 1
        %s1106 = scalar_lea.sflag [#allocation27], %s1105
        %s1107 = sand.u32 %s522, 1
        %s1108 = smul.addr %s1107, 16
        %s1109 = scalar_lea.vmem [#allocation26], %s1108
        // Predicated region
        $region161: #{tpu_custom_call.1} parent=107 // pred_check
          %p1110 = pneg %p535
        $region162: #{tpu_custom_call.1} parent=107 // pred_check_branch
          %1112 = sbr.rel (%p1110) target = $region164
        $region163: #{tpu_custom_call.1} parent=107 // pred_region
          %1113 = dma.done %s1106, 256
        $region164: #{tpu_custom_call.1} parent=107 // pred_fallthru
          _
        %s1114 = sand.u32 %s80, 1
        %s1115 = scalar_lea.sflag [#allocation6], %s1114
        %s1116 = sand.u32 %s80, 1
        %s1117 = smul.addr %s1116, 8
        %s1118 = scalar_lea.vmem [#allocation5], %s1117
        %p1119 = pneg %p93
        %p1120 = pneg %p90
        %s1121 = sand.u32 %s60, 1
        %s1122 = scalar_lea.sflag [#allocation9], %s1121
        %s1123 = sand.u32 %s106, 1
        %s1124 = smul.addr %s1123, 8
        %s1125 = scalar_lea.vmem [#allocation8], %s1124
        %p1126 = pneg %p119
        %p1127 = pneg %p116
        %s1128 = sand.u32 %s60, 1
        %s1129 = scalar_lea.sflag [#allocation9], %s1128
        %s1130 = sand.u32 %s132, 1
        %s1131 = scalar_lea.vmem [#allocation10], %s1130
        %p1132 = pneg %p145
        %p1133 = pneg %p142
        %s1134 = sand.u32 %s60, 1
        %s1135 = scalar_lea.sflag [#allocation12], %s1134
        %s1136 = sand.u32 %s158, 1
        %s1137 = scalar_lea.vmem [#allocation11], %s1136
        %p1138 = pneg %p171
        %p1139 = pneg %p168
        %s1140 = sand.u32 %s60, 1
        %s1141 = scalar_lea.sflag [#allocation12], %s1140
        %s1142 = sand.u32 %s184, 1
        %s1143 = smul.addr %s1142, 2
        %s1144 = scalar_lea.vmem [#allocation13], %s1143
        %p1145 = pneg %p197
        %p1146 = pneg %p194
        %p1147 = scmp.lt.s32.totalorder %s65, 1
        %s1148 = scalar_select %p1147, %s65, 1
        %s1149 = smul.addr %s1148, 4
        %s1150 = smul.addr %s1149, 4
        %s1151 = scalar_lea.vmem %s5, %s1150
        %p1152 = pneg %p223
        %p1153 = pneg %p220
        %s1154 = sand.u32 %s60, 1
        %s1155 = scalar_lea.sflag [#allocation15], %s1154
        %s1156 = sand.u32 %s236, 1
        %s1157 = scalar_lea.vmem [#allocation14], %s1156
        %p1158 = pneg %p249
        %p1159 = pneg %p246
        %p1160 = scmp.lt.s32.totalorder %s65, 1
        %s1161 = scalar_select %p1160, %s65, 1
        %s1162 = smul.addr %s1161, 4
        %s1163 = smul.addr %s1162, 4
        %s1164 = scalar_lea.vmem %s7, %s1163
        %p1165 = pneg %p275
        %p1166 = pneg %p272
        %s1167 = sand.u32 %s60, 1
        %s1168 = scalar_lea.sflag [#allocation15], %s1167
        %s1169 = sand.u32 %s288, 1
        %s1170 = scalar_lea.vmem [#allocation16], %s1169
        %p1171 = pneg %p301
        %p1172 = pneg %p298
        %s1173 = sand.u32 %s60, 1
        %s1174 = scalar_lea.sflag [#allocation18], %s1173
        %s1175 = sand.u32 %s314, 1
        %s1176 = smul.addr %s1175, 2
        %s1177 = scalar_lea.vmem [#allocation17], %s1176
        %p1178 = pneg %p327
        %p1179 = pneg %p324
        %p1180 = scmp.lt.s32.totalorder %s65, 1
        %s1181 = scalar_select %p1180, %s65, 1
        %s1182 = smul.addr %s1181, 4
        %s1183 = smul.addr %s1182, 4
        %s1184 = scalar_lea.vmem %s10, %s1183
        %p1185 = pneg %p353
        %p1186 = pneg %p350
        %s1187 = sand.u32 %s60, 1
        %s1188 = scalar_lea.sflag [#allocation18], %s1187
        %s1189 = sand.u32 %s366, 1
        %s1190 = scalar_lea.vmem [#allocation19], %s1189
        %p1191 = pneg %p379
        %p1192 = pneg %p376
        %p1193 = scmp.lt.s32.totalorder %s65, 1
        %s1194 = scalar_select %p1193, %s65, 1
        %s1195 = smul.addr %s1194, 4
        %s1196 = smul.addr %s1195, 4
        %s1197 = scalar_lea.vmem %s12, %s1196
        %p1198 = pneg %p405
        %p1199 = pneg %p402
        %s1200 = sand.u32 %s60, 1
        %s1201 = scalar_lea.sflag [#allocation21], %s1200
        %s1202 = sand.u32 %s418, 1
        %s1203 = scalar_lea.vmem [#allocation20], %s1202
        %p1204 = pneg %p431
        %p1205 = pneg %p428
        %s1206 = sand.u32 %s60, 1
        %s1207 = scalar_lea.sflag [#allocation21], %s1206
        %s1208 = sand.u32 %s444, 1
        %s1209 = smul.addr %s1208, 16
        %s1210 = scalar_lea.vmem [#allocation22], %s1209
        %p1211 = pneg %p457
        %p1212 = pneg %p454
        %s1213 = sand.u32 %s60, 1
        %s1214 = scalar_lea.sflag [#allocation24], %s1213
        %s1215 = sand.u32 %s470, 1
        %s1216 = scalar_lea.vmem [#allocation23], %s1215
        %p1217 = pneg %p483
        %p1218 = pneg %p480
        %s1219 = sand.u32 %s60, 1
        %s1220 = scalar_lea.sflag [#allocation24], %s1219
        %s1221 = sand.u32 %s496, 1
        %s1222 = smul.addr %s1221, 2
        %s1223 = scalar_lea.vmem [#allocation25], %s1222
        %p1224 = pneg %p509
        %p1225 = pneg %p506
        %s1226 = sand.u32 %s522, 1
        %s1227 = scalar_lea.sflag [#allocation27], %s1226
        %s1228 = sand.u32 %s522, 1
        %s1229 = smul.addr %s1228, 16
        %s1230 = scalar_lea.vmem [#allocation26], %s1229
        %p1231 = pneg %p535
        %p1232 = pneg %p532
        %p1233 = scmp.lt.s32.totalorder %s65, 1
        %s1234 = scalar_select %p1233, %s65, 1
        %s1235 = scalar_lea.vmem %s18, %s1234
        %p1236 = pneg %p561
        %p1237 = pneg %p558
        %p1238 = scmp.lt.s32.totalorder %s65, 1
        %s1239 = scalar_select %p1238, %s65, 1
        %s1240 = smul.addr %s1239, 8
        %s1241 = smul.addr %s1240, 4
        %s1242 = scalar_lea.vmem %s19, %s1241
        %p1243 = pneg %p587
        %p1244 = pneg %p584
        %p1245 = scmp.lt.s32.totalorder %s65, 1
        %s1246 = scalar_select %p1245, %s65, 1
        %s1247 = scalar_lea.vmem %s20, %s1246
        %p1248 = pneg %p613
        %p1249 = pneg %p610
        %p1250 = pneg %p634
        %p1251 = pneg %p631
        %p1252 = pneg %p660
        %p1253 = pneg %p657
        %s1254 = sand.u32 %s647, 1
        %s1255 = scalar_lea.sflag [#allocation7], %s1254
        %s1256 = sand.u32 %s647, 1
        %s1257 = smul.addr %s1256, 4
        %s1258 = scalar_lea.vmem [#allocation28], %s1257
        %p1259 = scmp.lt.s32.totalorder %s65, 1
        %s1260 = scalar_select %p1259, %s65, 1
        %s1261 = smul.addr %s1260, 4
        %s1262 = smul.addr %s1261, 4
        %s1263 = scalar_lea.vmem %s5, %s1262
        %p1264 = scmp.lt.s32.totalorder %s65, 1
        %s1265 = scalar_select %p1264, %s65, 1
        %s1266 = smul.addr %s1265, 4
        %s1267 = smul.addr %s1266, 4
        %s1268 = scalar_lea.vmem %s7, %s1267
        %p1269 = scmp.lt.s32.totalorder %s65, 1
        %s1270 = scalar_select %p1269, %s65, 1
        %s1271 = smul.addr %s1270, 4
        %s1272 = smul.addr %s1271, 4
        %s1273 = scalar_lea.vmem %s10, %s1272
        %p1274 = scmp.lt.s32.totalorder %s65, 1
        %s1275 = scalar_select %p1274, %s65, 1
        %s1276 = smul.addr %s1275, 4
        %s1277 = smul.addr %s1276, 4
        %s1278 = scalar_lea.vmem %s12, %s1277
        %p1279 = scmp.lt.s32.totalorder %s65, 1
        %s1280 = scalar_select %p1279, %s65, 1
        %s1281 = scalar_lea.vmem %s18, %s1280
        %p1282 = scmp.lt.s32.totalorder %s65, 1
        %s1283 = scalar_select %p1282, %s65, 1
        %s1284 = smul.addr %s1283, 8
        %s1285 = smul.addr %s1284, 4
        %s1286 = scalar_lea.vmem %s19, %s1285
        %p1287 = scmp.lt.s32.totalorder %s65, 1
        %s1288 = scalar_select %p1287, %s65, 1
        %s1289 = scalar_lea.vmem %s20, %s1288
        %p1291 = scmp.eq.s32.totalorder %s65, 0
        // Predicated region
        $region165: #{tpu_custom_call.1} parent=107 // pred_check
          %p1292 = pneg %p1291
        $region166: #{tpu_custom_call.1} parent=107 // pred_check_branch
          %1294 = sbr.rel (%p1292) target = $region168
        $region167: #{tpu_custom_call.1} parent=107 // pred_region
          %v1295 = vld [vmem:[%s999] sm:$0xff]
          %vm1296 = vcmask 261120
          %1297 = vst.msk [vmem:[#allocation2] sm:$0xff] %vm1296, %v1295
          %v1298 = vlaneseq
          %v1299 = vshrl.u32 %v1298, 7
          %v1300 = vlaneseq
          %v1301 = vand.u32 %v1300, 127
          %vm1302 = vcmp.gt.s32.totalorder %v1301, %v1299
          %v1303 = vld [vmem:[%s1016] sm:$0x1]
          %vm1304 = vcmp.gt.f32.partialorder %v1303, 0.5
          %v1305 = vsel %vm1304, 1, 0
          %v1306 = vlaneseq
          %v1307 = vshrl.u32 %v1306, 7
          %v1308 = vsub.s32 0, %v1307
          %v1309 = vrot.slane %v1305, %v1308
          %vm1310 = vcmp.eq.s32.totalorder %v1309, 1
          %vm1311 = vmor %vm1302, %vm1310
          %v1312 = vsel %vm1311, -1e+18, 0.0
          %vm1313 = vcmask 64512
          %1314 = vst.msk [vmem:[#allocation3] sm:$0xff] %vm1313, %v1312
          %v1315 = vld [vmem:[%s1024] sm:$0x1]
          %vm1316 = vcmp.gt.f32.partialorder %v1315, 0.5
          %v1317 = vsel %vm1316, -1e+18, 0.0
          %vm1318 = vcmask 122880
          %1319 = vst.msk [vmem:[#allocation4] sm:$0x1] %vm1318, %v1317
        $region168: #{tpu_custom_call.1} parent=107 // pred_fallthru
          _
        %v1320 = vld [vmem:[#allocation2] sm:$0xff]
        %v1321 = vld [vmem:[%s1008] sm:$0xf]
        %v1322 = vld [vmem:[%s1008 + $0x4] sm:$0xf]
        %v1323 = vld [vmem:[%s1033] sm:$0x3]
        %vm1324 = vcmask 261120
        %v1325 = vsel %vm1324, %v1320, 0.0
        %1326 = vadd.xlane.f32.xlu0 %v1325
        %v1327 = vpop.xlane.xlu0 %1326
        %v1328 = vrcp.pop 32.0
        %v1329 = vmul.f32 %v1327, %v1328
        %v1330 = vsub.f32 %v1320, %v1329
        %v1331 = vmul.f32 %v1330, %v1330
        %v1332 = vsel %vm1324, %v1331, 0.0
        %1333 = vadd.xlane.f32.xlu0 %v1332
        %v1334 = vpop.xlane.xlu0 %1333
        %v1335 = vmul.f32 %v1334, %v1328
        %v1336 = vadd.f32 %v1335, 1e-06
        %v1337 = vrsqrt.pop %v1336
        %v1338 = vmul.f32 %v1330, %v1337
        %v1339 = vlaneseq
        %v1340 = vshrl.u32 %v1339, 7
        %v1341 = vsub.s32 0, %v1340
        %v1342 = vrot.slane %v1323, %v1341
        %v1343 = vmul.f32 %v1338, %v1342
        %v1344 = vlaneseq
        %v1345 = vshrl.u32 %v1344, 7
        %v1346 = vsub.s32 1, %v1345
        %v1347 = vrot.slane %v1323, %v1346
        %v1348 = vadd.f32 %v1343, %v1347
        %v1349 = vpack.c.bf16 %v1348, %v1348
        %v1350 = vld [vmem:[%s1263] sm:$0xf]
        %v1351 = vld [vmem:[%s1263 + $0x4] sm:$0xf]
        %v1352 = vld [vmem:[%s1263 + $0x8] sm:$0xf]
        %v1353 = vld [vmem:[%s1263 + $0xc] sm:$0xf]
        %v1354 = vld [vmem:[%s1041] sm:$0x1]
        %v1356 = vlaneseq
        %v1357 = vshrl.u32 %v1356, 7
        %v1358 = vsub.s32 0, %v1357
        %v1359 = vrot.slane %v1354, %v1358
        %v1365 = vunpack.c.l.b16 %v1350
        %v1366 = vunpack.c.l.b16 %v1351
        %v1367 = vunpack.c.l.b16 %v1352
        %v1368 = vunpack.c.l.b16 %v1353
        %v1369 = vpack.c.b16 %v1366, %v1365
        %v1370 = vpack.c.b16 %v1368, %v1367
        %v1374 = vsel %vm1324, %v1349, 0
        %1376 = vmatprep.subr.bf16.mxu0 0
        %1377 = vmatpush1.bf16.msra.mxu0 %v1369
        %1378 = vmatprep.subr.bf16.mxu0 0
        %1379 = vmatpush1.bf16.msra.mxu0 %v1370
        %1380 = vmatprep.subr.bf16.mxu0 0
        %1381 = vmatpush1.bf16.msra.mxu0 0
        %1382 = vmatprep.subr.bf16.mxu0 0
        %1383 = vmatpush1.bf16.msra.mxu0 0
        %1384 = vmatprep.subr.bf16.mxu0 0
        %1385 = vmatpush1.bf16.msra.mxu0 0
        %1386 = vmatprep.subr.bf16.mxu0 0
        %1387 = vmatpush1.bf16.msra.mxu0 0
        %1388 = vmatprep.subr.bf16.mxu0 0
        %1389 = vmatpush1.bf16.msra.mxu0 0
        %1390 = vmatprep.subr.bf16.mxu0 0
        %1391 = vmatpush1.bf16.msra.mxu0 0
        %1392 = vmatprep.subr.bf16.mxu0 0
        %1393 = vmatpush1.bf16.msra.mxu0 0
        %1394 = vmatprep.subr.bf16.mxu0 0
        %1395 = vmatpush1.bf16.msra.mxu0 0
        %1396 = vmatprep.subr.bf16.mxu0 0
        %1397 = vmatpush1.bf16.msra.mxu0 0
        %1398 = vmatprep.subr.bf16.mxu0 0
        %1399 = vmatpush1.bf16.msra.mxu0 0
        %1400 = vmatprep.subr.bf16.mxu0 0
        %1401 = vmatpush1.bf16.msra.mxu0 0
        %1402 = vmatprep.subr.bf16.mxu0 0
        %1403 = vmatpush1.bf16.msra.mxu0 0
        %1404 = vmatprep.subr.bf16.mxu0 0
        %1405 = vmatpush1.bf16.msra.mxu0 0
        %1406 = vmatprep.subr.bf16.mxu0 0
        %1407 = vmatpush1.bf16.msra.mxu0 0
        %1408 = vmatprep.mubr.bf16.mxu0 0
        %1409 = vmatmul.mubr.bf16.gmra.mrb[0].mxu0 %v1374
        %v1410 = vpop.f32.mrb[0].mxu0
        %v1411 = vadd.f32 %v1359, %v1410
        %v1412 = vpop.f32.mrb[0].mxu0
        %v1413 = vpop.f32.mrb[0].mxu0
        %v1414 = vpop.f32.mrb[0].mxu0
        %1415 = vdwg.mxu0
        %v1416 = vld [vmem:[#allocation3] sm:$0xff]
        %v1417 = vpack.c.bf16 %v1411, %v1411
        %1419 = vrot.lane.b32.xlu0 %v1417, 96
        %v1420 = vpop.permute.xlu0 %1419
        %vm1421 = vcmask 64512
        %v1423 = vsel %vm1421, %v1417, 0
        %v1426 = vsel %vm1421, %v1420, 0
        %1428 = vmatprep.subr.bf16.mxu0 0
        %1429 = vmatpush1.bf16.xpose.msra.mxu0 %v1426
        %1430 = vmatprep.subr.bf16.mxu0 0
        %1431 = vmatpush1.bf16.xpose.msra.mxu0 0
        %1432 = vmatprep.subr.bf16.mxu0 0
        %1433 = vmatpush1.bf16.xpose.msra.mxu0 0
        %1434 = vmatprep.subr.bf16.mxu0 0
        %1435 = vmatpush1.bf16.xpose.msra.mxu0 0
        %1436 = vmatprep.subr.bf16.mxu0 0
        %1437 = vmatpush1.bf16.xpose.msra.mxu0 0
        %1438 = vmatprep.subr.bf16.mxu0 0
        %1439 = vmatpush1.bf16.xpose.msra.mxu0 0
        %1440 = vmatprep.subr.bf16.mxu0 0
        %1441 = vmatpush1.bf16.xpose.msra.mxu0 0
        %1442 = vmatprep.subr.bf16.mxu0 0
        %1443 = vmatpush1.bf16.xpose.msra.mxu0 0
        %1444 = vmatprep.subr.bf16.mxu0 0
        %1445 = vmatpush1.bf16.xpose.msra.mxu0 0
        %1446 = vmatprep.subr.bf16.mxu0 0
        %1447 = vmatpush1.bf16.xpose.msra.mxu0 0
        %1448 = vmatprep.subr.bf16.mxu0 0
        %1449 = vmatpush1.bf16.xpose.msra.mxu0 0
        %1450 = vmatprep.subr.bf16.mxu0 0
        %1451 = vmatpush1.bf16.xpose.msra.mxu0 0
        %1452 = vmatprep.subr.bf16.mxu0 0
        %1453 = vmatpush1.bf16.xpose.msra.mxu0 0
        %1454 = vmatprep.subr.bf16.mxu0 0
        %1455 = vmatpush1.bf16.xpose.msra.mxu0 0
        %1456 = vmatprep.subr.bf16.mxu0 0
        %1457 = vmatpush1.bf16.xpose.msra.mxu0 0
        %1458 = vmatprep.subr.bf16.mxu0 0
        %1459 = vmatpush1.bf16.xpose.msra.mxu0 0
        %1460 = vmatprep.mubr.bf16.mxu0 0
        %1461 = vmatmul.mubr.bf16.gmra.mrb[0].mxu0 %v1423
        %v1462 = vpop.f32.mrb[0].mxu0
        %v1463 = vadd.f32 %v1416, %v1462
        %v1464 = vpop.f32.mrb[0].mxu0
        %v1465 = vpop.f32.mrb[0].mxu0
        %v1466 = vpop.f32.mrb[0].mxu0
        %1467 = vdwg.mxu0
        %v1468 = vsel %vm1421, %v1463, -inf
        %1469 = vmax.xlane.f32.xlu0 %v1468
        %v1470 = vpop.xlane.xlu0 %1469
        %v1471 = vsub.f32 %v1463, %v1470
        %v1472 = vmul.f32 %v1471, 1.442695
        %v1473 = vpow.pop %v1472
        %v1474 = vsel %vm1421, %v1473, 0.0
        %1475 = vadd.xlane.f32.xlu0 %v1474
        %v1476 = vpop.xlane.xlu0 %1475
        %v1477 = vrcp.pop %v1476
        %v1478 = vmul.f32 %v1473, %v1477
        %v1479 = vpack.c.bf16 %v1478, %v1478
        %1480 = vrot.lane.b32.xlu0 %v1417, 64
        %v1481 = vpop.permute.xlu0 %1480
        %v1483 = vsel %vm1421, %v1479, 0
        %vm1485 = vcmask 1043456
        %v1487 = vsel %vm1485, %v1481, 0
        %1489 = vmatprep.subr.bf16.mxu0 0
        %1490 = vmatpush1.bf16.msra.mxu0 %v1487
        %1491 = vmatprep.subr.bf16.mxu0 0
        %1492 = vmatpush1.bf16.msra.mxu0 0
        %1493 = vmatprep.subr.bf16.mxu0 0
        %1494 = vmatpush1.bf16.msra.mxu0 0
        %1495 = vmatprep.subr.bf16.mxu0 0
        %1496 = vmatpush1.bf16.msra.mxu0 0
        %1497 = vmatprep.subr.bf16.mxu0 0
        %1498 = vmatpush1.bf16.msra.mxu0 0
        %1499 = vmatprep.subr.bf16.mxu0 0
        %1500 = vmatpush1.bf16.msra.mxu0 0
        %1501 = vmatprep.subr.bf16.mxu0 0
        %1502 = vmatpush1.bf16.msra.mxu0 0
        %1503 = vmatprep.subr.bf16.mxu0 0
        %1504 = vmatpush1.bf16.msra.mxu0 0
        %1505 = vmatprep.subr.bf16.mxu0 0
        %1506 = vmatpush1.bf16.msra.mxu0 0
        %1507 = vmatprep.subr.bf16.mxu0 0
        %1508 = vmatpush1.bf16.msra.mxu0 0
        %1509 = vmatprep.subr.bf16.mxu0 0
        %1510 = vmatpush1.bf16.msra.mxu0 0
        %1511 = vmatprep.subr.bf16.mxu0 0
        %1512 = vmatpush1.bf16.msra.mxu0 0
        %1513 = vmatprep.subr.bf16.mxu0 0
        %1514 = vmatpush1.bf16.msra.mxu0 0
        %1515 = vmatprep.subr.bf16.mxu0 0
        %1516 = vmatpush1.bf16.msra.mxu0 0
        %1517 = vmatprep.subr.bf16.mxu0 0
        %1518 = vmatpush1.bf16.msra.mxu0 0
        %1519 = vmatprep.subr.bf16.mxu0 0
        %1520 = vmatpush1.bf16.msra.mxu0 0
        %1521 = vmatprep.mubr.bf16.mxu0 0
        %1522 = vmatmul.mubr.bf16.gmra.mrb[0].mxu0 %v1483
        %v1523 = vpop.f32.mrb[0].mxu0
        %v1524 = vadd.f32 0.0, %v1523
        %v1525 = vpop.f32.mrb[0].mxu0
        %v1526 = vpop.f32.mrb[0].mxu0
        %v1527 = vpop.f32.mrb[0].mxu0
        %1528 = vdwg.mxu0
        %1529 = vrot.lane.b32.xlu0 %v1417, 120
        %v1530 = vpop.permute.xlu0 %1529
        %1531 = vrot.lane.b32.xlu0 %v1417, 88
        %v1532 = vpop.permute.xlu0 %1531
        %v1534 = vsel %vm1421, %v1530, 0
        %v1537 = vsel %vm1421, %v1532, 0
        %1539 = vmatprep.subr.bf16.mxu0 0
        %1540 = vmatpush1.bf16.xpose.msra.mxu0 %v1537
        %1541 = vmatprep.subr.bf16.mxu0 0
        %1542 = vmatpush1.bf16.xpose.msra.mxu0 0
        %1543 = vmatprep.subr.bf16.mxu0 0
        %1544 = vmatpush1.bf16.xpose.msra.mxu0 0
        %1545 = vmatprep.subr.bf16.mxu0 0
        %1546 = vmatpush1.bf16.xpose.msra.mxu0 0
        %1547 = vmatprep.subr.bf16.mxu0 0
        %1548 = vmatpush1.bf16.xpose.msra.mxu0 0
        %1549 = vmatprep.subr.bf16.mxu0 0
        %1550 = vmatpush1.bf16.xpose.msra.mxu0 0
        %1551 = vmatprep.subr.bf16.mxu0 0
        %1552 = vmatpush1.bf16.xpose.msra.mxu0 0
        %1553 = vmatprep.subr.bf16.mxu0 0
        %1554 = vmatpush1.bf16.xpose.msra.mxu0 0
        %1555 = vmatprep.subr.bf16.mxu0 0
        %1556 = vmatpush1.bf16.xpose.msra.mxu0 0
        %1557 = vmatprep.subr.bf16.mxu0 0
        %1558 = vmatpush1.bf16.xpose.msra.mxu0 0
        %1559 = vmatprep.subr.bf16.mxu0 0
        %1560 = vmatpush1.bf16.xpose.msra.mxu0 0
        %1561 = vmatprep.subr.bf16.mxu0 0
        %1562 = vmatpush1.bf16.xpose.msra.mxu0 0
        %1563 = vmatprep.subr.bf16.mxu0 0
        %1564 = vmatpush1.bf16.xpose.msra.mxu0 0
        %1565 = vmatprep.subr.bf16.mxu0 0
        %1566 = vmatpush1.bf16.xpose.msra.mxu0 0
        %1567 = vmatprep.subr.bf16.mxu0 0
        %1568 = vmatpush1.bf16.xpose.msra.mxu0 0
        %1569 = vmatprep.subr.bf16.mxu0 0
        %1570 = vmatpush1.bf16.xpose.msra.mxu0 0
        %1571 = vmatprep.mubr.bf16.mxu0 0
        %1572 = vmatmul.mubr.bf16.gmra.mrb[0].mxu0 %v1534
        %v1573 = vpop.f32.mrb[0].mxu0
        %v1574 = vadd.f32 %v1416, %v1573
        %v1575 = vpop.f32.mrb[0].mxu0
        %v1576 = vpop.f32.mrb[0].mxu0
        %v1577 = vpop.f32.mrb[0].mxu0
        %1578 = vdwg.mxu0
        %v1579 = vsel %vm1421, %v1574, -inf
        %1580 = vmax.xlane.f32.xlu0 %v1579
        %v1581 = vpop.xlane.xlu0 %1580
        %v1582 = vsub.f32 %v1574, %v1581
        %v1583 = vmul.f32 %v1582, 1.442695
        %v1584 = vpow.pop %v1583
        %v1585 = vsel %vm1421, %v1584, 0.0
        %1586 = vadd.xlane.f32.xlu0 %v1585
        %v1587 = vpop.xlane.xlu0 %1586
        %v1588 = vrcp.pop %v1587
        %v1589 = vmul.f32 %v1584, %v1588
        %v1590 = vpack.c.bf16 %v1589, %v1589
        %1591 = vrot.lane.b32.xlu0 %v1417, 56
        %v1592 = vpop.permute.xlu0 %1591
        %v1594 = vsel %vm1421, %v1590, 0
        %v1597 = vsel %vm1485, %v1592, 0
        %1599 = vmatprep.subr.bf16.mxu0 0
        %1600 = vmatpush1.bf16.msra.mxu0 %v1597
        %1601 = vmatprep.subr.bf16.mxu0 0
        %1602 = vmatpush1.bf16.msra.mxu0 0
        %1603 = vmatprep.subr.bf16.mxu0 0
        %1604 = vmatpush1.bf16.msra.mxu0 0
        %1605 = vmatprep.subr.bf16.mxu0 0
        %1606 = vmatpush1.bf16.msra.mxu0 0
        %1607 = vmatprep.subr.bf16.mxu0 0
        %1608 = vmatpush1.bf16.msra.mxu0 0
        %1609 = vmatprep.subr.bf16.mxu0 0
        %1610 = vmatpush1.bf16.msra.mxu0 0
        %1611 = vmatprep.subr.bf16.mxu0 0
        %1612 = vmatpush1.bf16.msra.mxu0 0
        %1613 = vmatprep.subr.bf16.mxu0 0
        %1614 = vmatpush1.bf16.msra.mxu0 0
        %1615 = vmatprep.subr.bf16.mxu0 0
        %1616 = vmatpush1.bf16.msra.mxu0 0
        %1617 = vmatprep.subr.bf16.mxu0 0
        %1618 = vmatpush1.bf16.msra.mxu0 0
        %1619 = vmatprep.subr.bf16.mxu0 0
        %1620 = vmatpush1.bf16.msra.mxu0 0
        %1621 = vmatprep.subr.bf16.mxu0 0
        %1622 = vmatpush1.bf16.msra.mxu0 0
        %1623 = vmatprep.subr.bf16.mxu0 0
        %1624 = vmatpush1.bf16.msra.mxu0 0
        %1625 = vmatprep.subr.bf16.mxu0 0
        %1626 = vmatpush1.bf16.msra.mxu0 0
        %1627 = vmatprep.subr.bf16.mxu0 0
        %1628 = vmatpush1.bf16.msra.mxu0 0
        %1629 = vmatprep.subr.bf16.mxu0 0
        %1630 = vmatpush1.bf16.msra.mxu0 0
        %1631 = vmatprep.mubr.bf16.mxu0 0
        %1632 = vmatmul.mubr.bf16.gmra.mrb[0].mxu0 %v1594
        %v1633 = vpop.f32.mrb[0].mxu0
        %v1634 = vadd.f32 0.0, %v1633
        %v1635 = vpop.f32.mrb[0].mxu0
        %v1636 = vpop.f32.mrb[0].mxu0
        %v1637 = vpop.f32.mrb[0].mxu0
        %1638 = vdwg.mxu0
        %1639 = vrot.lane.b32.xlu0 %v1417, 112
        %v1640 = vpop.permute.xlu0 %1639
        %1641 = vrot.lane.b32.xlu0 %v1417, 80
        %v1642 = vpop.permute.xlu0 %1641
        %v1644 = vsel %vm1421, %v1640, 0
        %v1647 = vsel %vm1421, %v1642, 0
        %1649 = vmatprep.subr.bf16.mxu0 0
        %1650 = vmatpush1.bf16.xpose.msra.mxu0 %v1647
        %1651 = vmatprep.subr.bf16.mxu0 0
        %1652 = vmatpush1.bf16.xpose.msra.mxu0 0
        %1653 = vmatprep.subr.bf16.mxu0 0
        %1654 = vmatpush1.bf16.xpose.msra.mxu0 0
        %1655 = vmatprep.subr.bf16.mxu0 0
        %1656 = vmatpush1.bf16.xpose.msra.mxu0 0
        %1657 = vmatprep.subr.bf16.mxu0 0
        %1658 = vmatpush1.bf16.xpose.msra.mxu0 0
        %1659 = vmatprep.subr.bf16.mxu0 0
        %1660 = vmatpush1.bf16.xpose.msra.mxu0 0
        %1661 = vmatprep.subr.bf16.mxu0 0
        %1662 = vmatpush1.bf16.xpose.msra.mxu0 0
        %1663 = vmatprep.subr.bf16.mxu0 0
        %1664 = vmatpush1.bf16.xpose.msra.mxu0 0
        %1665 = vmatprep.subr.bf16.mxu0 0
        %1666 = vmatpush1.bf16.xpose.msra.mxu0 0
        %1667 = vmatprep.subr.bf16.mxu0 0
        %1668 = vmatpush1.bf16.xpose.msra.mxu0 0
        %1669 = vmatprep.subr.bf16.mxu0 0
        %1670 = vmatpush1.bf16.xpose.msra.mxu0 0
        %1671 = vmatprep.subr.bf16.mxu0 0
        %1672 = vmatpush1.bf16.xpose.msra.mxu0 0
        %1673 = vmatprep.subr.bf16.mxu0 0
        %1674 = vmatpush1.bf16.xpose.msra.mxu0 0
        %1675 = vmatprep.subr.bf16.mxu0 0
        %1676 = vmatpush1.bf16.xpose.msra.mxu0 0
        %1677 = vmatprep.subr.bf16.mxu0 0
        %1678 = vmatpush1.bf16.xpose.msra.mxu0 0
        %1679 = vmatprep.subr.bf16.mxu0 0
        %1680 = vmatpush1.bf16.xpose.msra.mxu0 0
        %1681 = vmatprep.mubr.bf16.mxu0 0
        %1682 = vmatmul.mubr.bf16.gmra.mrb[0].mxu0 %v1644
        %v1683 = vpop.f32.mrb[0].mxu0
        %v1684 = vadd.f32 %v1416, %v1683
        %v1685 = vpop.f32.mrb[0].mxu0
        %v1686 = vpop.f32.mrb[0].mxu0
        %v1687 = vpop.f32.mrb[0].mxu0
        %1688 = vdwg.mxu0
        %v1689 = vsel %vm1421, %v1684, -inf
        %1690 = vmax.xlane.f32.xlu0 %v1689
        %v1691 = vpop.xlane.xlu0 %1690
        %v1692 = vsub.f32 %v1684, %v1691
        %v1693 = vmul.f32 %v1692, 1.442695
        %v1694 = vpow.pop %v1693
        %v1695 = vsel %vm1421, %v1694, 0.0
        %1696 = vadd.xlane.f32.xlu0 %v1695
        %v1697 = vpop.xlane.xlu0 %1696
        %v1698 = vrcp.pop %v1697
        %v1699 = vmul.f32 %v1694, %v1698
        %v1700 = vpack.c.bf16 %v1699, %v1699
        %1701 = vrot.lane.b32.xlu0 %v1417, 48
        %v1702 = vpop.permute.xlu0 %1701
        %v1704 = vsel %vm1421, %v1700, 0
        %v1707 = vsel %vm1485, %v1702, 0
        %1709 = vmatprep.subr.bf16.mxu0 0
        %1710 = vmatpush1.bf16.msra.mxu0 %v1707
        %1711 = vmatprep.subr.bf16.mxu0 0
        %1712 = vmatpush1.bf16.msra.mxu0 0
        %1713 = vmatprep.subr.bf16.mxu0 0
        %1714 = vmatpush1.bf16.msra.mxu0 0
        %1715 = vmatprep.subr.bf16.mxu0 0
        %1716 = vmatpush1.bf16.msra.mxu0 0
        %1717 = vmatprep.subr.bf16.mxu0 0
        %1718 = vmatpush1.bf16.msra.mxu0 0
        %1719 = vmatprep.subr.bf16.mxu0 0
        %1720 = vmatpush1.bf16.msra.mxu0 0
        %1721 = vmatprep.subr.bf16.mxu0 0
        %1722 = vmatpush1.bf16.msra.mxu0 0
        %1723 = vmatprep.subr.bf16.mxu0 0
        %1724 = vmatpush1.bf16.msra.mxu0 0
        %1725 = vmatprep.subr.bf16.mxu0 0
        %1726 = vmatpush1.bf16.msra.mxu0 0
        %1727 = vmatprep.subr.bf16.mxu0 0
        %1728 = vmatpush1.bf16.msra.mxu0 0
        %1729 = vmatprep.subr.bf16.mxu0 0
        %1730 = vmatpush1.bf16.msra.mxu0 0
        %1731 = vmatprep.subr.bf16.mxu0 0
        %1732 = vmatpush1.bf16.msra.mxu0 0
        %1733 = vmatprep.subr.bf16.mxu0 0
        %1734 = vmatpush1.bf16.msra.mxu0 0
        %1735 = vmatprep.subr.bf16.mxu0 0
        %1736 = vmatpush1.bf16.msra.mxu0 0
        %1737 = vmatprep.subr.bf16.mxu0 0
        %1738 = vmatpush1.bf16.msra.mxu0 0
        %1739 = vmatprep.subr.bf16.mxu0 0
        %1740 = vmatpush1.bf16.msra.mxu0 0
        %1741 = vmatprep.mubr.bf16.mxu0 0
        %1742 = vmatmul.mubr.bf16.gmra.mrb[0].mxu0 %v1704
        %v1743 = vpop.f32.mrb[0].mxu0
        %v1744 = vadd.f32 0.0, %v1743
        %v1745 = vpop.f32.mrb[0].mxu0
        %v1746 = vpop.f32.mrb[0].mxu0
        %v1747 = vpop.f32.mrb[0].mxu0
        %1748 = vdwg.mxu0
        %1749 = vrot.lane.b32.xlu0 %v1417, 104
        %v1750 = vpop.permute.xlu0 %1749
        %1751 = vrot.lane.b32.xlu0 %v1417, 72
        %v1752 = vpop.permute.xlu0 %1751
        %v1754 = vsel %vm1421, %v1750, 0
        %v1757 = vsel %vm1421, %v1752, 0
        %1759 = vmatprep.subr.bf16.mxu0 0
        %1760 = vmatpush1.bf16.xpose.msra.mxu0 %v1757
        %1761 = vmatprep.subr.bf16.mxu0 0
        %1762 = vmatpush1.bf16.xpose.msra.mxu0 0
        %1763 = vmatprep.subr.bf16.mxu0 0
        %1764 = vmatpush1.bf16.xpose.msra.mxu0 0
        %1765 = vmatprep.subr.bf16.mxu0 0
        %1766 = vmatpush1.bf16.xpose.msra.mxu0 0
        %1767 = vmatprep.subr.bf16.mxu0 0
        %1768 = vmatpush1.bf16.xpose.msra.mxu0 0
        %1769 = vmatprep.subr.bf16.mxu0 0
        %1770 = vmatpush1.bf16.xpose.msra.mxu0 0
        %1771 = vmatprep.subr.bf16.mxu0 0
        %1772 = vmatpush1.bf16.xpose.msra.mxu0 0
        %1773 = vmatprep.subr.bf16.mxu0 0
        %1774 = vmatpush1.bf16.xpose.msra.mxu0 0
        %1775 = vmatprep.subr.bf16.mxu0 0
        %1776 = vmatpush1.bf16.xpose.msra.mxu0 0
        %1777 = vmatprep.subr.bf16.mxu0 0
        %1778 = vmatpush1.bf16.xpose.msra.mxu0 0
        %1779 = vmatprep.subr.bf16.mxu0 0
        %1780 = vmatpush1.bf16.xpose.msra.mxu0 0
        %1781 = vmatprep.subr.bf16.mxu0 0
        %1782 = vmatpush1.bf16.xpose.msra.mxu0 0
        %1783 = vmatprep.subr.bf16.mxu0 0
        %1784 = vmatpush1.bf16.xpose.msra.mxu0 0
        %1785 = vmatprep.subr.bf16.mxu0 0
        %1786 = vmatpush1.bf16.xpose.msra.mxu0 0
        %1787 = vmatprep.subr.bf16.mxu0 0
        %1788 = vmatpush1.bf16.xpose.msra.mxu0 0
        %1789 = vmatprep.subr.bf16.mxu0 0
        %1790 = vmatpush1.bf16.xpose.msra.mxu0 0
        %1791 = vmatprep.mubr.bf16.mxu0 0
        %1792 = vmatmul.mubr.bf16.gmra.mrb[0].mxu0 %v1754
        %v1793 = vpop.f32.mrb[0].mxu0
        %v1794 = vadd.f32 %v1416, %v1793
        %v1795 = vpop.f32.mrb[0].mxu0
        %v1796 = vpop.f32.mrb[0].mxu0
        %v1797 = vpop.f32.mrb[0].mxu0
        %1798 = vdwg.mxu0
        %v1799 = vsel %vm1421, %v1794, -inf
        %1800 = vmax.xlane.f32.xlu0 %v1799
        %v1801 = vpop.xlane.xlu0 %1800
        %v1802 = vsub.f32 %v1794, %v1801
        %v1803 = vmul.f32 %v1802, 1.442695
        %v1804 = vpow.pop %v1803
        %v1805 = vsel %vm1421, %v1804, 0.0
        %1806 = vadd.xlane.f32.xlu0 %v1805
        %v1807 = vpop.xlane.xlu0 %1806
        %v1808 = vrcp.pop %v1807
        %v1809 = vmul.f32 %v1804, %v1808
        %v1810 = vpack.c.bf16 %v1809, %v1809
        %1811 = vrot.lane.b32.xlu0 %v1417, 40
        %v1812 = vpop.permute.xlu0 %1811
        %v1814 = vsel %vm1421, %v1810, 0
        %v1817 = vsel %vm1485, %v1812, 0
        %1819 = vmatprep.subr.bf16.mxu0 0
        %1820 = vmatpush1.bf16.msra.mxu0 %v1817
        %1821 = vmatprep.subr.bf16.mxu0 0
        %1822 = vmatpush1.bf16.msra.mxu0 0
        %1823 = vmatprep.subr.bf16.mxu0 0
        %1824 = vmatpush1.bf16.msra.mxu0 0
        %1825 = vmatprep.subr.bf16.mxu0 0
        %1826 = vmatpush1.bf16.msra.mxu0 0
        %1827 = vmatprep.subr.bf16.mxu0 0
        %1828 = vmatpush1.bf16.msra.mxu0 0
        %1829 = vmatprep.subr.bf16.mxu0 0
        %1830 = vmatpush1.bf16.msra.mxu0 0
        %1831 = vmatprep.subr.bf16.mxu0 0
        %1832 = vmatpush1.bf16.msra.mxu0 0
        %1833 = vmatprep.subr.bf16.mxu0 0
        %1834 = vmatpush1.bf16.msra.mxu0 0
        %1835 = vmatprep.subr.bf16.mxu0 0
        %1836 = vmatpush1.bf16.msra.mxu0 0
        %1837 = vmatprep.subr.bf16.mxu0 0
        %1838 = vmatpush1.bf16.msra.mxu0 0
        %1839 = vmatprep.subr.bf16.mxu0 0
        %1840 = vmatpush1.bf16.msra.mxu0 0
        %1841 = vmatprep.subr.bf16.mxu0 0
        %1842 = vmatpush1.bf16.msra.mxu0 0
        %1843 = vmatprep.subr.bf16.mxu0 0
        %1844 = vmatpush1.bf16.msra.mxu0 0
        %1845 = vmatprep.subr.bf16.mxu0 0
        %1846 = vmatpush1.bf16.msra.mxu0 0
        %1847 = vmatprep.subr.bf16.mxu0 0
        %1848 = vmatpush1.bf16.msra.mxu0 0
        %1849 = vmatprep.subr.bf16.mxu0 0
        %1850 = vmatpush1.bf16.msra.mxu0 0
        %1851 = vmatprep.mubr.bf16.mxu0 0
        %1852 = vmatmul.mubr.bf16.gmra.mrb[0].mxu0 %v1814
        %v1853 = vpop.f32.mrb[0].mxu0
        %v1854 = vadd.f32 0.0, %v1853
        %v1855 = vpop.f32.mrb[0].mxu0
        %v1856 = vpop.f32.mrb[0].mxu0
        %v1857 = vpop.f32.mrb[0].mxu0
        %1858 = vdwg.mxu0
        %1860 = vrot.lane.b32.xlu0 %v1634, 8
        %v1861 = vpop.permute.xlu0 %1860
        %1864 = vrot.lane.b32.xlu0 %v1744, 16
        %v1865 = vpop.permute.xlu0 %1864
        %1868 = vrot.lane.b32.xlu0 %v1854, 24
        %v1869 = vpop.permute.xlu0 %1868
        %v1871 = vsel %vm1421, %v1524, %v1861
        %vm1872 = vcmask 130048
        %v1873 = vsel %vm1872, %v1871, %v1865
        %vm1874 = vcmask 195584
        %v1875 = vsel %vm1874, %v1873, %v1869
        %v1876 = vpack.c.bf16 %v1875, %v1875
        %v1877 = vld [vmem:[%s1268] sm:$0xf]
        %v1878 = vld [vmem:[%s1268 + $0x4] sm:$0xf]
        %v1879 = vld [vmem:[%s1268 + $0x8] sm:$0xf]
        %v1880 = vld [vmem:[%s1268 + $0xc] sm:$0xf]
        %v1881 = vld [vmem:[%s1049] sm:$0x1]
        %v1883 = vlaneseq
        %v1884 = vshrl.u32 %v1883, 7
        %v1885 = vsub.s32 0, %v1884
        %v1886 = vrot.slane %v1881, %v1885
        %v1892 = vunpack.c.l.b16 %v1877
        %v1893 = vunpack.c.l.b16 %v1878
        %v1894 = vunpack.c.l.b16 %v1879
        %v1895 = vunpack.c.l.b16 %v1880
        %v1896 = vpack.c.b16 %v1893, %v1892
        %v1897 = vpack.c.b16 %v1895, %v1894
        %v1901 = vsel %vm1324, %v1876, 0
        %1903 = vmatprep.subr.bf16.mxu0 0
        %1904 = vmatpush1.bf16.msra.mxu0 %v1896
        %1905 = vmatprep.subr.bf16.mxu0 0
        %1906 = vmatpush1.bf16.msra.mxu0 %v1897
        %1907 = vmatprep.subr.bf16.mxu0 0
        %1908 = vmatpush1.bf16.msra.mxu0 0
        %1909 = vmatprep.subr.bf16.mxu0 0
        %1910 = vmatpush1.bf16.msra.mxu0 0
        %1911 = vmatprep.subr.bf16.mxu0 0
        %1912 = vmatpush1.bf16.msra.mxu0 0
        %1913 = vmatprep.subr.bf16.mxu0 0
        %1914 = vmatpush1.bf16.msra.mxu0 0
        %1915 = vmatprep.subr.bf16.mxu0 0
        %1916 = vmatpush1.bf16.msra.mxu0 0
        %1917 = vmatprep.subr.bf16.mxu0 0
        %1918 = vmatpush1.bf16.msra.mxu0 0
        %1919 = vmatprep.subr.bf16.mxu0 0
        %1920 = vmatpush1.bf16.msra.mxu0 0
        %1921 = vmatprep.subr.bf16.mxu0 0
        %1922 = vmatpush1.bf16.msra.mxu0 0
        %1923 = vmatprep.subr.bf16.mxu0 0
        %1924 = vmatpush1.bf16.msra.mxu0 0
        %1925 = vmatprep.subr.bf16.mxu0 0
        %1926 = vmatpush1.bf16.msra.mxu0 0
        %1927 = vmatprep.subr.bf16.mxu0 0
        %1928 = vmatpush1.bf16.msra.mxu0 0
        %1929 = vmatprep.subr.bf16.mxu0 0
        %1930 = vmatpush1.bf16.msra.mxu0 0
        %1931 = vmatprep.subr.bf16.mxu0 0
        %1932 = vmatpush1.bf16.msra.mxu0 0
        %1933 = vmatprep.subr.bf16.mxu0 0
        %1934 = vmatpush1.bf16.msra.mxu0 0
        %1935 = vmatprep.mubr.bf16.mxu0 0
        %1936 = vmatmul.mubr.bf16.gmra.mrb[0].mxu0 %v1901
        %v1937 = vpop.f32.mrb[0].mxu0
        %v1938 = vadd.f32 %v1886, %v1937
        %v1939 = vpop.f32.mrb[0].mxu0
        %v1940 = vpop.f32.mrb[0].mxu0
        %v1941 = vpop.f32.mrb[0].mxu0
        %1942 = vdwg.mxu0
        %v1943 = vadd.f32 %v1938, %v1320
        %v1944 = vld [vmem:[%s1058] sm:$0x3]
        %v1945 = vsel %vm1324, %v1943, 0.0
        %1946 = vadd.xlane.f32.xlu0 %v1945
        %v1947 = vpop.xlane.xlu0 %1946
        %v1948 = vmul.f32 %v1947, %v1328
        %v1949 = vsub.f32 %v1943, %v1948
        %v1950 = vmul.f32 %v1949, %v1949
        %v1951 = vsel %vm1324, %v1950, 0.0
        %1952 = vadd.xlane.f32.xlu0 %v1951
        %v1953 = vpop.xlane.xlu0 %1952
        %v1954 = vmul.f32 %v1953, %v1328
        %v1955 = vadd.f32 %v1954, 1e-06
        %v1956 = vrsqrt.pop %v1955
        %v1957 = vmul.f32 %v1949, %v1956
        %v1958 = vlaneseq
        %v1959 = vshrl.u32 %v1958, 7
        %v1960 = vsub.s32 0, %v1959
        %v1961 = vrot.slane %v1944, %v1960
        %v1962 = vmul.f32 %v1957, %v1961
        %v1963 = vlaneseq
        %v1964 = vshrl.u32 %v1963, 7
        %v1965 = vsub.s32 1, %v1964
        %v1966 = vrot.slane %v1944, %v1965
        %v1967 = vadd.f32 %v1962, %v1966
        %v1968 = vpack.c.bf16 %v1967, %v1967
        %v1969 = vld [vmem:[%s1273] sm:$0xf]
        %v1970 = vld [vmem:[%s1273 + $0x4] sm:$0xf]
        %v1971 = vld [vmem:[%s1273 + $0x8] sm:$0xf]
        %v1972 = vld [vmem:[%s1273 + $0xc] sm:$0xf]
        %v1973 = vld [vmem:[%s1066] sm:$0x1]
        %v1975 = vlaneseq
        %v1976 = vshrl.u32 %v1975, 7
        %v1977 = vsub.s32 0, %v1976
        %v1978 = vrot.slane %v1973, %v1977
        %v1984 = vunpack.c.l.b16 %v1969
        %v1985 = vunpack.c.l.b16 %v1970
        %v1986 = vunpack.c.l.b16 %v1971
        %v1987 = vunpack.c.l.b16 %v1972
        %v1988 = vpack.c.b16 %v1985, %v1984
        %v1989 = vpack.c.b16 %v1987, %v1986
        %v1993 = vsel %vm1324, %v1968, 0
        %1995 = vmatprep.subr.bf16.mxu0 0
        %1996 = vmatpush1.bf16.msra.mxu0 %v1988
        %1997 = vmatprep.subr.bf16.mxu0 0
        %1998 = vmatpush1.bf16.msra.mxu0 %v1989
        %1999 = vmatprep.subr.bf16.mxu0 0
        %2000 = vmatpush1.bf16.msra.mxu0 0
        %2001 = vmatprep.subr.bf16.mxu0 0
        %2002 = vmatpush1.bf16.msra.mxu0 0
        %2003 = vmatprep.subr.bf16.mxu0 0
        %2004 = vmatpush1.bf16.msra.mxu0 0
        %2005 = vmatprep.subr.bf16.mxu0 0
        %2006 = vmatpush1.bf16.msra.mxu0 0
        %2007 = vmatprep.subr.bf16.mxu0 0
        %2008 = vmatpush1.bf16.msra.mxu0 0
        %2009 = vmatprep.subr.bf16.mxu0 0
        %2010 = vmatpush1.bf16.msra.mxu0 0
        %2011 = vmatprep.subr.bf16.mxu0 0
        %2012 = vmatpush1.bf16.msra.mxu0 0
        %2013 = vmatprep.subr.bf16.mxu0 0
        %2014 = vmatpush1.bf16.msra.mxu0 0
        %2015 = vmatprep.subr.bf16.mxu0 0
        %2016 = vmatpush1.bf16.msra.mxu0 0
        %2017 = vmatprep.subr.bf16.mxu0 0
        %2018 = vmatpush1.bf16.msra.mxu0 0
        %2019 = vmatprep.subr.bf16.mxu0 0
        %2020 = vmatpush1.bf16.msra.mxu0 0
        %2021 = vmatprep.subr.bf16.mxu0 0
        %2022 = vmatpush1.bf16.msra.mxu0 0
        %2023 = vmatprep.subr.bf16.mxu0 0
        %2024 = vmatpush1.bf16.msra.mxu0 0
        %2025 = vmatprep.subr.bf16.mxu0 0
        %2026 = vmatpush1.bf16.msra.mxu0 0
        %2027 = vmatprep.mubr.bf16.mxu0 0
        %2028 = vmatmul.mubr.bf16.gmra.mrb[0].mxu0 %v1993
        %v2029 = vpop.f32.mrb[0].mxu0
        %v2030 = vadd.f32 %v1978, %v2029
        %v2031 = vpop.f32.mrb[0].mxu0
        %v2032 = vpop.f32.mrb[0].mxu0
        %v2033 = vpop.f32.mrb[0].mxu0
        %2034 = vdwg.mxu0
        %v2035 = vld [vmem:[%s1278] sm:$0xf]
        %v2036 = vld [vmem:[%s1278 + $0x4] sm:$0xf]
        %v2037 = vld [vmem:[%s1278 + $0x8] sm:$0xf]
        %v2038 = vld [vmem:[%s1278 + $0xc] sm:$0xf]
        %v2039 = vld [vmem:[%s1074] sm:$0x1]
        %v2041 = vlaneseq
        %v2042 = vshrl.u32 %v2041, 7
        %v2043 = vsub.s32 0, %v2042
        %v2044 = vrot.slane %v2039, %v2043
        %v2048 = vunpack.c.l.b16 %v1321
        %v2049 = vunpack.c.l.b16 %v1322
        %v2050 = vpack.c.b16 %v2049, %v2048
        %v2055 = vunpack.c.l.b16 %v2035
        %v2056 = vunpack.c.l.b16 %v2036
        %v2057 = vunpack.c.l.b16 %v2037
        %v2058 = vunpack.c.l.b16 %v2038
        %v2059 = vpack.c.b16 %v2056, %v2055
        %v2060 = vpack.c.b16 %v2058, %v2057
        %v2064 = vsel %vm1324, %v2050, 0
        %2066 = vmatprep.subr.bf16.mxu0 0
        %2067 = vmatpush1.bf16.msra.mxu0 %v2059
        %2068 = vmatprep.subr.bf16.mxu0 0
        %2069 = vmatpush1.bf16.msra.mxu0 %v2060
        %2070 = vmatprep.subr.bf16.mxu0 0
        %2071 = vmatpush1.bf16.msra.mxu0 0
        %2072 = vmatprep.subr.bf16.mxu0 0
        %2073 = vmatpush1.bf16.msra.mxu0 0
        %2074 = vmatprep.subr.bf16.mxu0 0
        %2075 = vmatpush1.bf16.msra.mxu0 0
        %2076 = vmatprep.subr.bf16.mxu0 0
        %2077 = vmatpush1.bf16.msra.mxu0 0
        %2078 = vmatprep.subr.bf16.mxu0 0
        %2079 = vmatpush1.bf16.msra.mxu0 0
        %2080 = vmatprep.subr.bf16.mxu0 0
        %2081 = vmatpush1.bf16.msra.mxu0 0
        %2082 = vmatprep.subr.bf16.mxu0 0
        %2083 = vmatpush1.bf16.msra.mxu0 0
        %2084 = vmatprep.subr.bf16.mxu0 0
        %2085 = vmatpush1.bf16.msra.mxu0 0
        %2086 = vmatprep.subr.bf16.mxu0 0
        %2087 = vmatpush1.bf16.msra.mxu0 0
        %2088 = vmatprep.subr.bf16.mxu0 0
        %2089 = vmatpush1.bf16.msra.mxu0 0
        %2090 = vmatprep.subr.bf16.mxu0 0
        %2091 = vmatpush1.bf16.msra.mxu0 0
        %2092 = vmatprep.subr.bf16.mxu0 0
        %2093 = vmatpush1.bf16.msra.mxu0 0
        %2094 = vmatprep.subr.bf16.mxu0 0
        %2095 = vmatpush1.bf16.msra.mxu0 0
        %2096 = vmatprep.subr.bf16.mxu0 0
        %2097 = vmatpush1.bf16.msra.mxu0 0
        %2098 = vmatprep.mubr.bf16.mxu0 0
        %2099 = vmatmul.mubr.bf16.gmra.mrb[0].mxu0 %v2064
        %v2100 = vpop.f32.mrb[0].mxu0
        %v2101 = vadd.f32 %v2044, %v2100
        %v2102 = vpop.f32.mrb[0].mxu0
        %v2103 = vpop.f32.mrb[0].mxu0
        %v2104 = vadd.f32 %v2044, %v2103
        %v2105 = vpop.f32.mrb[0].mxu0
        %2106 = vdwg.mxu0
        %v2107 = vld [vmem:[#allocation4] sm:$0x1]
        %v2108 = vpack.c.bf16 %v2030, %v2030
        %v2109 = vpack.c.bf16 %v2104, %v2101
        %v2111 = vlaneseq
        %v2112 = vshrl.u32 %v2111, 7
        %v2113 = vsub.s32 0, %v2112
        %v2114 = vrot.slane %v2107, %v2113
        %v2117 = vsel %vm1421, %v2108, 0
        %v2120 = vsel %vm1421, %v2109, 0
        %2122 = vmatprep.subr.bf16.mxu0 0
        %2123 = vmatpush1.bf16.xpose.msra.mxu0 %v2120
        %2124 = vmatprep.subr.bf16.mxu0 0
        %2125 = vmatpush1.bf16.xpose.msra.mxu0 0
        %2126 = vmatprep.subr.bf16.mxu0 0
        %2127 = vmatpush1.bf16.xpose.msra.mxu0 0
        %2128 = vmatprep.subr.bf16.mxu0 0
        %2129 = vmatpush1.bf16.xpose.msra.mxu0 0
        %2130 = vmatprep.subr.bf16.mxu0 0
        %2131 = vmatpush1.bf16.xpose.msra.mxu0 0
        %2132 = vmatprep.subr.bf16.mxu0 0
        %2133 = vmatpush1.bf16.xpose.msra.mxu0 0
        %2134 = vmatprep.subr.bf16.mxu0 0
        %2135 = vmatpush1.bf16.xpose.msra.mxu0 0
        %2136 = vmatprep.subr.bf16.mxu0 0
        %2137 = vmatpush1.bf16.xpose.msra.mxu0 0
        %2138 = vmatprep.subr.bf16.mxu0 0
        %2139 = vmatpush1.bf16.xpose.msra.mxu0 0
        %2140 = vmatprep.subr.bf16.mxu0 0
        %2141 = vmatpush1.bf16.xpose.msra.mxu0 0
        %2142 = vmatprep.subr.bf16.mxu0 0
        %2143 = vmatpush1.bf16.xpose.msra.mxu0 0
        %2144 = vmatprep.subr.bf16.mxu0 0
        %2145 = vmatpush1.bf16.xpose.msra.mxu0 0
        %2146 = vmatprep.subr.bf16.mxu0 0
        %2147 = vmatpush1.bf16.xpose.msra.mxu0 0
        %2148 = vmatprep.subr.bf16.mxu0 0
        %2149 = vmatpush1.bf16.xpose.msra.mxu0 0
        %2150 = vmatprep.subr.bf16.mxu0 0
        %2151 = vmatpush1.bf16.xpose.msra.mxu0 0
        %2152 = vmatprep.subr.bf16.mxu0 0
        %2153 = vmatpush1.bf16.xpose.msra.mxu0 0
        %2154 = vmatprep.mubr.bf16.mxu0 0
        %2155 = vmatmul.mubr.bf16.gmra.mrb[0].mxu0 %v2117
        %v2156 = vpop.f32.mrb[0].mxu0
        %v2157 = vadd.f32 %v2114, %v2156
        %v2158 = vpop.f32.mrb[0].mxu0
        %v2159 = vpop.f32.mrb[0].mxu0
        %v2160 = vpop.f32.mrb[0].mxu0
        %2161 = vdwg.mxu0
        %v2162 = vsel %vm1872, %v2157, -inf
        %2163 = vmax.xlane.f32.xlu0 %v2162
        %v2164 = vpop.xlane.xlu0 %2163
        %v2165 = vsub.f32 %v2157, %v2164
        %v2166 = vmul.f32 %v2165, 1.442695
        %v2167 = vpow.pop %v2166
        %v2168 = vsel %vm1872, %v2167, 0.0
        %2169 = vadd.xlane.f32.xlu0 %v2168
        %v2170 = vpop.xlane.xlu0 %2169
        %v2171 = vrcp.pop %v2170
        %v2172 = vmul.f32 %v2167, %v2171
        %v2173 = vpack.c.bf16 %v2172, %v2172
        %2175 = vrot.lane.b32.xlu0 %v2109, 96
        %v2176 = vpop.permute.xlu0 %2175
        %v2179 = vsel %vm1872, %v2173, 0
        %2181 = vmatprep.subr.bf16.mxu0 0
        %2182 = vmatpush1.bf16.msra.mxu0 %v2176
        %2183 = vmatprep.subr.bf16.mxu0 0
        %2184 = vmatpush1.bf16.msra.mxu0 0
        %2185 = vmatprep.subr.bf16.mxu0 0
        %2186 = vmatpush1.bf16.msra.mxu0 0
        %2187 = vmatprep.subr.bf16.mxu0 0
        %2188 = vmatpush1.bf16.msra.mxu0 0
        %2189 = vmatprep.subr.bf16.mxu0 0
        %2190 = vmatpush1.bf16.msra.mxu0 0
        %2191 = vmatprep.subr.bf16.mxu0 0
        %2192 = vmatpush1.bf16.msra.mxu0 0
        %2193 = vmatprep.subr.bf16.mxu0 0
        %2194 = vmatpush1.bf16.msra.mxu0 0
        %2195 = vmatprep.subr.bf16.mxu0 0
        %2196 = vmatpush1.bf16.msra.mxu0 0
        %2197 = vmatprep.subr.bf16.mxu0 0
        %2198 = vmatpush1.bf16.msra.mxu0 0
        %2199 = vmatprep.subr.bf16.mxu0 0
        %2200 = vmatpush1.bf16.msra.mxu0 0
        %2201 = vmatprep.subr.bf16.mxu0 0
        %2202 = vmatpush1.bf16.msra.mxu0 0
        %2203 = vmatprep.subr.bf16.mxu0 0
        %2204 = vmatpush1.bf16.msra.mxu0 0
        %2205 = vmatprep.subr.bf16.mxu0 0
        %2206 = vmatpush1.bf16.msra.mxu0 0
        %2207 = vmatprep.subr.bf16.mxu0 0
        %2208 = vmatpush1.bf16.msra.mxu0 0
        %2209 = vmatprep.subr.bf16.mxu0 0
        %2210 = vmatpush1.bf16.msra.mxu0 0
        %2211 = vmatprep.subr.bf16.mxu0 0
        %2212 = vmatpush1.bf16.msra.mxu0 0
        %2213 = vmatprep.mubr.bf16.mxu0 0
        %2214 = vmatmul.mubr.bf16.gmra.mrb[0].mxu0 %v2179
        %v2215 = vpop.f32.mrb[0].mxu0
        %v2216 = vadd.f32 0.0, %v2215
        %v2217 = vpop.f32.mrb[0].mxu0
        %v2218 = vpop.f32.mrb[0].mxu0
        %v2219 = vpop.f32.mrb[0].mxu0
        %2220 = vdwg.mxu0
        %2222 = vrot.lane.b32.xlu0 %v2108, 120
        %v2223 = vpop.permute.xlu0 %2222
        %2224 = vrot.lane.b32.xlu0 %v2109, 120
        %v2225 = vpop.permute.xlu0 %2224
        %v2227 = vsel %vm1421, %v2223, 0
        %v2230 = vsel %vm1421, %v2225, 0
        %2232 = vmatprep.subr.bf16.mxu0 0
        %2233 = vmatpush1.bf16.xpose.msra.mxu0 %v2230
        %2234 = vmatprep.subr.bf16.mxu0 0
        %2235 = vmatpush1.bf16.xpose.msra.mxu0 0
        %2236 = vmatprep.subr.bf16.mxu0 0
        %2237 = vmatpush1.bf16.xpose.msra.mxu0 0
        %2238 = vmatprep.subr.bf16.mxu0 0
        %2239 = vmatpush1.bf16.xpose.msra.mxu0 0
        %2240 = vmatprep.subr.bf16.mxu0 0
        %2241 = vmatpush1.bf16.xpose.msra.mxu0 0
        %2242 = vmatprep.subr.bf16.mxu0 0
        %2243 = vmatpush1.bf16.xpose.msra.mxu0 0
        %2244 = vmatprep.subr.bf16.mxu0 0
        %2245 = vmatpush1.bf16.xpose.msra.mxu0 0
        %2246 = vmatprep.subr.bf16.mxu0 0
        %2247 = vmatpush1.bf16.xpose.msra.mxu0 0
        %2248 = vmatprep.subr.bf16.mxu0 0
        %2249 = vmatpush1.bf16.xpose.msra.mxu0 0
        %2250 = vmatprep.subr.bf16.mxu0 0
        %2251 = vmatpush1.bf16.xpose.msra.mxu0 0
        %2252 = vmatprep.subr.bf16.mxu0 0
        %2253 = vmatpush1.bf16.xpose.msra.mxu0 0
        %2254 = vmatprep.subr.bf16.mxu0 0
        %2255 = vmatpush1.bf16.xpose.msra.mxu0 0
        %2256 = vmatprep.subr.bf16.mxu0 0
        %2257 = vmatpush1.bf16.xpose.msra.mxu0 0
        %2258 = vmatprep.subr.bf16.mxu0 0
        %2259 = vmatpush1.bf16.xpose.msra.mxu0 0
        %2260 = vmatprep.subr.bf16.mxu0 0
        %2261 = vmatpush1.bf16.xpose.msra.mxu0 0
        %2262 = vmatprep.subr.bf16.mxu0 0
        %2263 = vmatpush1.bf16.xpose.msra.mxu0 0
        %2264 = vmatprep.mubr.bf16.mxu0 0
        %2265 = vmatmul.mubr.bf16.gmra.mrb[0].mxu0 %v2227
        %v2266 = vpop.f32.mrb[0].mxu0
        %v2267 = vadd.f32 %v2114, %v2266
        %v2268 = vpop.f32.mrb[0].mxu0
        %v2269 = vpop.f32.mrb[0].mxu0
        %v2270 = vpop.f32.mrb[0].mxu0
        %2271 = vdwg.mxu0
        %v2272 = vsel %vm1872, %v2267, -inf
        %2273 = vmax.xlane.f32.xlu0 %v2272
        %v2274 = vpop.xlane.xlu0 %2273
        %v2275 = vsub.f32 %v2267, %v2274
        %v2276 = vmul.f32 %v2275, 1.442695
        %v2277 = vpow.pop %v2276
        %v2278 = vsel %vm1872, %v2277, 0.0
        %2279 = vadd.xlane.f32.xlu0 %v2278
        %v2280 = vpop.xlane.xlu0 %2279
        %v2281 = vrcp.pop %v2280
        %v2282 = vmul.f32 %v2277, %v2281
        %v2283 = vpack.c.bf16 %v2282, %v2282
        %2284 = vrot.lane.b32.xlu0 %v2109, 88
        %v2285 = vpop.permute.xlu0 %2284
        %v2288 = vsel %vm1872, %v2283, 0
        %2290 = vmatprep.subr.bf16.mxu0 0
        %2291 = vmatpush1.bf16.msra.mxu0 %v2285
        %2292 = vmatprep.subr.bf16.mxu0 0
        %2293 = vmatpush1.bf16.msra.mxu0 0
        %2294 = vmatprep.subr.bf16.mxu0 0
        %2295 = vmatpush1.bf16.msra.mxu0 0
        %2296 = vmatprep.subr.bf16.mxu0 0
        %2297 = vmatpush1.bf16.msra.mxu0 0
        %2298 = vmatprep.subr.bf16.mxu0 0
        %2299 = vmatpush1.bf16.msra.mxu0 0
        %2300 = vmatprep.subr.bf16.mxu0 0
        %2301 = vmatpush1.bf16.msra.mxu0 0
        %2302 = vmatprep.subr.bf16.mxu0 0
        %2303 = vmatpush1.bf16.msra.mxu0 0
        %2304 = vmatprep.subr.bf16.mxu0 0
        %2305 = vmatpush1.bf16.msra.mxu0 0
        %2306 = vmatprep.subr.bf16.mxu0 0
        %2307 = vmatpush1.bf16.msra.mxu0 0
        %2308 = vmatprep.subr.bf16.mxu0 0
        %2309 = vmatpush1.bf16.msra.mxu0 0
        %2310 = vmatprep.subr.bf16.mxu0 0
        %2311 = vmatpush1.bf16.msra.mxu0 0
        %2312 = vmatprep.subr.bf16.mxu0 0
        %2313 = vmatpush1.bf16.msra.mxu0 0
        %2314 = vmatprep.subr.bf16.mxu0 0
        %2315 = vmatpush1.bf16.msra.mxu0 0
        %2316 = vmatprep.subr.bf16.mxu0 0
        %2317 = vmatpush1.bf16.msra.mxu0 0
        %2318 = vmatprep.subr.bf16.mxu0 0
        %2319 = vmatpush1.bf16.msra.mxu0 0
        %2320 = vmatprep.subr.bf16.mxu0 0
        %2321 = vmatpush1.bf16.msra.mxu0 0
        %2322 = vmatprep.mubr.bf16.mxu0 0
        %2323 = vmatmul.mubr.bf16.gmra.mrb[0].mxu0 %v2288
        %v2324 = vpop.f32.mrb[0].mxu0
        %v2325 = vadd.f32 0.0, %v2324
        %v2326 = vpop.f32.mrb[0].mxu0
        %v2327 = vpop.f32.mrb[0].mxu0
        %v2328 = vpop.f32.mrb[0].mxu0
        %2329 = vdwg.mxu0
        %2330 = vrot.lane.b32.xlu0 %v2108, 112
        %v2331 = vpop.permute.xlu0 %2330
        %2332 = vrot.lane.b32.xlu0 %v2109, 112
        %v2333 = vpop.permute.xlu0 %2332
        %v2335 = vsel %vm1421, %v2331, 0
        %v2338 = vsel %vm1421, %v2333, 0
        %2340 = vmatprep.subr.bf16.mxu0 0
        %2341 = vmatpush1.bf16.xpose.msra.mxu0 %v2338
        %2342 = vmatprep.subr.bf16.mxu0 0
        %2343 = vmatpush1.bf16.xpose.msra.mxu0 0
        %2344 = vmatprep.subr.bf16.mxu0 0
        %2345 = vmatpush1.bf16.xpose.msra.mxu0 0
        %2346 = vmatprep.subr.bf16.mxu0 0
        %2347 = vmatpush1.bf16.xpose.msra.mxu0 0
        %2348 = vmatprep.subr.bf16.mxu0 0
        %2349 = vmatpush1.bf16.xpose.msra.mxu0 0
        %2350 = vmatprep.subr.bf16.mxu0 0
        %2351 = vmatpush1.bf16.xpose.msra.mxu0 0
        %2352 = vmatprep.subr.bf16.mxu0 0
        %2353 = vmatpush1.bf16.xpose.msra.mxu0 0
        %2354 = vmatprep.subr.bf16.mxu0 0
        %2355 = vmatpush1.bf16.xpose.msra.mxu0 0
        %2356 = vmatprep.subr.bf16.mxu0 0
        %2357 = vmatpush1.bf16.xpose.msra.mxu0 0
        %2358 = vmatprep.subr.bf16.mxu0 0
        %2359 = vmatpush1.bf16.xpose.msra.mxu0 0
        %2360 = vmatprep.subr.bf16.mxu0 0
        %2361 = vmatpush1.bf16.xpose.msra.mxu0 0
        %2362 = vmatprep.subr.bf16.mxu0 0
        %2363 = vmatpush1.bf16.xpose.msra.mxu0 0
        %2364 = vmatprep.subr.bf16.mxu0 0
        %2365 = vmatpush1.bf16.xpose.msra.mxu0 0
        %2366 = vmatprep.subr.bf16.mxu0 0
        %2367 = vmatpush1.bf16.xpose.msra.mxu0 0
        %2368 = vmatprep.subr.bf16.mxu0 0
        %2369 = vmatpush1.bf16.xpose.msra.mxu0 0
        %2370 = vmatprep.subr.bf16.mxu0 0
        %2371 = vmatpush1.bf16.xpose.msra.mxu0 0
        %2372 = vmatprep.mubr.bf16.mxu0 0
        %2373 = vmatmul.mubr.bf16.gmra.mrb[0].mxu0 %v2335
        %v2374 = vpop.f32.mrb[0].mxu0
        %v2375 = vadd.f32 %v2114, %v2374
        %v2376 = vpop.f32.mrb[0].mxu0
        %v2377 = vpop.f32.mrb[0].mxu0
        %v2378 = vpop.f32.mrb[0].mxu0
        %2379 = vdwg.mxu0
        %v2380 = vsel %vm1872, %v2375, -inf
        %2381 = vmax.xlane.f32.xlu0 %v2380
        %v2382 = vpop.xlane.xlu0 %2381
        %v2383 = vsub.f32 %v2375, %v2382
        %v2384 = vmul.f32 %v2383, 1.442695
        %v2385 = vpow.pop %v2384
        %v2386 = vsel %vm1872, %v2385, 0.0
        %2387 = vadd.xlane.f32.xlu0 %v2386
        %v2388 = vpop.xlane.xlu0 %2387
        %v2389 = vrcp.pop %v2388
        %v2390 = vmul.f32 %v2385, %v2389
        %v2391 = vpack.c.bf16 %v2390, %v2390
        %2392 = vrot.lane.b32.xlu0 %v2109, 80
        %v2393 = vpop.permute.xlu0 %2392
        %v2396 = vsel %vm1872, %v2391, 0
        %2398 = vmatprep.subr.bf16.mxu0 0
        %2399 = vmatpush1.bf16.msra.mxu0 %v2393
        %2400 = vmatprep.subr.bf16.mxu0 0
        %2401 = vmatpush1.bf16.msra.mxu0 0
        %2402 = vmatprep.subr.bf16.mxu0 0
        %2403 = vmatpush1.bf16.msra.mxu0 0
        %2404 = vmatprep.subr.bf16.mxu0 0
        %2405 = vmatpush1.bf16.msra.mxu0 0
        %2406 = vmatprep.subr.bf16.mxu0 0
        %2407 = vmatpush1.bf16.msra.mxu0 0
        %2408 = vmatprep.subr.bf16.mxu0 0
        %2409 = vmatpush1.bf16.msra.mxu0 0
        %2410 = vmatprep.subr.bf16.mxu0 0
        %2411 = vmatpush1.bf16.msra.mxu0 0
        %2412 = vmatprep.subr.bf16.mxu0 0
        %2413 = vmatpush1.bf16.msra.mxu0 0
        %2414 = vmatprep.subr.bf16.mxu0 0
        %2415 = vmatpush1.bf16.msra.mxu0 0
        %2416 = vmatprep.subr.bf16.mxu0 0
        %2417 = vmatpush1.bf16.msra.mxu0 0
        %2418 = vmatprep.subr.bf16.mxu0 0
        %2419 = vmatpush1.bf16.msra.mxu0 0
        %2420 = vmatprep.subr.bf16.mxu0 0
        %2421 = vmatpush1.bf16.msra.mxu0 0
        %2422 = vmatprep.subr.bf16.mxu0 0
        %2423 = vmatpush1.bf16.msra.mxu0 0
        %2424 = vmatprep.subr.bf16.mxu0 0
        %2425 = vmatpush1.bf16.msra.mxu0 0
        %2426 = vmatprep.subr.bf16.mxu0 0
        %2427 = vmatpush1.bf16.msra.mxu0 0
        %2428 = vmatprep.subr.bf16.mxu0 0
        %2429 = vmatpush1.bf16.msra.mxu0 0
        %2430 = vmatprep.mubr.bf16.mxu0 0
        %2431 = vmatmul.mubr.bf16.gmra.mrb[0].mxu0 %v2396
        %v2432 = vpop.f32.mrb[0].mxu0
        %v2433 = vadd.f32 0.0, %v2432
        %v2434 = vpop.f32.mrb[0].mxu0
        %v2435 = vpop.f32.mrb[0].mxu0
        %v2436 = vpop.f32.mrb[0].mxu0
        %2437 = vdwg.mxu0
        %2438 = vrot.lane.b32.xlu0 %v2108, 104
        %v2439 = vpop.permute.xlu0 %2438
        %2440 = vrot.lane.b32.xlu0 %v2109, 104
        %v2441 = vpop.permute.xlu0 %2440
        %v2443 = vsel %vm1421, %v2439, 0
        %v2446 = vsel %vm1421, %v2441, 0
        %2448 = vmatprep.subr.bf16.mxu0 0
        %2449 = vmatpush1.bf16.xpose.msra.mxu0 %v2446
        %2450 = vmatprep.subr.bf16.mxu0 0
        %2451 = vmatpush1.bf16.xpose.msra.mxu0 0
        %2452 = vmatprep.subr.bf16.mxu0 0
        %2453 = vmatpush1.bf16.xpose.msra.mxu0 0
        %2454 = vmatprep.subr.bf16.mxu0 0
        %2455 = vmatpush1.bf16.xpose.msra.mxu0 0
        %2456 = vmatprep.subr.bf16.mxu0 0
        %2457 = vmatpush1.bf16.xpose.msra.mxu0 0
        %2458 = vmatprep.subr.bf16.mxu0 0
        %2459 = vmatpush1.bf16.xpose.msra.mxu0 0
        %2460 = vmatprep.subr.bf16.mxu0 0
        %2461 = vmatpush1.bf16.xpose.msra.mxu0 0
        %2462 = vmatprep.subr.bf16.mxu0 0
        %2463 = vmatpush1.bf16.xpose.msra.mxu0 0
        %2464 = vmatprep.subr.bf16.mxu0 0
        %2465 = vmatpush1.bf16.xpose.msra.mxu0 0
        %2466 = vmatprep.subr.bf16.mxu0 0
        %2467 = vmatpush1.bf16.xpose.msra.mxu0 0
        %2468 = vmatprep.subr.bf16.mxu0 0
        %2469 = vmatpush1.bf16.xpose.msra.mxu0 0
        %2470 = vmatprep.subr.bf16.mxu0 0
        %2471 = vmatpush1.bf16.xpose.msra.mxu0 0
        %2472 = vmatprep.subr.bf16.mxu0 0
        %2473 = vmatpush1.bf16.xpose.msra.mxu0 0
        %2474 = vmatprep.subr.bf16.mxu0 0
        %2475 = vmatpush1.bf16.xpose.msra.mxu0 0
        %2476 = vmatprep.subr.bf16.mxu0 0
        %2477 = vmatpush1.bf16.xpose.msra.mxu0 0
        %2478 = vmatprep.subr.bf16.mxu0 0
        %2479 = vmatpush1.bf16.xpose.msra.mxu0 0
        %2480 = vmatprep.mubr.bf16.mxu0 0
        %2481 = vmatmul.mubr.bf16.gmra.mrb[0].mxu0 %v2443
        %v2482 = vpop.f32.mrb[0].mxu0
        %v2483 = vadd.f32 %v2114, %v2482
        %v2484 = vpop.f32.mrb[0].mxu0
        %v2485 = vpop.f32.mrb[0].mxu0
        %v2486 = vpop.f32.mrb[0].mxu0
        %2487 = vdwg.mxu0
        %v2488 = vsel %vm1872, %v2483, -inf
        %2489 = vmax.xlane.f32.xlu0 %v2488
        %v2490 = vpop.xlane.xlu0 %2489
        %v2491 = vsub.f32 %v2483, %v2490
        %v2492 = vmul.f32 %v2491, 1.442695
        %v2493 = vpow.pop %v2492
        %v2494 = vsel %vm1872, %v2493, 0.0
        %2495 = vadd.xlane.f32.xlu0 %v2494
        %v2496 = vpop.xlane.xlu0 %2495
        %v2497 = vrcp.pop %v2496
        %v2498 = vmul.f32 %v2493, %v2497
        %v2499 = vpack.c.bf16 %v2498, %v2498
        %2500 = vrot.lane.b32.xlu0 %v2109, 72
        %v2501 = vpop.permute.xlu0 %2500
        %v2504 = vsel %vm1872, %v2499, 0
        %2506 = vmatprep.subr.bf16.mxu0 0
        %2507 = vmatpush1.bf16.msra.mxu0 %v2501
        %2508 = vmatprep.subr.bf16.mxu0 0
        %2509 = vmatpush1.bf16.msra.mxu0 0
        %2510 = vmatprep.subr.bf16.mxu0 0
        %2511 = vmatpush1.bf16.msra.mxu0 0
        %2512 = vmatprep.subr.bf16.mxu0 0
        %2513 = vmatpush1.bf16.msra.mxu0 0
        %2514 = vmatprep.subr.bf16.mxu0 0
        %2515 = vmatpush1.bf16.msra.mxu0 0
        %2516 = vmatprep.subr.bf16.mxu0 0
        %2517 = vmatpush1.bf16.msra.mxu0 0
        %2518 = vmatprep.subr.bf16.mxu0 0
        %2519 = vmatpush1.bf16.msra.mxu0 0
        %2520 = vmatprep.subr.bf16.mxu0 0
        %2521 = vmatpush1.bf16.msra.mxu0 0
        %2522 = vmatprep.subr.bf16.mxu0 0
        %2523 = vmatpush1.bf16.msra.mxu0 0
        %2524 = vmatprep.subr.bf16.mxu0 0
        %2525 = vmatpush1.bf16.msra.mxu0 0
        %2526 = vmatprep.subr.bf16.mxu0 0
        %2527 = vmatpush1.bf16.msra.mxu0 0
        %2528 = vmatprep.subr.bf16.mxu0 0
        %2529 = vmatpush1.bf16.msra.mxu0 0
        %2530 = vmatprep.subr.bf16.mxu0 0
        %2531 = vmatpush1.bf16.msra.mxu0 0
        %2532 = vmatprep.subr.bf16.mxu0 0
        %2533 = vmatpush1.bf16.msra.mxu0 0
        %2534 = vmatprep.subr.bf16.mxu0 0
        %2535 = vmatpush1.bf16.msra.mxu0 0
        %2536 = vmatprep.subr.bf16.mxu0 0
        %2537 = vmatpush1.bf16.msra.mxu0 0
        %2538 = vmatprep.mubr.bf16.mxu0 0
        %2539 = vmatmul.mubr.bf16.gmra.mrb[0].mxu0 %v2504
        %v2540 = vpop.f32.mrb[0].mxu0
        %v2541 = vadd.f32 0.0, %v2540
        %v2542 = vpop.f32.mrb[0].mxu0
        %v2543 = vpop.f32.mrb[0].mxu0
        %v2544 = vpop.f32.mrb[0].mxu0
        %2545 = vdwg.mxu0
        %2547 = vrot.lane.b32.xlu0 %v2325, 8
        %v2548 = vpop.permute.xlu0 %2547
        %2551 = vrot.lane.b32.xlu0 %v2433, 16
        %v2552 = vpop.permute.xlu0 %2551
        %2555 = vrot.lane.b32.xlu0 %v2541, 24
        %v2556 = vpop.permute.xlu0 %2555
        %v2558 = vsel %vm1421, %v2216, %v2548
        %v2559 = vsel %vm1872, %v2558, %v2552
        %v2560 = vsel %vm1874, %v2559, %v2556
        %v2561 = vpack.c.bf16 %v2560, %v2560
        %v2562 = vld [vmem:[%s1083] sm:$0xf]
        %v2563 = vld [vmem:[%s1083 + $0x4] sm:$0xf]
        %v2564 = vld [vmem:[%s1083 + $0x8] sm:$0xf]
        %v2565 = vld [vmem:[%s1083 + $0xc] sm:$0xf]
        %v2566 = vld [vmem:[%s1091] sm:$0x1]
        %v2568 = vlaneseq
        %v2569 = vshrl.u32 %v2568, 7
        %v2570 = vsub.s32 0, %v2569
        %v2571 = vrot.slane %v2566, %v2570
        %v2577 = vunpack.c.l.b16 %v2562
        %v2578 = vunpack.c.l.b16 %v2563
        %v2579 = vunpack.c.l.b16 %v2564
        %v2580 = vunpack.c.l.b16 %v2565
        %v2581 = vpack.c.b16 %v2578, %v2577
        %v2582 = vpack.c.b16 %v2580, %v2579
        %v2586 = vsel %vm1324, %v2561, 0
        %2588 = vmatprep.subr.bf16.mxu0 0
        %2589 = vmatpush1.bf16.msra.mxu0 %v2581
        %2590 = vmatprep.subr.bf16.mxu0 0
        %2591 = vmatpush1.bf16.msra.mxu0 %v2582
        %2592 = vmatprep.subr.bf16.mxu0 0
        %2593 = vmatpush1.bf16.msra.mxu0 0
        %2594 = vmatprep.subr.bf16.mxu0 0
        %2595 = vmatpush1.bf16.msra.mxu0 0
        %2596 = vmatprep.subr.bf16.mxu0 0
        %2597 = vmatpush1.bf16.msra.mxu0 0
        %2598 = vmatprep.subr.bf16.mxu0 0
        %2599 = vmatpush1.bf16.msra.mxu0 0
        %2600 = vmatprep.subr.bf16.mxu0 0
        %2601 = vmatpush1.bf16.msra.mxu0 0
        %2602 = vmatprep.subr.bf16.mxu0 0
        %2603 = vmatpush1.bf16.msra.mxu0 0
        %2604 = vmatprep.subr.bf16.mxu0 0
        %2605 = vmatpush1.bf16.msra.mxu0 0
        %2606 = vmatprep.subr.bf16.mxu0 0
        %2607 = vmatpush1.bf16.msra.mxu0 0
        %2608 = vmatprep.subr.bf16.mxu0 0
        %2609 = vmatpush1.bf16.msra.mxu0 0
        %2610 = vmatprep.subr.bf16.mxu0 0
        %2611 = vmatpush1.bf16.msra.mxu0 0
        %2612 = vmatprep.subr.bf16.mxu0 0
        %2613 = vmatpush1.bf16.msra.mxu0 0
        %2614 = vmatprep.subr.bf16.mxu0 0
        %2615 = vmatpush1.bf16.msra.mxu0 0
        %2616 = vmatprep.subr.bf16.mxu0 0
        %2617 = vmatpush1.bf16.msra.mxu0 0
        %2618 = vmatprep.subr.bf16.mxu0 0
        %2619 = vmatpush1.bf16.msra.mxu0 0
        %2620 = vmatprep.mubr.bf16.mxu0 0
        %2621 = vmatmul.mubr.bf16.gmra.mrb[0].mxu0 %v2586
        %v2622 = vpop.f32.mrb[0].mxu0
        %v2623 = vadd.f32 %v2571, %v2622
        %v2624 = vpop.f32.mrb[0].mxu0
        %v2625 = vpop.f32.mrb[0].mxu0
        %v2626 = vpop.f32.mrb[0].mxu0
        %2627 = vdwg.mxu0
        %v2628 = vadd.f32 %v2623, %v1943
        %v2629 = vld [vmem:[%s1100] sm:$0x3]
        %v2630 = vsel %vm1324, %v2628, 0.0
        %2631 = vadd.xlane.f32.xlu0 %v2630
        %v2632 = vpop.xlane.xlu0 %2631
        %v2633 = vmul.f32 %v2632, %v1328
        %v2634 = vsub.f32 %v2628, %v2633
        %v2635 = vmul.f32 %v2634, %v2634
        %v2636 = vsel %vm1324, %v2635, 0.0
        %2637 = vadd.xlane.f32.xlu0 %v2636
        %v2638 = vpop.xlane.xlu0 %2637
        %v2639 = vmul.f32 %v2638, %v1328
        %v2640 = vadd.f32 %v2639, 1e-06
        %v2641 = vrsqrt.pop %v2640
        %v2642 = vmul.f32 %v2634, %v2641
        %v2643 = vlaneseq
        %v2644 = vshrl.u32 %v2643, 7
        %v2645 = vsub.s32 0, %v2644
        %v2646 = vrot.slane %v2629, %v2645
        %v2647 = vmul.f32 %v2642, %v2646
        %v2648 = vlaneseq
        %v2649 = vshrl.u32 %v2648, 7
        %v2650 = vsub.s32 1, %v2649
        %v2651 = vrot.slane %v2629, %v2650
        %v2652 = vadd.f32 %v2647, %v2651
        %v2653 = vpack.c.bf16 %v2652, %v2652
        %v2654 = vld [vmem:[%s1109] sm:$0xf]
        %v2655 = vld [vmem:[%s1109 + $0x4] sm:$0xf]
        %v2656 = vld [vmem:[%s1109 + $0x8] sm:$0xf]
        %v2657 = vld [vmem:[%s1109 + $0xc] sm:$0xf]
        %v2658 = vld [vmem:[%s1281] sm:$0x1]
        %v2660 = vlaneseq
        %v2661 = vshrl.u32 %v2660, 7
        %v2662 = vsub.s32 0, %v2661
        %v2663 = vrot.slane %v2658, %v2662
        %v2669 = vunpack.c.l.b16 %v2654
        %v2670 = vunpack.c.l.b16 %v2655
        %v2671 = vunpack.c.l.b16 %v2656
        %v2672 = vunpack.c.l.b16 %v2657
        %v2673 = vpack.c.b16 %v2670, %v2669
        %v2674 = vpack.c.b16 %v2672, %v2671
        %v2678 = vsel %vm1324, %v2653, 0
        %2680 = vmatprep.subr.bf16.mxu0 0
        %2681 = vmatpush1.bf16.msra.mxu0 %v2673
        %2682 = vmatprep.subr.bf16.mxu0 0
        %2683 = vmatpush1.bf16.msra.mxu0 %v2674
        %2684 = vmatprep.subr.bf16.mxu0 0
        %2685 = vmatpush1.bf16.msra.mxu0 0
        %2686 = vmatprep.subr.bf16.mxu0 0
        %2687 = vmatpush1.bf16.msra.mxu0 0
        %2688 = vmatprep.subr.bf16.mxu0 0
        %2689 = vmatpush1.bf16.msra.mxu0 0
        %2690 = vmatprep.subr.bf16.mxu0 0
        %2691 = vmatpush1.bf16.msra.mxu0 0
        %2692 = vmatprep.subr.bf16.mxu0 0
        %2693 = vmatpush1.bf16.msra.mxu0 0
        %2694 = vmatprep.subr.bf16.mxu0 0
        %2695 = vmatpush1.bf16.msra.mxu0 0
        %2696 = vmatprep.subr.bf16.mxu0 0
        %2697 = vmatpush1.bf16.msra.mxu0 0
        %2698 = vmatprep.subr.bf16.mxu0 0
        %2699 = vmatpush1.bf16.msra.mxu0 0
        %2700 = vmatprep.subr.bf16.mxu0 0
        %2701 = vmatpush1.bf16.msra.mxu0 0
        %2702 = vmatprep.subr.bf16.mxu0 0
        %2703 = vmatpush1.bf16.msra.mxu0 0
        %2704 = vmatprep.subr.bf16.mxu0 0
        %2705 = vmatpush1.bf16.msra.mxu0 0
        %2706 = vmatprep.subr.bf16.mxu0 0
        %2707 = vmatpush1.bf16.msra.mxu0 0
        %2708 = vmatprep.subr.bf16.mxu0 0
        %2709 = vmatpush1.bf16.msra.mxu0 0
        %2710 = vmatprep.subr.bf16.mxu0 0
        %2711 = vmatpush1.bf16.msra.mxu0 0
        %2712 = vmatprep.mubr.bf16.mxu0 0
        %2713 = vmatmul.mubr.bf16.gmra.mrb[0].mxu0 %v2678
        %v2714 = vpop.f32.mrb[0].mxu0
        %v2715 = vadd.f32 %v2663, %v2714
        %v2716 = vpop.f32.mrb[0].mxu0
        %v2717 = vpop.f32.mrb[0].mxu0
        %v2718 = vpop.f32.mrb[0].mxu0
        %2719 = vdwg.mxu0
        %v2720 = vmul.f32 %v2715, 0.5
        %v2721 = vmul.f32 %v2715, %v2715
        %v2722 = vmul.f32 %v2715, %v2721
        %v2723 = vmul.f32 %v2722, 0.044715
        %v2724 = vadd.f32 %v2715, %v2723
        %v2725 = vmul.f32 %v2724, 0.7978846
        %v2726 = vtanh.pop %v2725
        %v2727 = vadd.f32 %v2726, 1.0
        %v2728 = vmul.f32 %v2720, %v2727
        %v2729 = vpack.c.bf16 %v2728, %v2728
        %v2730 = vld [vmem:[%s1286] sm:$0xf]
        %v2731 = vld [vmem:[%s1286 + $0x4] sm:$0xf]
        %v2732 = vld [vmem:[%s1286 + $0x8] sm:$0xf]
        %v2733 = vld [vmem:[%s1286 + $0xc] sm:$0xf]
        %v2734 = vld [vmem:[%s1286 + $0x10] sm:$0xf]
        %v2735 = vld [vmem:[%s1286 + $0x14] sm:$0xf]
        %v2736 = vld [vmem:[%s1286 + $0x18] sm:$0xf]
        %v2737 = vld [vmem:[%s1286 + $0x1c] sm:$0xf]
        %v2738 = vld [vmem:[%s1289] sm:$0x1]
        %v2740 = vlaneseq
        %v2741 = vshrl.u32 %v2740, 7
        %v2742 = vsub.s32 0, %v2741
        %v2743 = vrot.slane %v2738, %v2742
        %v2753 = vunpack.c.l.b16 %v2730
        %v2754 = vunpack.c.l.b16 %v2731
        %v2755 = vunpack.c.l.b16 %v2732
        %v2756 = vunpack.c.l.b16 %v2733
        %v2757 = vunpack.c.l.b16 %v2734
        %v2758 = vunpack.c.l.b16 %v2735
        %v2759 = vunpack.c.l.b16 %v2736
        %v2760 = vunpack.c.l.b16 %v2737
        %v2761 = vpack.c.b16 %v2754, %v2753
        %v2762 = vpack.c.b16 %v2756, %v2755
        %v2763 = vpack.c.b16 %v2758, %v2757
        %v2764 = vpack.c.b16 %v2760, %v2759
        %vm2769 = vcmask 523264
        %v2771 = vsel %vm2769, %v2729, 0
        %2773 = vmatprep.subr.bf16.mxu0 0
        %2774 = vmatpush1.bf16.msra.mxu0 %v2761
        %2775 = vmatprep.subr.bf16.mxu0 0
        %2776 = vmatpush1.bf16.msra.mxu0 %v2762
        %2777 = vmatprep.subr.bf16.mxu0 0
        %2778 = vmatpush1.bf16.msra.mxu0 %v2763
        %2779 = vmatprep.subr.bf16.mxu0 0
        %2780 = vmatpush1.bf16.msra.mxu0 %v2764
        %2781 = vmatprep.subr.bf16.mxu0 0
        %2782 = vmatpush1.bf16.msra.mxu0 0
        %2783 = vmatprep.subr.bf16.mxu0 0
        %2784 = vmatpush1.bf16.msra.mxu0 0
        %2785 = vmatprep.subr.bf16.mxu0 0
        %2786 = vmatpush1.bf16.msra.mxu0 0
        %2787 = vmatprep.subr.bf16.mxu0 0
        %2788 = vmatpush1.bf16.msra.mxu0 0
        %2789 = vmatprep.subr.bf16.mxu0 0
        %2790 = vmatpush1.bf16.msra.mxu0 0
        %2791 = vmatprep.subr.bf16.mxu0 0
        %2792 = vmatpush1.bf16.msra.mxu0 0
        %2793 = vmatprep.subr.bf16.mxu0 0
        %2794 = vmatpush1.bf16.msra.mxu0 0
        %2795 = vmatprep.subr.bf16.mxu0 0
        %2796 = vmatpush1.bf16.msra.mxu0 0
        %2797 = vmatprep.subr.bf16.mxu0 0
        %2798 = vmatpush1.bf16.msra.mxu0 0
        %2799 = vmatprep.subr.bf16.mxu0 0
        %2800 = vmatpush1.bf16.msra.mxu0 0
        %2801 = vmatprep.subr.bf16.mxu0 0
        %2802 = vmatpush1.bf16.msra.mxu0 0
        %2803 = vmatprep.subr.bf16.mxu0 0
        %2804 = vmatpush1.bf16.msra.mxu0 0
        %2805 = vmatprep.mubr.bf16.mxu0 0
        %2806 = vmatmul.mubr.bf16.gmra.mrb[0].mxu0 %v2771
        %v2807 = vpop.f32.mrb[0].mxu0
        %v2808 = vadd.f32 %v2743, %v2807
        %v2809 = vpop.f32.mrb[0].mxu0
        %v2810 = vpop.f32.mrb[0].mxu0
        %v2811 = vpop.f32.mrb[0].mxu0
        %2812 = vdwg.mxu0
        %v2813 = vadd.f32 %v2808, %v2628
        %2814 = vst.msk [vmem:[#allocation2] sm:$0xff] %vm1324, %v2813
        %p2815 = scmp.eq.s32.totalorder %s65, 1
        // Predicated region
        $region169: #{tpu_custom_call.1} parent=107 // pred_check
          %p2816 = pneg %p2815
        $region170: #{tpu_custom_call.1} parent=107 // pred_check_branch
          %2818 = sbr.rel (%p2816) target = $region172
        $region171: #{tpu_custom_call.1} parent=107 // pred_region
          %v2819 = vld [vmem:[%s21] sm:$0x3]
          %v2820 = vsel %vm1324, %v2813, 0.0
          %2821 = vadd.xlane.f32.xlu0 %v2820
          %v2822 = vpop.xlane.xlu0 %2821
          %v2823 = vmul.f32 %v2822, %v1328
          %v2824 = vsub.f32 %v2813, %v2823
          %v2825 = vmul.f32 %v2824, %v2824
          %v2826 = vsel %vm1324, %v2825, 0.0
          %2827 = vadd.xlane.f32.xlu0 %v2826
          %v2828 = vpop.xlane.xlu0 %2827
          %v2829 = vmul.f32 %v2828, %v1328
          %v2830 = vadd.f32 %v2829, 1e-06
          %v2831 = vrsqrt.pop %v2830
          %v2832 = vmul.f32 %v2824, %v2831
          %v2833 = vlaneseq
          %v2834 = vshrl.u32 %v2833, 7
          %v2835 = vsub.s32 0, %v2834
          %v2836 = vrot.slane %v2819, %v2835
          %v2837 = vmul.f32 %v2832, %v2836
          %v2838 = vlaneseq
          %v2839 = vshrl.u32 %v2838, 7
          %v2840 = vsub.s32 1, %v2839
          %v2841 = vrot.slane %v2819, %v2840
          %v2842 = vadd.f32 %v2837, %v2841
          %v2843 = vpack.c.bf16 %v2842, %v2842
          %vm2844 = vcmask 257024
          %2845 = vst.msk [vmem:[%s1258] sm:$0xf] %vm2844, %v2843
        $region172: #{tpu_custom_call.1} parent=107 // pred_fallthru
          _
        %s2846 = sand.u32 %s647, 1
        %s2847 = scalar_lea.sflag [#allocation7], %s2846
        %s2848 = sand.u32 %s647, 1
        %s2849 = smul.addr %s2848, 4
        %s2850 = scalar_lea.vmem [#allocation28], %s2849
        // Predicated region
        $region173: #{tpu_custom_call.1} parent=107 // pred_check
          %p2851 = pneg %p657
        $region174: #{tpu_custom_call.1} parent=107 // pred_check_branch
          %2853 = sbr.rel (%p2851) target = $region176
        $region175: #{tpu_custom_call.1} parent=107 // pred_region
          %s2855 = ssub.s32 64, 64
          %2856 = vsyncadd %s2847, %s2855
          %s2857 = smul.addr %s64, 64
          %s2858 = scalar_lea.hbm %s22, %s2857
          %s2860 = sshll.u32 %s2850, 4
          %s2861 = int_to_ptr.vmem [resolvable:$true] %s2860
          %2863 = dma.vmem_to_hbm [thread:$0]  %s2861, 64, %s2858, %s2847
        $region176: #{tpu_custom_call.1} parent=107 // pred_fallthru
          _
      $region108: #{tpu_custom_call.1} parent=5 // pred_fallthru
        _
      %p2864 = scmp.le.s32.totalorder 2, %s55
      // Predicated region
      $region177: #{tpu_custom_call.1} parent=5 // pred_check
        %p2865 = pneg %p2864
      $region178: #{tpu_custom_call.1} parent=5 // pred_check_branch
        %2867 = sbr.rel (%p2865) target = $region180
      $region179: #{tpu_custom_call.1} parent=5 // pred_region
        %s2868 = ssub.s32 %s55, 2
        // Predicated region
        $region181: #{tpu_custom_call.1} parent=179 // pred_check
          %p2869 = pneg %p663
        $region182: #{tpu_custom_call.1} parent=179 // pred_check_branch
          %2871 = sbr.rel (%p2869) target = $region184
        $region183: #{tpu_custom_call.1} parent=179 // pred_region
          %s2872 = sand.u32 %s648, 1
          %s2873 = scalar_lea.sflag [#allocation7], %s2872
          %s2874 = sand.u32 %s648, 1
          %s2875 = smul.addr %s2874, 4
          %s2876 = scalar_lea.vmem [#allocation28], %s2875
          %2877 = dma.done %s2873, 64
        $region184: #{tpu_custom_call.1} parent=179 // pred_fallthru
          _
      $region180: #{tpu_custom_call.1} parent=5 // pred_fallthru
        _
    $region6: #{tpu_custom_call.1} parent=1 // loop_footer
      %s59 = sadd.s32 1, %s55
    $region7: #{tpu_custom_call.1} parent=1 // loop_footer_branch
      %54 = sbr.rel target = $region3
    $region8: #{tpu_custom_call.1} parent=1 // loop_exit
      _
    %2878 = vsyncpa [#allocation6], 1
    %s2879 = scalar_lea.sflag [#allocation6], 1
    %2880 = vsyncpa %s2879, 1
    %2881 = vsyncpa [#allocation9], 1
    %s2882 = scalar_lea.sflag [#allocation9], 1
    %2883 = vsyncpa %s2882, 1
    %2884 = vsyncpa [#allocation12], 1
    %s2885 = scalar_lea.sflag [#allocation12], 1
    %2886 = vsyncpa %s2885, 1
    %2887 = vsyncpa [#allocation15], 1
    %s2888 = scalar_lea.sflag [#allocation15], 1
    %2889 = vsyncpa %s2888, 1
    %2890 = vsyncpa [#allocation18], 1
    %s2891 = scalar_lea.sflag [#allocation18], 1
    %2892 = vsyncpa %s2891, 1
    %2893 = vsyncpa [#allocation21], 1
    %s2894 = scalar_lea.sflag [#allocation21], 1
    %2895 = vsyncpa %s2894, 1
    %2896 = vsyncpa [#allocation24], 1
    %s2897 = scalar_lea.sflag [#allocation24], 1
    %2898 = vsyncpa %s2897, 1
    %2899 = vsyncpa [#allocation27], 1
    %s2900 = scalar_lea.sflag [#allocation27], 1
    %2901 = vsyncpa %s2900, 1
    %2902 = vsyncpa [#allocation7], 1
    %s2903 = scalar_lea.sflag [#allocation7], 1
    %2904 = vsyncpa %s2903, 1

</llo_original>
